<compile_context>
chip_gen: v7x
topology: tpu7x:2x2x1
jax: 0.10.0
libtpu: 0.0.40
codegen_flags: <defaults>
</compile_context>

<pallas_src>
import functools

import jax
import jax.numpy as jnp
from jax import lax
from jax.experimental import pallas as pl
from jax.experimental.pallas import tpu as pltpu


# ----------------------------------------------------------------------------
# Fused residual-block kernel: one grid step == one batch image.
# ----------------------------------------------------------------------------
def _resblock_kernel(xph_ref, w1_ref, w2_ref, ws_ref, b1_ref, b2_ref, mask_ref,
                     o_ref, y1p_ref, acc_ref, *, stride, Ho, Wo, Lx, has_proj):
    """Direct 3x3 convs as 9 shifted-window matmuls over flattened planes.

    xph_ref : [stride*stride*Lx, Cin] bf16  polyphase planes of padded x (flat)
    w1_ref  : [9, Cin, C]             bf16  conv1 taps (BN1 folded)
    w2_ref  : [9, C, C]               bf16  conv2 taps (BN2 folded)
    ws_ref  : [Cin, C]                bf16  1x1 shortcut weight (BN_s folded)
    b1_ref  : [1, C]  f32                   folded conv1 bias
    b2_ref  : [1, C]  f32                   folded conv2 (+ shortcut) bias
    mask_ref: [Ho*Wp, 1] f32                1.0 on valid columns, 0.0 on junk
    o_ref   : [Ho*Wp, C]  f32               flat output plane (junk columns
                                            are sliced off outside the kernel)
    y1p_ref : [(Ho+3)*Wp, C] bf16 scratch   zero-padded conv2 input plane
    acc_ref : [Ho*Wp, C] f32 scratch        matmul accumulator
    """
    s = stride
    Wp = Wo + 2                 # flat-plane row width (output + 2 pad columns)
    L = Ho * Wp                 # flat output-domain length

    # -------- conv1 (3x3, stride s) + BN1 + ReLU ------------------------
    acc_ref[...] = jnp.zeros_like(acc_ref)
    for dy in range(3):
        for dx in range(3):
            t = dy * 3 + dx
            phase = (dy % s) * s + (dx % s)
            off = phase * Lx + (dy // s) * Wp + (dx // s)
            slab = xph_ref[pl.ds(off, L), :]             # [L, Cin] bf16
            acc_ref[...] += jnp.dot(slab, w1_ref[t],
                                    preferred_element_type=jnp.float32)
    y1 = jnp.maximum(acc_ref[...] + b1_ref[...], 0.0)
    # Zero the junk columns so they become conv2's zero padding, then write
    # the whole row block contiguously into the padded plane (interior starts
    # at flat offset Wp + 1; the rest of the plane stays memset-zero).
    y1 = (y1 * mask_ref[...]).astype(y1p_ref.dtype)
    y1p_ref[...] = jnp.zeros_like(y1p_ref)
    y1p_ref[pl.ds(Wp + 1, L), :] = y1

    # -------- conv2 (3x3, stride 1) + BN2 -------------------------------
    acc_ref[...] = jnp.zeros_like(acc_ref)
    for dy in range(3):
        for dx in range(3):
            t = dy * 3 + dx
            slab = y1p_ref[pl.ds(dy * Wp + dx, L), :]    # [L, C] bf16
            acc_ref[...] += jnp.dot(slab, w2_ref[t],
                                    preferred_element_type=jnp.float32)

    # -------- shortcut (1x1 conv, stride s) + BN_s, add, final ReLU -----
    sc_phase = (1 % s) * s + (1 % s)
    sc_off = sc_phase * Lx + (1 // s) * Wp + (1 // s)
    xs = xph_ref[pl.ds(sc_off, L), :]                    # x[:, ::s, ::s] slab
    if has_proj:
        sc = jnp.dot(xs, ws_ref[...], preferred_element_type=jnp.float32)
    else:
        sc = xs.astype(jnp.float32)                      # identity shortcut
    out = jnp.maximum(acc_ref[...] + b2_ref[...] + sc, 0.0)
    o_ref[...] = out.astype(o_ref.dtype)


# ----------------------------------------------------------------------------
# Plain-JAX glue: BN folding, weight/ activation layout prep
# ----------------------------------------------------------------------------
def fold_bn_into_conv(w, b, gamma, beta, mean, var, eps=1e-5):
    """Fold eval-mode BatchNorm into conv weight [Cout,Cin,kh,kw], bias [Cout]."""
    scale = gamma / jnp.sqrt(var + eps)
    return w * scale[:, None, None, None], (b - mean) * scale + beta


def _conv3x3_taps(w):
    """[Cout, Cin, 3, 3] -> [9, Cin, Cout], tap order t = dy*3 + dx."""
    cout, cin = w.shape[0], w.shape[1]
    return jnp.transpose(w, (2, 3, 1, 0)).reshape(9, cin, cout)


def _polyphase_planes(x_nhwc, stride, Ho, Wo):
    """Pad spatially by 1, split into stride*stride polyphase planes, flatten.

    Returns ([N, stride*stride*Lx, C], Lx) with Lx = Hreq*(Wo+2); every conv
    tap and the 1x1 shortcut then read a contiguous row window of one plane.
    Total size ~= the original activation (no 9x im2col expansion).
    """
    s = stride
    n, _, _, c = x_nhwc.shape
    xp = jnp.pad(x_nhwc, ((0, 0), (1, 1), (1, 1), (0, 0)))
    Wp = Wo + 2
    Hreq = Ho + 2 // s + 1            # tap row reach + one safety row
    planes = []
    for a in range(s):
        for b in range(s):
            p = xp[:, a::s, b::s, :]
            p = p[:, :min(p.shape[1], Hreq), :min(p.shape[2], Wp), :]
            p = jnp.pad(p, ((0, 0), (0, Hreq - p.shape[1]),
                            (0, Wp - p.shape[2]), (0, 0)))
            planes.append(p.reshape(n, Hreq * Wp, c))
    return jnp.concatenate(planes, axis=1), Hreq * Wp


def _vmem_cap_bytes():
    try:
        phys = int(pltpu.get_tpu_info().vmem_capacity_bytes)
    except Exception:
        phys = 64 * 1024 * 1024       # conservative (v7x has 64 MiB / core)
    return max(phys * 3 // 4, 16 * 1024 * 1024)


# ----------------------------------------------------------------------------
# ResidualBlock forward (NCHW in / NCHW out, like PyTorch)
# ----------------------------------------------------------------------------
def residual_block_forward(x_nchw, params, stride):
    s = int(stride)
    x_nhwc = jnp.transpose(x_nchw, (0, 2, 3, 1))
    n, h, w, cin = x_nhwc.shape
    cout = params["w1"].shape[0]

    Ho = (h - 1) // s + 1
    Wo = (w - 1) // s + 1
    Wp = Wo + 2
    L = Ho * Wp
    has_proj = (s != 1) or (cin != cout)

    # --- fold eval-mode BN into the convs (f32), then cast weights to bf16 --
    w1, b1 = fold_bn_into_conv(params["w1"], params["b1"], params["g1"],
                               params["be1"], params["m1"], params["v1"])
    w2, b2 = fold_bn_into_conv(params["w2"], params["b2"], params["g2"],
                               params["be2"], params["m2"], params["v2"])
    if has_proj:
        ws, bs = fold_bn_into_conv(params["ws"], params["bs"], params["gs"],
                                   params["bes"], params["ms"], params["vs"])
        b2 = b2 + bs                                    # single folded bias
        ws_m = jnp.transpose(ws[:, :, 0, 0], (1, 0)).astype(jnp.bfloat16)
    else:
        ws_m = jnp.zeros((cin, cout), jnp.bfloat16)     # unused (identity)

    w1_t = _conv3x3_taps(w1).astype(jnp.bfloat16)       # [9, cin, cout]
    w2_t = _conv3x3_taps(w2).astype(jnp.bfloat16)       # [9, cout, cout]
    b1_r = b1.reshape(1, cout).astype(jnp.float32)
    b2_r = b2.reshape(1, cout).astype(jnp.float32)

    # --- polyphase planes of the padded input (one cheap HBM pass) ----------
    xph, Lx = _polyphase_planes(x_nhwc.astype(jnp.bfloat16), s, Ho, Wo)
    n_rows = s * s * Lx

    # valid-column mask of the flat output row domain (junk columns -> 0)
    col_mask = ((jnp.arange(L, dtype=jnp.int32) % Wp) < Wo)
    col_mask = col_mask.astype(jnp.float32).reshape(L, 1)

    # --- VMEM budget + cost estimate ----------------------------------------
    wt_bytes = 2 * (w1_t.size + w2_t.size + ws_m.size)
    fixed = 4 * (b1_r.size + b2_r.size + col_mask.size)
    per_step = (2 * n_rows * cin * 2            # xph block (double-buffered)
                + 2 * L * cout * 4              # output block (double-buffered)
                + (Ho + 3) * Wp * cout * 2      # y1 padded-plane scratch
                + L * cout * 4)                 # f32 accumulator scratch
    vmem_limit = min(max(2 * (per_step + 2 * wt_bytes + fixed),
                         16 * 1024 * 1024), _vmem_cap_bytes())

    flops = n * (18 * L * cin * cout + 18 * L * cout * cout
                 + (2 * L * cin * cout if has_proj else 0))
    bytes_accessed = xph.size * 2 + wt_bytes + fixed + n * L * cout * 4

    kernel = functools.partial(_resblock_kernel, stride=s, Ho=Ho, Wo=Wo,
                               Lx=Lx, has_proj=has_proj)

    out_flat = pl.pallas_call(
        kernel,
        out_shape=jax.ShapeDtypeStruct((n, L, cout), jnp.float32),
        grid=(n,),
        in_specs=[
            pl.BlockSpec((None, n_rows, cin), lambda i: (i, 0, 0)),   # xph
            pl.BlockSpec((9, cin, cout), lambda i: (0, 0, 0)),        # w1 taps
            pl.BlockSpec((9, cout, cout), lambda i: (0, 0, 0)),       # w2 taps
            pl.BlockSpec((cin, cout), lambda i: (0, 0)),              # ws
            pl.BlockSpec((1, cout), lambda i: (0, 0)),                # b1
            pl.BlockSpec((1, cout), lambda i: (0, 0)),                # b2+bs
            pl.BlockSpec((L, 1), lambda i: (0, 0)),                   # col mask
        ],
        out_specs=pl.BlockSpec((None, L, cout), lambda i: (i, 0, 0)),
        scratch_shapes=[pltpu.VMEM(((Ho + 3) * Wp, cout), jnp.bfloat16),
                        pltpu.VMEM((L, cout), jnp.float32)],
        compiler_params=pltpu.CompilerParams(
            dimension_semantics=("parallel",),
            vmem_limit_bytes=int(vmem_limit)),
        cost_estimate=pl.CostEstimate(flops=int(flops), transcendentals=0,
                                      bytes_accessed=int(bytes_accessed)),
    )(xph, w1_t, w2_t, ws_m, b1_r, b2_r, col_mask)

    out = out_flat.reshape(n, Ho, Wp, cout)[:, :, :Wo, :]   # drop junk columns
    return jnp.transpose(out, (0, 3, 1, 2))                 # back to NCHW


# ----------------------------------------------------------------------------
# Pure-JAX references for verification
# ----------------------------------------------------------------------------
def _conv_ref(x, w, b, stride, pad):
    y = lax.conv_general_dilated(
        x, w, (stride, stride), [(pad, pad), (pad, pad)],
        dimension_numbers=("NCHW", "OIHW", "NCHW"))
    return y + b[None, :, None, None]


def _bn_ref(x, g, be, m, v, eps=1e-5):
    return (x - m[None, :, None, None]) / jnp.sqrt(v[None, :, None, None] + eps) \
        * g[None, :, None, None] + be[None, :, None, None]


def residual_block_reference(x, p, stride):
    """All-f32 eval-mode reference matching the PyTorch module."""
    y = _conv_ref(x, p["w1"], p["b1"], stride, 1)
    y = jnp.maximum(_bn_ref(y, p["g1"], p["be1"], p["m1"], p["v1"]), 0.0)
    y = _conv_ref(y, p["w2"], p["b2"], 1, 1)
    y = _bn_ref(y, p["g2"], p["be2"], p["m2"], p["v2"])
    cin, cout = x.shape[1], p["w1"].shape[0]
    if stride != 1 or cin != cout:
        sc = _conv_ref(x, p["ws"], p["bs"], stride, 0)
        sc = _bn_ref(sc, p["gs"], p["bes"], p["ms"], p["vs"])
    else:
        sc = x
    return jnp.maximum(y + sc, 0.0)


def residual_block_reference_bf16(x, p, stride):
    """Same math with the kernel's bf16 casts at the same layer boundaries."""
    w1, b1 = fold_bn_into_conv(p["w1"], p["b1"], p["g1"], p["be1"], p["m1"], p["v1"])
    w2, b2 = fold_bn_into_conv(p["w2"], p["b2"], p["g2"], p["be2"], p["m2"], p["v2"])
    cin, cout = x.shape[1], p["w1"].shape[0]
    has_proj = stride != 1 or cin != cout

    def conv(a, w, s, pad):
        return lax.conv_general_dilated(
            a.astype(jnp.bfloat16), w.astype(jnp.bfloat16), (s, s),
            [(pad, pad), (pad, pad)],
            dimension_numbers=("NCHW", "OIHW", "NCHW"),
            preferred_element_type=jnp.float32)

    y = jnp.maximum(conv(x, w1, stride, 1) + b1[None, :, None, None], 0.0)
    y = conv(y, w2, 1, 1) + b2[None, :, None, None]
    if has_proj:
        ws, bs = fold_bn_into_conv(p["ws"], p["bs"], p["gs"], p["bes"],
                                   p["ms"], p["vs"])
        sc = conv(x, ws, stride, 0) + bs[None, :, None, None]
    else:
        sc = x.astype(jnp.bfloat16).astype(jnp.float32)
    return jnp.maximum(y + sc, 0.0)


# ----------------------------------------------------------------------------
# Deterministic parameter construction + driver
# ----------------------------------------------------------------------------
def make_params(key, cin, cout):
    ks = jax.random.split(key, 16)
    f32 = jnp.float32

    def bn(k0, k1, k2, k3, c):
        return (jax.random.uniform(k0, (c,), f32, 0.5, 1.5),   # gamma
                0.1 * jax.random.normal(k1, (c,), f32),         # beta
                0.1 * jax.random.normal(k2, (c,), f32),         # running_mean
                jax.random.uniform(k3, (c,), f32, 0.5, 1.5))    # running_var

    g1, be1, m1, v1 = bn(ks[2], ks[3], ks[4], ks[5], cout)
    g2, be2, m2, v2 = bn(ks[8], ks[9], ks[10], ks[11], cout)
    gs, bes, ms, vs = bn(ks[14], ks[15], ks[0], ks[1], cout)

    return dict(
        w1=0.1 * jax.random.normal(ks[6], (cout, cin, 3, 3), f32),
        b1=0.1 * jax.random.normal(ks[7], (cout,), f32),
        g1=g1, be1=be1, m1=m1, v1=v1,
        w2=0.1 * jax.random.normal(ks[12], (cout, cout, 3, 3), f32),
        b2=0.1 * jax.random.normal(ks[13], (cout,), f32),
        g2=g2, be2=be2, m2=m2, v2=v2,
        ws=0.1 * jax.random.normal(jax.random.fold_in(key, 100), (cout, cin, 1, 1), f32),
        bs=0.1 * jax.random.normal(jax.random.fold_in(key, 101), (cout,), f32),
        gs=gs, bes=bes, ms=ms, vs=vs,
    )


if __name__ == "__main__":
    key = jax.random.PRNGKey(0)
    k_x, k_p = jax.random.split(key)

    N, CIN, COUT, H, W, STRIDE = 2, 4, 8, 16, 16, 2
    x = jax.random.normal(k_x, (N, CIN, H, W), jnp.float32)   # NCHW, like PyTorch
    params = make_params(k_p, CIN, COUT)

    fwd = jax.jit(functools.partial(residual_block_forward, stride=STRIDE))
    out = jax.block_until_ready(fwd(x, params))
    assert out.shape == (N, COUT, H // STRIDE, W // STRIDE), out.shape

    # Reference with identical bf16 casts -> tight tolerance.
    ref_b = residual_block_reference_bf16(x, params, STRIDE)
    err_b = float(jnp.max(jnp.abs(out - ref_b)))
    assert jnp.allclose(out, ref_b, atol=2e-2, rtol=2e-2), err_b

    # All-f32 module reference -> looser tolerance (bf16 operand rounding only).
    ref_f = residual_block_reference(x, params, STRIDE)
    err_f = float(jnp.max(jnp.abs(out - ref_f)))
    assert jnp.allclose(out, ref_f, atol=1e-1, rtol=1e-1), err_f

    print("KERNEL_OK")
</pallas_src>

<mosaic_0001>
module attributes {stable_mosaic.version = 11 : i64} {
  func.func @_resblock_kernel(%arg0: i32, %arg1: memref<1x400x4xbf16, #tpu.memory_space<vmem>>, %arg2: memref<9x4x8xbf16, #tpu.memory_space<vmem>>, %arg3: memref<9x8x8xbf16, #tpu.memory_space<vmem>>, %arg4: memref<4x8xbf16, #tpu.memory_space<vmem>>, %arg5: memref<1x8xf32, #tpu.memory_space<vmem>>, %arg6: memref<1x8xf32, #tpu.memory_space<vmem>>, %arg7: memref<80x1xf32, #tpu.memory_space<vmem>>, %arg8: memref<1x80x8xf32, #tpu.memory_space<vmem>>, %arg9: memref<110x8xbf16, #tpu.memory_space<vmem>>, %arg10: memref<80x8xf32, #tpu.memory_space<vmem>>) attributes {dimension_semantics = [#tpu.dimension_semantics<parallel>], iteration_bounds = array<i64: 2>, scalar_prefetch = 0 : i64, scratch_operands = 2 : i64, tpu.core_type = #tpu.core_type<tc>, window_params = [{transform_indices = @transform_0, window_bounds = array<i64: 1, 400, 4>}, {pipeline_mode = #tpu.pipeline_mode<synchronous>, transform_indices = @transform_1, window_bounds = array<i64: 9, 4, 8>}, {pipeline_mode = #tpu.pipeline_mode<synchronous>, transform_indices = @transform_2, window_bounds = array<i64: 9, 8, 8>}, {pipeline_mode = #tpu.pipeline_mode<synchronous>, transform_indices = @transform_3, window_bounds = array<i64: 4, 8>}, {pipeline_mode = #tpu.pipeline_mode<synchronous>, transform_indices = @transform_4, window_bounds = array<i64: 1, 8>}, {pipeline_mode = #tpu.pipeline_mode<synchronous>, transform_indices = @transform_5, window_bounds = array<i64: 1, 8>}, {pipeline_mode = #tpu.pipeline_mode<synchronous>, transform_indices = @transform_6, window_bounds = array<i64: 80, 1>}, {transform_indices = @transform_7, window_bounds = array<i64: 1, 80, 8>}]} {
    %cst = arith.constant 0.000000e+00 : f32
    %0 = vector.broadcast %cst : f32 to vector<80x8xf32>
    %c0 = arith.constant 0 : index
    %c0_0 = arith.constant 0 : index
    %1 = vector.load %arg10[%c0, %c0_0] : memref<80x8xf32, #tpu.memory_space<vmem>>, vector<80x8xf32>
    tpu.vector_store %arg10[%c0, %c0_0], %0 {strides = array<i32>} : memref<80x8xf32, #tpu.memory_space<vmem>>, vector<80x8xf32>,
    %c0_1 = arith.constant 0 : index
    %c0_2 = arith.constant 0 : index
    %c0_3 = arith.constant 0 : index
    %2 = vector.load %arg1[%c0_1, %c0_2, %c0_3] : memref<1x400x4xbf16, #tpu.memory_space<vmem>>, vector<1x80x4xbf16>
    %3 = vector.shape_cast %2 : vector<1x80x4xbf16> to vector<80x4xbf16>
    %c0_4 = arith.constant 0 : index
    %c0_5 = arith.constant 0 : index
    %4 = vector.load %arg10[%c0_4, %c0_5] : memref<80x8xf32, #tpu.memory_space<vmem>>, vector<80x8xf32>
    %c0_6 = arith.constant 0 : index
    %c0_7 = arith.constant 0 : index
    %c0_8 = arith.constant 0 : index
    %5 = vector.load %arg2[%c0_6, %c0_7, %c0_8] : memref<9x4x8xbf16, #tpu.memory_space<vmem>>, vector<1x4x8xbf16>
    %6 = vector.shape_cast %5 : vector<1x4x8xbf16> to vector<4x8xbf16>
    %cst_9 = arith.constant dense<0.000000e+00> : vector<80x8xf32>
    %7 = tpu.matmul %3, %6, %cst_9 {dimension_numbers = #tpu.dot_dimension_numbers<[1], [0], [0], [1], [0, 0, 1, 1], [], []>} : vector<80x4xbf16>, vector<4x8xbf16>, vector<80x8xf32> -> vector<80x8xf32>
    %8 = arith.addf %4, %7 : vector<80x8xf32>
    %c0_10 = arith.constant 0 : index
    %c0_11 = arith.constant 0 : index
    %9 = vector.load %arg10[%c0_10, %c0_11] : memref<80x8xf32, #tpu.memory_space<vmem>>, vector<80x8xf32>
    tpu.vector_store %arg10[%c0_10, %c0_11], %8 {strides = array<i32>} : memref<80x8xf32, #tpu.memory_space<vmem>>, vector<80x8xf32>,
    %c0_12 = arith.constant 0 : index
    %c100 = arith.constant 100 : index
    %c0_13 = arith.constant 0 : index
    %10 = vector.load %arg1[%c0_12, %c100, %c0_13] : memref<1x400x4xbf16, #tpu.memory_space<vmem>>, vector<1x80x4xbf16>
    %11 = vector.shape_cast %10 : vector<1x80x4xbf16> to vector<80x4xbf16>
    %c0_14 = arith.constant 0 : index
    %c0_15 = arith.constant 0 : index
    %12 = vector.load %arg10[%c0_14, %c0_15] : memref<80x8xf32, #tpu.memory_space<vmem>>, vector<80x8xf32>
    %c1 = arith.constant 1 : index
    %c0_16 = arith.constant 0 : index
    %c0_17 = arith.constant 0 : index
    %13 = vector.load %arg2[%c1, %c0_16, %c0_17] : memref<9x4x8xbf16, #tpu.memory_space<vmem>>, vector<1x4x8xbf16>
    %14 = vector.shape_cast %13 : vector<1x4x8xbf16> to vector<4x8xbf16>
    %cst_18 = arith.constant dense<0.000000e+00> : vector<80x8xf32>
    %15 = tpu.matmul %11, %14, %cst_18 {dimension_numbers = #tpu.dot_dimension_numbers<[1], [0], [0], [1], [0, 0, 1, 1], [], []>} : vector<80x4xbf16>, vector<4x8xbf16>, vector<80x8xf32> -> vector<80x8xf32>
    %16 = arith.addf %12, %15 : vector<80x8xf32>
    %c0_19 = arith.constant 0 : index
    %c0_20 = arith.constant 0 : index
    %17 = vector.load %arg10[%c0_19, %c0_20] : memref<80x8xf32, #tpu.memory_space<vmem>>, vector<80x8xf32>
    tpu.vector_store %arg10[%c0_19, %c0_20], %16 {strides = array<i32>} : memref<80x8xf32, #tpu.memory_space<vmem>>, vector<80x8xf32>,
    %c0_21 = arith.constant 0 : index
    %c1_22 = arith.constant 1 : index
    %c0_23 = arith.constant 0 : index
    %18 = vector.load %arg1[%c0_21, %c1_22, %c0_23] : memref<1x400x4xbf16, #tpu.memory_space<vmem>>, vector<1x80x4xbf16>
    %19 = vector.shape_cast %18 : vector<1x80x4xbf16> to vector<80x4xbf16>
    %c0_24 = arith.constant 0 : index
    %c0_25 = arith.constant 0 : index
    %20 = vector.load %arg10[%c0_24, %c0_25] : memref<80x8xf32, #tpu.memory_space<vmem>>, vector<80x8xf32>
    %c2 = arith.constant 2 : index
    %c0_26 = arith.constant 0 : index
    %c0_27 = arith.constant 0 : index
    %21 = vector.load %arg2[%c2, %c0_26, %c0_27] : memref<9x4x8xbf16, #tpu.memory_space<vmem>>, vector<1x4x8xbf16>
    %22 = vector.shape_cast %21 : vector<1x4x8xbf16> to vector<4x8xbf16>
    %cst_28 = arith.constant dense<0.000000e+00> : vector<80x8xf32>
    %23 = tpu.matmul %19, %22, %cst_28 {dimension_numbers = #tpu.dot_dimension_numbers<[1], [0], [0], [1], [0, 0, 1, 1], [], []>} : vector<80x4xbf16>, vector<4x8xbf16>, vector<80x8xf32> -> vector<80x8xf32>
    %24 = arith.addf %20, %23 : vector<80x8xf32>
    %c0_29 = arith.constant 0 : index
    %c0_30 = arith.constant 0 : index
    %25 = vector.load %arg10[%c0_29, %c0_30] : memref<80x8xf32, #tpu.memory_space<vmem>>, vector<80x8xf32>
    tpu.vector_store %arg10[%c0_29, %c0_30], %24 {strides = array<i32>} : memref<80x8xf32, #tpu.memory_space<vmem>>, vector<80x8xf32>,
    %c0_31 = arith.constant 0 : index
    %c200 = arith.constant 200 : index
    %c0_32 = arith.constant 0 : index
    %26 = vector.load %arg1[%c0_31, %c200, %c0_32] : memref<1x400x4xbf16, #tpu.memory_space<vmem>>, vector<1x80x4xbf16>
    %27 = vector.shape_cast %26 : vector<1x80x4xbf16> to vector<80x4xbf16>
    %c0_33 = arith.constant 0 : index
    %c0_34 = arith.constant 0 : index
    %28 = vector.load %arg10[%c0_33, %c0_34] : memref<80x8xf32, #tpu.memory_space<vmem>>, vector<80x8xf32>
    %c3 = arith.constant 3 : index
    %c0_35 = arith.constant 0 : index
    %c0_36 = arith.constant 0 : index
    %29 = vector.load %arg2[%c3, %c0_35, %c0_36] : memref<9x4x8xbf16, #tpu.memory_space<vmem>>, vector<1x4x8xbf16>
    %30 = vector.shape_cast %29 : vector<1x4x8xbf16> to vector<4x8xbf16>
    %cst_37 = arith.constant dense<0.000000e+00> : vector<80x8xf32>
    %31 = tpu.matmul %27, %30, %cst_37 {dimension_numbers = #tpu.dot_dimension_numbers<[1], [0], [0], [1], [0, 0, 1, 1], [], []>} : vector<80x4xbf16>, vector<4x8xbf16>, vector<80x8xf32> -> vector<80x8xf32>
    %32 = arith.addf %28, %31 : vector<80x8xf32>
    %c0_38 = arith.constant 0 : index
    %c0_39 = arith.constant 0 : index
    %33 = vector.load %arg10[%c0_38, %c0_39] : memref<80x8xf32, #tpu.memory_space<vmem>>, vector<80x8xf32>
    tpu.vector_store %arg10[%c0_38, %c0_39], %32 {strides = array<i32>} : memref<80x8xf32, #tpu.memory_space<vmem>>, vector<80x8xf32>,
    %c0_40 = arith.constant 0 : index
    %c300 = arith.constant 300 : index
    %c0_41 = arith.constant 0 : index
    %34 = vector.load %arg1[%c0_40, %c300, %c0_41] : memref<1x400x4xbf16, #tpu.memory_space<vmem>>, vector<1x80x4xbf16>
    %35 = vector.shape_cast %34 : vector<1x80x4xbf16> to vector<80x4xbf16>
    %c0_42 = arith.constant 0 : index
    %c0_43 = arith.constant 0 : index
    %36 = vector.load %arg10[%c0_42, %c0_43] : memref<80x8xf32, #tpu.memory_space<vmem>>, vector<80x8xf32>
    %c4 = arith.constant 4 : index
    %c0_44 = arith.constant 0 : index
    %c0_45 = arith.constant 0 : index
    %37 = vector.load %arg2[%c4, %c0_44, %c0_45] : memref<9x4x8xbf16, #tpu.memory_space<vmem>>, vector<1x4x8xbf16>
    %38 = vector.shape_cast %37 : vector<1x4x8xbf16> to vector<4x8xbf16>
    %cst_46 = arith.constant dense<0.000000e+00> : vector<80x8xf32>
    %39 = tpu.matmul %35, %38, %cst_46 {dimension_numbers = #tpu.dot_dimension_numbers<[1], [0], [0], [1], [0, 0, 1, 1], [], []>} : vector<80x4xbf16>, vector<4x8xbf16>, vector<80x8xf32> -> vector<80x8xf32>
    %40 = arith.addf %36, %39 : vector<80x8xf32>
    %c0_47 = arith.constant 0 : index
    %c0_48 = arith.constant 0 : index
    %41 = vector.load %arg10[%c0_47, %c0_48] : memref<80x8xf32, #tpu.memory_space<vmem>>, vector<80x8xf32>
    tpu.vector_store %arg10[%c0_47, %c0_48], %40 {strides = array<i32>} : memref<80x8xf32, #tpu.memory_space<vmem>>, vector<80x8xf32>,
    %c0_49 = arith.constant 0 : index
    %c201 = arith.constant 201 : index
    %c0_50 = arith.constant 0 : index
    %42 = vector.load %arg1[%c0_49, %c201, %c0_50] : memref<1x400x4xbf16, #tpu.memory_space<vmem>>, vector<1x80x4xbf16>
    %43 = vector.shape_cast %42 : vector<1x80x4xbf16> to vector<80x4xbf16>
    %c0_51 = arith.constant 0 : index
    %c0_52 = arith.constant 0 : index
    %44 = vector.load %arg10[%c0_51, %c0_52] : memref<80x8xf32, #tpu.memory_space<vmem>>, vector<80x8xf32>
    %c5 = arith.constant 5 : index
    %c0_53 = arith.constant 0 : index
    %c0_54 = arith.constant 0 : index
    %45 = vector.load %arg2[%c5, %c0_53, %c0_54] : memref<9x4x8xbf16, #tpu.memory_space<vmem>>, vector<1x4x8xbf16>
    %46 = vector.shape_cast %45 : vector<1x4x8xbf16> to vector<4x8xbf16>
    %cst_55 = arith.constant dense<0.000000e+00> : vector<80x8xf32>
    %47 = tpu.matmul %43, %46, %cst_55 {dimension_numbers = #tpu.dot_dimension_numbers<[1], [0], [0], [1], [0, 0, 1, 1], [], []>} : vector<80x4xbf16>, vector<4x8xbf16>, vector<80x8xf32> -> vector<80x8xf32>
    %48 = arith.addf %44, %47 : vector<80x8xf32>
    %c0_56 = arith.constant 0 : index
    %c0_57 = arith.constant 0 : index
    %49 = vector.load %arg10[%c0_56, %c0_57] : memref<80x8xf32, #tpu.memory_space<vmem>>, vector<80x8xf32>
    tpu.vector_store %arg10[%c0_56, %c0_57], %48 {strides = array<i32>} : memref<80x8xf32, #tpu.memory_space<vmem>>, vector<80x8xf32>,
    %c0_58 = arith.constant 0 : index
    %c10 = arith.constant 10 : index
    %c0_59 = arith.constant 0 : index
    %50 = vector.load %arg1[%c0_58, %c10, %c0_59] : memref<1x400x4xbf16, #tpu.memory_space<vmem>>, vector<1x80x4xbf16>
    %51 = vector.shape_cast %50 : vector<1x80x4xbf16> to vector<80x4xbf16>
    %c0_60 = arith.constant 0 : index
    %c0_61 = arith.constant 0 : index
    %52 = vector.load %arg10[%c0_60, %c0_61] : memref<80x8xf32, #tpu.memory_space<vmem>>, vector<80x8xf32>
    %c6 = arith.constant 6 : index
    %c0_62 = arith.constant 0 : index
    %c0_63 = arith.constant 0 : index
    %53 = vector.load %arg2[%c6, %c0_62, %c0_63] : memref<9x4x8xbf16, #tpu.memory_space<vmem>>, vector<1x4x8xbf16>
    %54 = vector.shape_cast %53 : vector<1x4x8xbf16> to vector<4x8xbf16>
    %cst_64 = arith.constant dense<0.000000e+00> : vector<80x8xf32>
    %55 = tpu.matmul %51, %54, %cst_64 {dimension_numbers = #tpu.dot_dimension_numbers<[1], [0], [0], [1], [0, 0, 1, 1], [], []>} : vector<80x4xbf16>, vector<4x8xbf16>, vector<80x8xf32> -> vector<80x8xf32>
    %56 = arith.addf %52, %55 : vector<80x8xf32>
    %c0_65 = arith.constant 0 : index
    %c0_66 = arith.constant 0 : index
    %57 = vector.load %arg10[%c0_65, %c0_66] : memref<80x8xf32, #tpu.memory_space<vmem>>, vector<80x8xf32>
    tpu.vector_store %arg10[%c0_65, %c0_66], %56 {strides = array<i32>} : memref<80x8xf32, #tpu.memory_space<vmem>>, vector<80x8xf32>,
    %c0_67 = arith.constant 0 : index
    %c110 = arith.constant 110 : index
    %c0_68 = arith.constant 0 : index
    %58 = vector.load %arg1[%c0_67, %c110, %c0_68] : memref<1x400x4xbf16, #tpu.memory_space<vmem>>, vector<1x80x4xbf16>
    %59 = vector.shape_cast %58 : vector<1x80x4xbf16> to vector<80x4xbf16>
    %c0_69 = arith.constant 0 : index
    %c0_70 = arith.constant 0 : index
    %60 = vector.load %arg10[%c0_69, %c0_70] : memref<80x8xf32, #tpu.memory_space<vmem>>, vector<80x8xf32>
    %c7 = arith.constant 7 : index
    %c0_71 = arith.constant 0 : index
    %c0_72 = arith.constant 0 : index
    %61 = vector.load %arg2[%c7, %c0_71, %c0_72] : memref<9x4x8xbf16, #tpu.memory_space<vmem>>, vector<1x4x8xbf16>
    %62 = vector.shape_cast %61 : vector<1x4x8xbf16> to vector<4x8xbf16>
    %cst_73 = arith.constant dense<0.000000e+00> : vector<80x8xf32>
    %63 = tpu.matmul %59, %62, %cst_73 {dimension_numbers = #tpu.dot_dimension_numbers<[1], [0], [0], [1], [0, 0, 1, 1], [], []>} : vector<80x4xbf16>, vector<4x8xbf16>, vector<80x8xf32> -> vector<80x8xf32>
    %64 = arith.addf %60, %63 : vector<80x8xf32>
    %c0_74 = arith.constant 0 : index
    %c0_75 = arith.constant 0 : index
    %65 = vector.load %arg10[%c0_74, %c0_75] : memref<80x8xf32, #tpu.memory_space<vmem>>, vector<80x8xf32>
    tpu.vector_store %arg10[%c0_74, %c0_75], %64 {strides = array<i32>} : memref<80x8xf32, #tpu.memory_space<vmem>>, vector<80x8xf32>,
    %c0_76 = arith.constant 0 : index
    %c11 = arith.constant 11 : index
    %c0_77 = arith.constant 0 : index
    %66 = vector.load %arg1[%c0_76, %c11, %c0_77] : memref<1x400x4xbf16, #tpu.memory_space<vmem>>, vector<1x80x4xbf16>
    %67 = vector.shape_cast %66 : vector<1x80x4xbf16> to vector<80x4xbf16>
    %c0_78 = arith.constant 0 : index
    %c0_79 = arith.constant 0 : index
    %68 = vector.load %arg10[%c0_78, %c0_79] : memref<80x8xf32, #tpu.memory_space<vmem>>, vector<80x8xf32>
    %c8 = arith.constant 8 : index
    %c0_80 = arith.constant 0 : index
    %c0_81 = arith.constant 0 : index
    %69 = vector.load %arg2[%c8, %c0_80, %c0_81] : memref<9x4x8xbf16, #tpu.memory_space<vmem>>, vector<1x4x8xbf16>
    %70 = vector.shape_cast %69 : vector<1x4x8xbf16> to vector<4x8xbf16>
    %cst_82 = arith.constant dense<0.000000e+00> : vector<80x8xf32>
    %71 = tpu.matmul %67, %70, %cst_82 {dimension_numbers = #tpu.dot_dimension_numbers<[1], [0], [0], [1], [0, 0, 1, 1], [], []>} : vector<80x4xbf16>, vector<4x8xbf16>, vector<80x8xf32> -> vector<80x8xf32>
    %72 = arith.addf %68, %71 : vector<80x8xf32>
    %c0_83 = arith.constant 0 : index
    %c0_84 = arith.constant 0 : index
    %73 = vector.load %arg10[%c0_83, %c0_84] : memref<80x8xf32, #tpu.memory_space<vmem>>, vector<80x8xf32>
    tpu.vector_store %arg10[%c0_83, %c0_84], %72 {strides = array<i32>} : memref<80x8xf32, #tpu.memory_space<vmem>>, vector<80x8xf32>,
    %c0_85 = arith.constant 0 : index
    %c0_86 = arith.constant 0 : index
    %74 = vector.load %arg10[%c0_85, %c0_86] : memref<80x8xf32, #tpu.memory_space<vmem>>, vector<80x8xf32>
    %c0_87 = arith.constant 0 : index
    %c0_88 = arith.constant 0 : index
    %75 = vector.load %arg5[%c0_87, %c0_88] : memref<1x8xf32, #tpu.memory_space<vmem>>, vector<1x8xf32>
    %76 = vector.broadcast %75 : vector<1x8xf32> to vector<80x8xf32>
    %77 = arith.addf %74, %76 : vector<80x8xf32>
    %cst_89 = arith.constant 0.000000e+00 : f32
    %78 = vector.broadcast %cst_89 : f32 to vector<80x8xf32>
    %79 = arith.maximumf %77, %78 : vector<80x8xf32>
    %c0_90 = arith.constant 0 : index
    %c0_91 = arith.constant 0 : index
    %80 = vector.load %arg7[%c0_90, %c0_91] : memref<80x1xf32, #tpu.memory_space<vmem>>, vector<80x1xf32>
    %81 = vector.broadcast %80 : vector<80x1xf32> to vector<80x8xf32>
    %82 = arith.mulf %79, %81 : vector<80x8xf32>
    %83 = arith.truncf %82 : vector<80x8xf32> to vector<80x8xbf16>
    %cst_92 = arith.constant 0.000000e+00 : bf16
    %84 = vector.broadcast %cst_92 : bf16 to vector<110x8xbf16>
    %c0_93 = arith.constant 0 : index
    %c0_94 = arith.constant 0 : index
    %85 = vector.load %arg9[%c0_93, %c0_94] : memref<110x8xbf16, #tpu.memory_space<vmem>>, vector<110x8xbf16>
    tpu.vector_store %arg9[%c0_93, %c0_94], %84 {strides = array<i32>} : memref<110x8xbf16, #tpu.memory_space<vmem>>, vector<110x8xbf16>,
    %c11_95 = arith.constant 11 : index
    %c0_96 = arith.constant 0 : index
    %86 = vector.load %arg9[%c11_95, %c0_96] : memref<110x8xbf16, #tpu.memory_space<vmem>>, vector<80x8xbf16>
    tpu.vector_store %arg9[%c11_95, %c0_96], %83 {strides = array<i32>} : memref<110x8xbf16, #tpu.memory_space<vmem>>, vector<80x8xbf16>,
    %cst_97 = arith.constant 0.000000e+00 : f32
    %87 = vector.broadcast %cst_97 : f32 to vector<80x8xf32>
    %c0_98 = arith.constant 0 : index
    %c0_99 = arith.constant 0 : index
    %88 = vector.load %arg10[%c0_98, %c0_99] : memref<80x8xf32, #tpu.memory_space<vmem>>, vector<80x8xf32>
    tpu.vector_store %arg10[%c0_98, %c0_99], %87 {strides = array<i32>} : memref<80x8xf32, #tpu.memory_space<vmem>>, vector<80x8xf32>,
    %c0_100 = arith.constant 0 : index
    %c0_101 = arith.constant 0 : index
    %89 = vector.load %arg9[%c0_100, %c0_101] : memref<110x8xbf16, #tpu.memory_space<vmem>>, vector<80x8xbf16>
    %c0_102 = arith.constant 0 : index
    %c0_103 = arith.constant 0 : index
    %90 = vector.load %arg10[%c0_102, %c0_103] : memref<80x8xf32, #tpu.memory_space<vmem>>, vector<80x8xf32>
    %c0_104 = arith.constant 0 : index
    %c0_105 = arith.constant 0 : index
    %c0_106 = arith.constant 0 : index
    %91 = vector.load %arg3[%c0_104, %c0_105, %c0_106] : memref<9x8x8xbf16, #tpu.memory_space<vmem>>, vector<1x8x8xbf16>
    %92 = vector.shape_cast %91 : vector<1x8x8xbf16> to vector<8x8xbf16>
    %cst_107 = arith.constant dense<0.000000e+00> : vector<80x8xf32>
    %93 = tpu.matmul %89, %92, %cst_107 {dimension_numbers = #tpu.dot_dimension_numbers<[1], [0], [0], [1], [0, 0, 1, 1], [], []>} : vector<80x8xbf16>, vector<8x8xbf16>, vector<80x8xf32> -> vector<80x8xf32>
    %94 = arith.addf %90, %93 : vector<80x8xf32>
    %c0_108 = arith.constant 0 : index
    %c0_109 = arith.constant 0 : index
    %95 = vector.load %arg10[%c0_108, %c0_109] : memref<80x8xf32, #tpu.memory_space<vmem>>, vector<80x8xf32>
    tpu.vector_store %arg10[%c0_108, %c0_109], %94 {strides = array<i32>} : memref<80x8xf32, #tpu.memory_space<vmem>>, vector<80x8xf32>,
    %c1_110 = arith.constant 1 : index
    %c0_111 = arith.constant 0 : index
    %96 = vector.load %arg9[%c1_110, %c0_111] : memref<110x8xbf16, #tpu.memory_space<vmem>>, vector<80x8xbf16>
    %c0_112 = arith.constant 0 : index
    %c0_113 = arith.constant 0 : index
    %97 = vector.load %arg10[%c0_112, %c0_113] : memref<80x8xf32, #tpu.memory_space<vmem>>, vector<80x8xf32>
    %c1_114 = arith.constant 1 : index
    %c0_115 = arith.constant 0 : index
    %c0_116 = arith.constant 0 : index
    %98 = vector.load %arg3[%c1_114, %c0_115, %c0_116] : memref<9x8x8xbf16, #tpu.memory_space<vmem>>, vector<1x8x8xbf16>
    %99 = vector.shape_cast %98 : vector<1x8x8xbf16> to vector<8x8xbf16>
    %cst_117 = arith.constant dense<0.000000e+00> : vector<80x8xf32>
    %100 = tpu.matmul %96, %99, %cst_117 {dimension_numbers = #tpu.dot_dimension_numbers<[1], [0], [0], [1], [0, 0, 1, 1], [], []>} : vector<80x8xbf16>, vector<8x8xbf16>, vector<80x8xf32> -> vector<80x8xf32>
    %101 = arith.addf %97, %100 : vector<80x8xf32>
    %c0_118 = arith.constant 0 : index
    %c0_119 = arith.constant 0 : index
    %102 = vector.load %arg10[%c0_118, %c0_119] : memref<80x8xf32, #tpu.memory_space<vmem>>, vector<80x8xf32>
    tpu.vector_store %arg10[%c0_118, %c0_119], %101 {strides = array<i32>} : memref<80x8xf32, #tpu.memory_space<vmem>>, vector<80x8xf32>,
    %c2_120 = arith.constant 2 : index
    %c0_121 = arith.constant 0 : index
    %103 = vector.load %arg9[%c2_120, %c0_121] : memref<110x8xbf16, #tpu.memory_space<vmem>>, vector<80x8xbf16>
    %c0_122 = arith.constant 0 : index
    %c0_123 = arith.constant 0 : index
    %104 = vector.load %arg10[%c0_122, %c0_123] : memref<80x8xf32, #tpu.memory_space<vmem>>, vector<80x8xf32>
    %c2_124 = arith.constant 2 : index
    %c0_125 = arith.constant 0 : index
    %c0_126 = arith.constant 0 : index
    %105 = vector.load %arg3[%c2_124, %c0_125, %c0_126] : memref<9x8x8xbf16, #tpu.memory_space<vmem>>, vector<1x8x8xbf16>
    %106 = vector.shape_cast %105 : vector<1x8x8xbf16> to vector<8x8xbf16>
    %cst_127 = arith.constant dense<0.000000e+00> : vector<80x8xf32>
    %107 = tpu.matmul %103, %106, %cst_127 {dimension_numbers = #tpu.dot_dimension_numbers<[1], [0], [0], [1], [0, 0, 1, 1], [], []>} : vector<80x8xbf16>, vector<8x8xbf16>, vector<80x8xf32> -> vector<80x8xf32>
    %108 = arith.addf %104, %107 : vector<80x8xf32>
    %c0_128 = arith.constant 0 : index
    %c0_129 = arith.constant 0 : index
    %109 = vector.load %arg10[%c0_128, %c0_129] : memref<80x8xf32, #tpu.memory_space<vmem>>, vector<80x8xf32>
    tpu.vector_store %arg10[%c0_128, %c0_129], %108 {strides = array<i32>} : memref<80x8xf32, #tpu.memory_space<vmem>>, vector<80x8xf32>,
    %c10_130 = arith.constant 10 : index
    %c0_131 = arith.constant 0 : index
    %110 = vector.load %arg9[%c10_130, %c0_131] : memref<110x8xbf16, #tpu.memory_space<vmem>>, vector<80x8xbf16>
    %c0_132 = arith.constant 0 : index
    %c0_133 = arith.constant 0 : index
    %111 = vector.load %arg10[%c0_132, %c0_133] : memref<80x8xf32, #tpu.memory_space<vmem>>, vector<80x8xf32>
    %c3_134 = arith.constant 3 : index
    %c0_135 = arith.constant 0 : index
    %c0_136 = arith.constant 0 : index
    %112 = vector.load %arg3[%c3_134, %c0_135, %c0_136] : memref<9x8x8xbf16, #tpu.memory_space<vmem>>, vector<1x8x8xbf16>
    %113 = vector.shape_cast %112 : vector<1x8x8xbf16> to vector<8x8xbf16>
    %cst_137 = arith.constant dense<0.000000e+00> : vector<80x8xf32>
    %114 = tpu.matmul %110, %113, %cst_137 {dimension_numbers = #tpu.dot_dimension_numbers<[1], [0], [0], [1], [0, 0, 1, 1], [], []>} : vector<80x8xbf16>, vector<8x8xbf16>, vector<80x8xf32> -> vector<80x8xf32>
    %115 = arith.addf %111, %114 : vector<80x8xf32>
    %c0_138 = arith.constant 0 : index
    %c0_139 = arith.constant 0 : index
    %116 = vector.load %arg10[%c0_138, %c0_139] : memref<80x8xf32, #tpu.memory_space<vmem>>, vector<80x8xf32>
    tpu.vector_store %arg10[%c0_138, %c0_139], %115 {strides = array<i32>} : memref<80x8xf32, #tpu.memory_space<vmem>>, vector<80x8xf32>,
    %c11_140 = arith.constant 11 : index
    %c0_141 = arith.constant 0 : index
    %117 = vector.load %arg9[%c11_140, %c0_141] : memref<110x8xbf16, #tpu.memory_space<vmem>>, vector<80x8xbf16>
    %c0_142 = arith.constant 0 : index
    %c0_143 = arith.constant 0 : index
    %118 = vector.load %arg10[%c0_142, %c0_143] : memref<80x8xf32, #tpu.memory_space<vmem>>, vector<80x8xf32>
    %c4_144 = arith.constant 4 : index
    %c0_145 = arith.constant 0 : index
    %c0_146 = arith.constant 0 : index
    %119 = vector.load %arg3[%c4_144, %c0_145, %c0_146] : memref<9x8x8xbf16, #tpu.memory_space<vmem>>, vector<1x8x8xbf16>
    %120 = vector.shape_cast %119 : vector<1x8x8xbf16> to vector<8x8xbf16>
    %cst_147 = arith.constant dense<0.000000e+00> : vector<80x8xf32>
    %121 = tpu.matmul %117, %120, %cst_147 {dimension_numbers = #tpu.dot_dimension_numbers<[1], [0], [0], [1], [0, 0, 1, 1], [], []>} : vector<80x8xbf16>, vector<8x8xbf16>, vector<80x8xf32> -> vector<80x8xf32>
    %122 = arith.addf %118, %121 : vector<80x8xf32>
    %c0_148 = arith.constant 0 : index
    %c0_149 = arith.constant 0 : index
    %123 = vector.load %arg10[%c0_148, %c0_149] : memref<80x8xf32, #tpu.memory_space<vmem>>, vector<80x8xf32>
    tpu.vector_store %arg10[%c0_148, %c0_149], %122 {strides = array<i32>} : memref<80x8xf32, #tpu.memory_space<vmem>>, vector<80x8xf32>,
    %c12 = arith.constant 12 : index
    %c0_150 = arith.constant 0 : index
    %124 = vector.load %arg9[%c12, %c0_150] : memref<110x8xbf16, #tpu.memory_space<vmem>>, vector<80x8xbf16>
    %c0_151 = arith.constant 0 : index
    %c0_152 = arith.constant 0 : index
    %125 = vector.load %arg10[%c0_151, %c0_152] : memref<80x8xf32, #tpu.memory_space<vmem>>, vector<80x8xf32>
    %c5_153 = arith.constant 5 : index
    %c0_154 = arith.constant 0 : index
    %c0_155 = arith.constant 0 : index
    %126 = vector.load %arg3[%c5_153, %c0_154, %c0_155] : memref<9x8x8xbf16, #tpu.memory_space<vmem>>, vector<1x8x8xbf16>
    %127 = vector.shape_cast %126 : vector<1x8x8xbf16> to vector<8x8xbf16>
    %cst_156 = arith.constant dense<0.000000e+00> : vector<80x8xf32>
    %128 = tpu.matmul %124, %127, %cst_156 {dimension_numbers = #tpu.dot_dimension_numbers<[1], [0], [0], [1], [0, 0, 1, 1], [], []>} : vector<80x8xbf16>, vector<8x8xbf16>, vector<80x8xf32> -> vector<80x8xf32>
    %129 = arith.addf %125, %128 : vector<80x8xf32>
    %c0_157 = arith.constant 0 : index
    %c0_158 = arith.constant 0 : index
    %130 = vector.load %arg10[%c0_157, %c0_158] : memref<80x8xf32, #tpu.memory_space<vmem>>, vector<80x8xf32>
    tpu.vector_store %arg10[%c0_157, %c0_158], %129 {strides = array<i32>} : memref<80x8xf32, #tpu.memory_space<vmem>>, vector<80x8xf32>,
    %c20 = arith.constant 20 : index
    %c0_159 = arith.constant 0 : index
    %131 = vector.load %arg9[%c20, %c0_159] : memref<110x8xbf16, #tpu.memory_space<vmem>>, vector<80x8xbf16>
    %c0_160 = arith.constant 0 : index
    %c0_161 = arith.constant 0 : index
    %132 = vector.load %arg10[%c0_160, %c0_161] : memref<80x8xf32, #tpu.memory_space<vmem>>, vector<80x8xf32>
    %c6_162 = arith.constant 6 : index
    %c0_163 = arith.constant 0 : index
    %c0_164 = arith.constant 0 : index
    %133 = vector.load %arg3[%c6_162, %c0_163, %c0_164] : memref<9x8x8xbf16, #tpu.memory_space<vmem>>, vector<1x8x8xbf16>
    %134 = vector.shape_cast %133 : vector<1x8x8xbf16> to vector<8x8xbf16>
    %cst_165 = arith.constant dense<0.000000e+00> : vector<80x8xf32>
    %135 = tpu.matmul %131, %134, %cst_165 {dimension_numbers = #tpu.dot_dimension_numbers<[1], [0], [0], [1], [0, 0, 1, 1], [], []>} : vector<80x8xbf16>, vector<8x8xbf16>, vector<80x8xf32> -> vector<80x8xf32>
    %136 = arith.addf %132, %135 : vector<80x8xf32>
    %c0_166 = arith.constant 0 : index
    %c0_167 = arith.constant 0 : index
    %137 = vector.load %arg10[%c0_166, %c0_167] : memref<80x8xf32, #tpu.memory_space<vmem>>, vector<80x8xf32>
    tpu.vector_store %arg10[%c0_166, %c0_167], %136 {strides = array<i32>} : memref<80x8xf32, #tpu.memory_space<vmem>>, vector<80x8xf32>,
    %c21 = arith.constant 21 : index
    %c0_168 = arith.constant 0 : index
    %138 = vector.load %arg9[%c21, %c0_168] : memref<110x8xbf16, #tpu.memory_space<vmem>>, vector<80x8xbf16>
    %c0_169 = arith.constant 0 : index
    %c0_170 = arith.constant 0 : index
    %139 = vector.load %arg10[%c0_169, %c0_170] : memref<80x8xf32, #tpu.memory_space<vmem>>, vector<80x8xf32>
    %c7_171 = arith.constant 7 : index
    %c0_172 = arith.constant 0 : index
    %c0_173 = arith.constant 0 : index
    %140 = vector.load %arg3[%c7_171, %c0_172, %c0_173] : memref<9x8x8xbf16, #tpu.memory_space<vmem>>, vector<1x8x8xbf16>
    %141 = vector.shape_cast %140 : vector<1x8x8xbf16> to vector<8x8xbf16>
    %cst_174 = arith.constant dense<0.000000e+00> : vector<80x8xf32>
    %142 = tpu.matmul %138, %141, %cst_174 {dimension_numbers = #tpu.dot_dimension_numbers<[1], [0], [0], [1], [0, 0, 1, 1], [], []>} : vector<80x8xbf16>, vector<8x8xbf16>, vector<80x8xf32> -> vector<80x8xf32>
    %143 = arith.addf %139, %142 : vector<80x8xf32>
    %c0_175 = arith.constant 0 : index
    %c0_176 = arith.constant 0 : index
    %144 = vector.load %arg10[%c0_175, %c0_176] : memref<80x8xf32, #tpu.memory_space<vmem>>, vector<80x8xf32>
    tpu.vector_store %arg10[%c0_175, %c0_176], %143 {strides = array<i32>} : memref<80x8xf32, #tpu.memory_space<vmem>>, vector<80x8xf32>,
    %c22 = arith.constant 22 : index
    %c0_177 = arith.constant 0 : index
    %145 = vector.load %arg9[%c22, %c0_177] : memref<110x8xbf16, #tpu.memory_space<vmem>>, vector<80x8xbf16>
    %c0_178 = arith.constant 0 : index
    %c0_179 = arith.constant 0 : index
    %146 = vector.load %arg10[%c0_178, %c0_179] : memref<80x8xf32, #tpu.memory_space<vmem>>, vector<80x8xf32>
    %c8_180 = arith.constant 8 : index
    %c0_181 = arith.constant 0 : index
    %c0_182 = arith.constant 0 : index
    %147 = vector.load %arg3[%c8_180, %c0_181, %c0_182] : memref<9x8x8xbf16, #tpu.memory_space<vmem>>, vector<1x8x8xbf16>
    %148 = vector.shape_cast %147 : vector<1x8x8xbf16> to vector<8x8xbf16>
    %cst_183 = arith.constant dense<0.000000e+00> : vector<80x8xf32>
    %149 = tpu.matmul %145, %148, %cst_183 {dimension_numbers = #tpu.dot_dimension_numbers<[1], [0], [0], [1], [0, 0, 1, 1], [], []>} : vector<80x8xbf16>, vector<8x8xbf16>, vector<80x8xf32> -> vector<80x8xf32>
    %150 = arith.addf %146, %149 : vector<80x8xf32>
    %c0_184 = arith.constant 0 : index
    %c0_185 = arith.constant 0 : index
    %151 = vector.load %arg10[%c0_184, %c0_185] : memref<80x8xf32, #tpu.memory_space<vmem>>, vector<80x8xf32>
    tpu.vector_store %arg10[%c0_184, %c0_185], %150 {strides = array<i32>} : memref<80x8xf32, #tpu.memory_space<vmem>>, vector<80x8xf32>,
    %c0_186 = arith.constant 0 : index
    %c300_187 = arith.constant 300 : index
    %c0_188 = arith.constant 0 : index
    %152 = vector.load %arg1[%c0_186, %c300_187, %c0_188] : memref<1x400x4xbf16, #tpu.memory_space<vmem>>, vector<1x80x4xbf16>
    %153 = vector.shape_cast %152 : vector<1x80x4xbf16> to vector<80x4xbf16>
    %c0_189 = arith.constant 0 : index
    %c0_190 = arith.constant 0 : index
    %154 = vector.load %arg4[%c0_189, %c0_190] : memref<4x8xbf16, #tpu.memory_space<vmem>>, vector<4x8xbf16>
    %cst_191 = arith.constant dense<0.000000e+00> : vector<80x8xf32>
    %155 = tpu.matmul %153, %154, %cst_191 {dimension_numbers = #tpu.dot_dimension_numbers<[1], [0], [0], [1], [0, 0, 1, 1], [], []>} : vector<80x4xbf16>, vector<4x8xbf16>, vector<80x8xf32> -> vector<80x8xf32>
    %c0_192 = arith.constant 0 : index
    %c0_193 = arith.constant 0 : index
    %156 = vector.load %arg10[%c0_192, %c0_193] : memref<80x8xf32, #tpu.memory_space<vmem>>, vector<80x8xf32>
    %c0_194 = arith.constant 0 : index
    %c0_195 = arith.constant 0 : index
    %157 = vector.load %arg6[%c0_194, %c0_195] : memref<1x8xf32, #tpu.memory_space<vmem>>, vector<1x8xf32>
    %158 = vector.broadcast %157 : vector<1x8xf32> to vector<80x8xf32>
    %159 = arith.addf %156, %158 : vector<80x8xf32>
    %160 = arith.addf %159, %155 : vector<80x8xf32>
    %cst_196 = arith.constant 0.000000e+00 : f32
    %161 = vector.broadcast %cst_196 : f32 to vector<80x8xf32>
    %162 = arith.maximumf %160, %161 : vector<80x8xf32>
    %c0_197 = arith.constant 0 : index
    %c0_198 = arith.constant 0 : index
    %c0_199 = arith.constant 0 : index
    %163 = vector.load %arg8[%c0_197, %c0_198, %c0_199] : memref<1x80x8xf32, #tpu.memory_space<vmem>>, vector<1x80x8xf32>
    %164 = vector.shape_cast %163 : vector<1x80x8xf32> to vector<80x8xf32>
    %165 = vector.shape_cast %162 : vector<80x8xf32> to vector<1x80x8xf32>
    tpu.vector_store %arg8[%c0_197, %c0_198, %c0_199], %165 {strides = array<i32>} : memref<1x80x8xf32, #tpu.memory_space<vmem>>, vector<1x80x8xf32>,
    return
  }
  func.func @transform_0(%arg0: i32) -> (i32, i32, i32) {
    %c0_i32 = arith.constant 0 : i32
    %c0_i32_0 = arith.constant 0 : i32
    %c0_i32_1 = arith.constant 0 : i32
    return %arg0, %c0_i32, %c0_i32_0 : i32, i32, i32
  }
  func.func @transform_1(%arg0: i32) -> (i32, i32, i32) {
    %c0_i32 = arith.constant 0 : i32
    %c0_i32_0 = arith.constant 0 : i32
    %c0_i32_1 = arith.constant 0 : i32
    %c0_i32_2 = arith.constant 0 : i32
    return %c0_i32, %c0_i32_0, %c0_i32_1 : i32, i32, i32
  }
  func.func @transform_2(%arg0: i32) -> (i32, i32, i32) {
    %c0_i32 = arith.constant 0 : i32
    %c0_i32_0 = arith.constant 0 : i32
    %c0_i32_1 = arith.constant 0 : i32
    %c0_i32_2 = arith.constant 0 : i32
    return %c0_i32, %c0_i32_0, %c0_i32_1 : i32, i32, i32
  }
  func.func @transform_3(%arg0: i32) -> (i32, i32) {
    %c0_i32 = arith.constant 0 : i32
    %c0_i32_0 = arith.constant 0 : i32
    %c0_i32_1 = arith.constant 0 : i32
    return %c0_i32, %c0_i32_0 : i32, i32
  }
  func.func @transform_4(%arg0: i32) -> (i32, i32) {
    %c0_i32 = arith.constant 0 : i32
    %c0_i32_0 = arith.constant 0 : i32
    %c0_i32_1 = arith.constant 0 : i32
    return %c0_i32, %c0_i32_0 : i32, i32
  }
  func.func @transform_5(%arg0: i32) -> (i32, i32) {
    %c0_i32 = arith.constant 0 : i32
    %c0_i32_0 = arith.constant 0 : i32
    %c0_i32_1 = arith.constant 0 : i32
    return %c0_i32, %c0_i32_0 : i32, i32
  }
  func.func @transform_6(%arg0: i32) -> (i32, i32) {
    %c0_i32 = arith.constant 0 : i32
    %c0_i32_0 = arith.constant 0 : i32
    %c0_i32_1 = arith.constant 0 : i32
    return %c0_i32, %c0_i32_0 : i32, i32
  }
  func.func @transform_7(%arg0: i32) -> (i32, i32, i32) {
    %c0_i32 = arith.constant 0 : i32
    %c0_i32_0 = arith.constant 0 : i32
    %c0_i32_1 = arith.constant 0 : i32
    return %arg0, %c0_i32, %c0_i32_0 : i32, i32, i32
  }
}

</mosaic_0001>

<llo_original>
// kernel: residual_block_forward.1
$region0: #{residual_block_forward.1}
  #allocation0 [shape = 'u32[]', space=smem, size = 0x4, offset = 0x4, fixed_abs, tag = 'smem constant byte address 0x4 - core index']
  #allocation1 [shape = 'u32[144,128]{1,0:T(1,128)}', space=vmem, size = 0x12000, scoped, tag = 'internal scratch']
  #allocation2 [shape = 'bf16[110,8]{1,0:T(8,128)(2,1)}', space=vmem, size = 0x7000, scoped, tag = 'scratch operand']
  #allocation3 [shape = 'f32[80,8]{1,0:T(8,128)}', space=vmem, size = 0xa000, scoped, tag = 'scratch operand']
  %s0 = inlined_call_operand.vmem [shape: bf16[2,400,4], index: 0, kind: input, shape index: {}]
  %s1 = inlined_call_operand.vmem [shape: bf16[9,4,8], index: 1, kind: input, shape index: {}]
  %s2 = inlined_call_operand.vmem [shape: bf16[9,8,8], index: 2, kind: input, shape index: {}]
  %s3 = inlined_call_operand.vmem [shape: bf16[4,8], index: 3, kind: input, shape index: {}]
  %s4 = inlined_call_operand.vmem [shape: f32[1,8], index: 4, kind: input, shape index: {}]
  %s5 = inlined_call_operand.vmem [shape: f32[1,8], index: 5, kind: input, shape index: {}]
  %s6 = inlined_call_operand.vmem [shape: f32[80,1], index: 6, kind: input, shape index: {}]
  %s7 = inlined_call_operand.vmem [shape: f32[2,80,8], index: 7, kind: output, shape index: {}]
  %s8 = sld [smem:[#allocation0]]
  $region61: #{residual_block_forward.1} parent=0
    _
  %s10 = ssub.s32 1, %s8
  %s11 = scalar_select 0, %s10, %s8
  loop: start=0, step=1, limit=4
  $region2: #{residual_block_forward.1} parent=0 // loop_pre_header
    _
  $region3: #{residual_block_forward.1} parent=0 // loop_header
    %s13 = sphi 0, %s17
    %p14 = scmp.ge.s32.totalorder %s13, 4
    %s23 = sphi 0, %s25
    %s26 = sphi 0, %s23
    %s27 = sphi 0, %s26
    %s43 = sphi 0, %s27
    %s47 = sphi 0, %s47
    %s49 = sphi 0, %s47
    %s50 = sphi 0, %s49
    %s64 = sphi 0, %s50
    %s68 = sphi 0, %s68
    %s70 = sphi 0, %s68
    %s71 = sphi 0, %s70
    %s85 = sphi 0, %s71
    %s89 = sphi 0, %s89
    %s91 = sphi 0, %s89
    %s92 = sphi 0, %s91
    %s106 = sphi 0, %s92
    %s110 = sphi 0, %s110
    %s112 = sphi 0, %s110
    %s113 = sphi 0, %s112
    %s127 = sphi 0, %s113
    %s131 = sphi 0, %s131
    %s133 = sphi 0, %s131
    %s134 = sphi 0, %s133
    %s148 = sphi 0, %s134
    %s152 = sphi 0, %s152
    %s154 = sphi 0, %s152
    %s155 = sphi 0, %s154
    %s169 = sphi 0, %s155
    %s175 = sphi 0, %s177
    %s178 = sphi 0, %s175
    %s179 = sphi 0, %s178
    %s195 = sphi 0, %s179
  $region4: #{residual_block_forward.1} parent=0 // loop_header_branch
    %16 = sbr.rel (%p14) target = $region8
  $region5: #{residual_block_forward.1} parent=0 // loop_body
    %s18 = ssub.s32 %s13, 1
    %s19 = ssub.s32 %s13, 2
    %s20 = sadd.s32 %s13, 1
    %s21 = ssub.s32 %s13, %s20
    %p22 = scmp.eq.s32.totalorder %s21, 0
    %s24 = sadd.s32 %s23, 1
    %s25 = scalar_select %p22, %s23, %s24
    %p28 = pneg %p22
    %p29 = scmp.eq.s32.totalorder %s13, 1
    %p30 = por %p28, %p29
    %p31 = scmp.ne.s32.totalorder %s23, %s26
    %p32 = scmp.eq.s32.totalorder %s13, 0
    %p33 = por %p31, %p32
    %p34 = scmp.ne.s32.totalorder %s23, %s26
    %p35 = scmp.eq.s32.totalorder %s18, 1
    %p36 = por %p34, %p35
    %p37 = scmp.ne.s32.totalorder %s26, %s27
    %p38 = scmp.eq.s32.totalorder %s18, 0
    %p39 = por %p37, %p38
    %p40 = scmp.ne.s32.totalorder %s26, %s27
    %p41 = scmp.eq.s32.totalorder %s19, 1
    %p42 = por %p40, %p41
    %p44 = scmp.ne.s32.totalorder %s27, %s43
    %p45 = scmp.eq.s32.totalorder %s19, 0
    %p46 = por %p44, %p45
    %s48 = sadd.s32 %s47, 1
    %p51 = scmp.eq.s32.totalorder %s13, 1
    %p52 = scmp.ne.s32.totalorder %s47, %s49
    %p53 = scmp.eq.s32.totalorder %s13, 0
    %p54 = por %p52, %p53
    %p55 = scmp.ne.s32.totalorder %s47, %s49
    %p56 = scmp.eq.s32.totalorder %s18, 1
    %p57 = por %p55, %p56
    %p58 = scmp.ne.s32.totalorder %s49, %s50
    %p59 = scmp.eq.s32.totalorder %s18, 0
    %p60 = por %p58, %p59
    %p61 = scmp.ne.s32.totalorder %s49, %s50
    %p62 = scmp.eq.s32.totalorder %s19, 1
    %p63 = por %p61, %p62
    %p65 = scmp.ne.s32.totalorder %s50, %s64
    %p66 = scmp.eq.s32.totalorder %s19, 0
    %p67 = por %p65, %p66
    %s69 = sadd.s32 %s68, 1
    %p72 = scmp.eq.s32.totalorder %s13, 1
    %p73 = scmp.ne.s32.totalorder %s68, %s70
    %p74 = scmp.eq.s32.totalorder %s13, 0
    %p75 = por %p73, %p74
    %p76 = scmp.ne.s32.totalorder %s68, %s70
    %p77 = scmp.eq.s32.totalorder %s18, 1
    %p78 = por %p76, %p77
    %p79 = scmp.ne.s32.totalorder %s70, %s71
    %p80 = scmp.eq.s32.totalorder %s18, 0
    %p81 = por %p79, %p80
    %p82 = scmp.ne.s32.totalorder %s70, %s71
    %p83 = scmp.eq.s32.totalorder %s19, 1
    %p84 = por %p82, %p83
    %p86 = scmp.ne.s32.totalorder %s71, %s85
    %p87 = scmp.eq.s32.totalorder %s19, 0
    %p88 = por %p86, %p87
    %s90 = sadd.s32 %s89, 1
    %p93 = scmp.eq.s32.totalorder %s13, 1
    %p94 = scmp.ne.s32.totalorder %s89, %s91
    %p95 = scmp.eq.s32.totalorder %s13, 0
    %p96 = por %p94, %p95
    %p97 = scmp.ne.s32.totalorder %s89, %s91
    %p98 = scmp.eq.s32.totalorder %s18, 1
    %p99 = por %p97, %p98
    %p100 = scmp.ne.s32.totalorder %s91, %s92
    %p101 = scmp.eq.s32.totalorder %s18, 0
    %p102 = por %p100, %p101
    %p103 = scmp.ne.s32.totalorder %s91, %s92
    %p104 = scmp.eq.s32.totalorder %s19, 1
    %p105 = por %p103, %p104
    %p107 = scmp.ne.s32.totalorder %s92, %s106
    %p108 = scmp.eq.s32.totalorder %s19, 0
    %p109 = por %p107, %p108
    %s111 = sadd.s32 %s110, 1
    %p114 = scmp.eq.s32.totalorder %s13, 1
    %p115 = scmp.ne.s32.totalorder %s110, %s112
    %p116 = scmp.eq.s32.totalorder %s13, 0
    %p117 = por %p115, %p116
    %p118 = scmp.ne.s32.totalorder %s110, %s112
    %p119 = scmp.eq.s32.totalorder %s18, 1
    %p120 = por %p118, %p119
    %p121 = scmp.ne.s32.totalorder %s112, %s113
    %p122 = scmp.eq.s32.totalorder %s18, 0
    %p123 = por %p121, %p122
    %p124 = scmp.ne.s32.totalorder %s112, %s113
    %p125 = scmp.eq.s32.totalorder %s19, 1
    %p126 = por %p124, %p125
    %p128 = scmp.ne.s32.totalorder %s113, %s127
    %p129 = scmp.eq.s32.totalorder %s19, 0
    %p130 = por %p128, %p129
    %s132 = sadd.s32 %s131, 1
    %p135 = scmp.eq.s32.totalorder %s13, 1
    %p136 = scmp.ne.s32.totalorder %s131, %s133
    %p137 = scmp.eq.s32.totalorder %s13, 0
    %p138 = por %p136, %p137
    %p139 = scmp.ne.s32.totalorder %s131, %s133
    %p140 = scmp.eq.s32.totalorder %s18, 1
    %p141 = por %p139, %p140
    %p142 = scmp.ne.s32.totalorder %s133, %s134
    %p143 = scmp.eq.s32.totalorder %s18, 0
    %p144 = por %p142, %p143
    %p145 = scmp.ne.s32.totalorder %s133, %s134
    %p146 = scmp.eq.s32.totalorder %s19, 1
    %p147 = por %p145, %p146
    %p149 = scmp.ne.s32.totalorder %s134, %s148
    %p150 = scmp.eq.s32.totalorder %s19, 0
    %p151 = por %p149, %p150
    %s153 = sadd.s32 %s152, 1
    %p156 = scmp.eq.s32.totalorder %s13, 1
    %p157 = scmp.ne.s32.totalorder %s152, %s154
    %p158 = scmp.eq.s32.totalorder %s13, 0
    %p159 = por %p157, %p158
    %p160 = scmp.ne.s32.totalorder %s152, %s154
    %p161 = scmp.eq.s32.totalorder %s18, 1
    %p162 = por %p160, %p161
    %p163 = scmp.ne.s32.totalorder %s154, %s155
    %p164 = scmp.eq.s32.totalorder %s18, 0
    %p165 = por %p163, %p164
    %p166 = scmp.ne.s32.totalorder %s154, %s155
    %p167 = scmp.eq.s32.totalorder %s19, 1
    %p168 = por %p166, %p167
    %p170 = scmp.ne.s32.totalorder %s155, %s169
    %p171 = scmp.eq.s32.totalorder %s19, 0
    %p172 = por %p170, %p171
    %s173 = ssub.s32 %s13, %s20
    %p174 = scmp.eq.s32.totalorder %s173, 0
    %s176 = sadd.s32 %s175, 1
    %s177 = scalar_select %p174, %s175, %s176
    %p180 = pneg %p174
    %p181 = scmp.eq.s32.totalorder %s13, 1
    %p182 = por %p180, %p181
    %p183 = scmp.ne.s32.totalorder %s175, %s178
    %p184 = scmp.eq.s32.totalorder %s13, 0
    %p185 = por %p183, %p184
    %p186 = scmp.ne.s32.totalorder %s175, %s178
    %p187 = scmp.eq.s32.totalorder %s18, 1
    %p188 = por %p186, %p187
    %p189 = scmp.ne.s32.totalorder %s178, %s179
    %p190 = scmp.eq.s32.totalorder %s18, 0
    %p191 = por %p189, %p190
    %p192 = scmp.ne.s32.totalorder %s178, %s179
    %p193 = scmp.eq.s32.totalorder %s19, 1
    %p194 = por %p192, %p193
    %p196 = scmp.ne.s32.totalorder %s179, %s195
    %p197 = scmp.eq.s32.totalorder %s19, 0
    %p198 = por %p196, %p197
    %p199 = scmp.le.s32.totalorder 1, %s13
    %p200 = scmp.lt.s32.totalorder %s13, 3
    %p201 = pnand %p199, %p200
    %p202 = pneg %p201
    // Predicated region
    $region9: #{residual_block_forward.1} parent=5 // pred_check
      _
    $region10: #{residual_block_forward.1} parent=5 // pred_check_branch
      %204 = sbr.rel (%p201) target = $region12
    $region11: #{residual_block_forward.1} parent=5 // pred_region
      %s205 = ssub.s32 %s13, 1
      // Predicated region
      $region13: #{residual_block_forward.1} parent=11 // pred_check
        %p206 = pneg %p60
      $region14: #{residual_block_forward.1} parent=11 // pred_check_branch
        %208 = sbr.rel (%p206) target = $region16
      $region15: #{residual_block_forward.1} parent=11 // pred_region
        _
      $region16: #{residual_block_forward.1} parent=11 // pred_fallthru
        _
      // Predicated region
      $region17: #{residual_block_forward.1} parent=11 // pred_check
        %p209 = pneg %p81
      $region18: #{residual_block_forward.1} parent=11 // pred_check_branch
        %211 = sbr.rel (%p209) target = $region20
      $region19: #{residual_block_forward.1} parent=11 // pred_region
        _
      $region20: #{residual_block_forward.1} parent=11 // pred_fallthru
        _
      // Predicated region
      $region21: #{residual_block_forward.1} parent=11 // pred_check
        %p212 = pneg %p102
      $region22: #{residual_block_forward.1} parent=11 // pred_check_branch
        %214 = sbr.rel (%p212) target = $region24
      $region23: #{residual_block_forward.1} parent=11 // pred_region
        _
      $region24: #{residual_block_forward.1} parent=11 // pred_fallthru
        _
      // Predicated region
      $region25: #{residual_block_forward.1} parent=11 // pred_check
        %p215 = pneg %p123
      $region26: #{residual_block_forward.1} parent=11 // pred_check_branch
        %217 = sbr.rel (%p215) target = $region28
      $region27: #{residual_block_forward.1} parent=11 // pred_region
        _
      $region28: #{residual_block_forward.1} parent=11 // pred_fallthru
        _
      // Predicated region
      $region29: #{residual_block_forward.1} parent=11 // pred_check
        %p218 = pneg %p144
      $region30: #{residual_block_forward.1} parent=11 // pred_check_branch
        %220 = sbr.rel (%p218) target = $region32
      $region31: #{residual_block_forward.1} parent=11 // pred_region
        _
      $region32: #{residual_block_forward.1} parent=11 // pred_fallthru
        _
      // Predicated region
      $region33: #{residual_block_forward.1} parent=11 // pred_check
        %p221 = pneg %p165
      $region34: #{residual_block_forward.1} parent=11 // pred_check_branch
        %223 = sbr.rel (%p221) target = $region36
      $region35: #{residual_block_forward.1} parent=11 // pred_region
        _
      $region36: #{residual_block_forward.1} parent=11 // pred_fallthru
        _
    $region12: #{residual_block_forward.1} parent=5 // pred_fallthru
      _
    %p224 = scmp.lt.s32.totalorder %s13, 2
    // Predicated region
    $region37: #{residual_block_forward.1} parent=5 // pred_check
      %p225 = pneg %p224
    $region38: #{residual_block_forward.1} parent=5 // pred_check_branch
      %227 = sbr.rel (%p225) target = $region40
    $region39: #{residual_block_forward.1} parent=5 // pred_region
      // Predicated region
      $region41: #{residual_block_forward.1} parent=39 // pred_check
        %p228 = pneg %p33
      $region42: #{residual_block_forward.1} parent=39 // pred_check_branch
        %230 = sbr.rel (%p228) target = $region44
      $region43: #{residual_block_forward.1} parent=39 // pred_region
        %p231 = scmp.lt.s32.totalorder %s13, 1
        %s232 = scalar_select %p231, %s13, 1
        %s233 = smul.addr %s232, 50
        %s234 = smul.addr %s233, 4
        %s235 = scalar_lea.vmem %s0, %s234
      $region44: #{residual_block_forward.1} parent=39 // pred_fallthru
        _
    $region40: #{residual_block_forward.1} parent=5 // pred_fallthru
      _
    %p236 = scmp.le.s32.totalorder 1, %s13
    %p237 = scmp.lt.s32.totalorder %s13, 3
    %p238 = pnand %p236, %p237
    %p239 = pneg %p238
    // Predicated region
    $region45: #{residual_block_forward.1} parent=5 // pred_check
      _
    $region46: #{residual_block_forward.1} parent=5 // pred_check_branch
      %241 = sbr.rel (%p238) target = $region48
    $region47: #{residual_block_forward.1} parent=5 // pred_region
      %s242 = ssub.s32 %s13, 1
      %p243 = scmp.lt.s32.totalorder %s18, 1
      %s244 = scalar_select %p243, %s18, 1
      %s245 = smul.addr %s244, 50
      %s246 = smul.addr %s245, 4
      %s247 = scalar_lea.vmem %s0, %s246
      %p248 = pneg %p39
      %p249 = pneg %p36
      %p250 = pneg %p60
      %p251 = pneg %p57
      %p252 = pneg %p81
      %p253 = pneg %p78
      %p254 = pneg %p102
      %p255 = pneg %p99
      %p256 = pneg %p123
      %p257 = pneg %p120
      %p258 = pneg %p144
      %p259 = pneg %p141
      %p260 = pneg %p165
      %p261 = pneg %p162
      %p262 = pneg %p191
      %p263 = pneg %p188
      %p264 = scmp.lt.s32.totalorder %s18, 1
      %s265 = scalar_select %p264, %s18, 1
      %s266 = smul.addr %s265, 10
      %s267 = smul.addr %s266, 8
      %s268 = scalar_lea.vmem %s7, %s267
      %p269 = scmp.lt.s32.totalorder %s18, 1
      %s270 = scalar_select %p269, %s18, 1
      %s271 = smul.addr %s270, 50
      %s272 = smul.addr %s271, 4
      %s273 = scalar_lea.vmem %s0, %s272
      %p274 = scmp.lt.s32.totalorder %s18, 1
      %s275 = scalar_select %p274, %s18, 1
      %s276 = smul.addr %s275, 10
      %s277 = smul.addr %s276, 8
      %s278 = scalar_lea.vmem %s7, %s277
      %vm280 = vcmask 64512
      %281 = vst.msk [vmem:[#allocation3] sm:$0xff] %vm280, 0.0
      %282 = vst.msk [vmem:[#allocation3 + $0x8] sm:$0xff] %vm280, 0.0
      %283 = vst.msk [vmem:[#allocation3 + $0x10] sm:$0xff] %vm280, 0.0
      %284 = vst.msk [vmem:[#allocation3 + $0x18] sm:$0xff] %vm280, 0.0
      %285 = vst.msk [vmem:[#allocation3 + $0x20] sm:$0xff] %vm280, 0.0
      %286 = vst.msk [vmem:[#allocation3 + $0x28] sm:$0xff] %vm280, 0.0
      %287 = vst.msk [vmem:[#allocation3 + $0x30] sm:$0xff] %vm280, 0.0
      %288 = vst.msk [vmem:[#allocation3 + $0x38] sm:$0xff] %vm280, 0.0
      %289 = vst.msk [vmem:[#allocation3 + $0x40] sm:$0xff] %vm280, 0.0
      %290 = vst.msk [vmem:[#allocation3 + $0x48] sm:$0xff] %vm280, 0.0
      %v291 = vld [vmem:[%s273] sm:$0xf]
      %v292 = vld [vmem:[%s273 + $0x4] sm:$0xf]
      %v293 = vld [vmem:[%s273 + $0x8] sm:$0xf]
      %v294 = vld [vmem:[%s273 + $0xc] sm:$0xf]
      %v295 = vld [vmem:[%s273 + $0x10] sm:$0xf]
      %v296 = vld [vmem:[%s273 + $0x14] sm:$0xf]
      %v297 = vld [vmem:[%s273 + $0x18] sm:$0xf]
      %v298 = vld [vmem:[%s273 + $0x1c] sm:$0xf]
      %v299 = vld [vmem:[%s273 + $0x20] sm:$0xf]
      %v300 = vld [vmem:[%s273 + $0x24] sm:$0xf]
      %v301 = vld [vmem:[#allocation3] sm:$0xff]
      %v302 = vld [vmem:[#allocation3 + $0x8] sm:$0xff]
      %v303 = vld [vmem:[#allocation3 + $0x10] sm:$0xff]
      %v304 = vld [vmem:[#allocation3 + $0x18] sm:$0xff]
      %v305 = vld [vmem:[#allocation3 + $0x20] sm:$0xff]
      %v306 = vld [vmem:[#allocation3 + $0x28] sm:$0xff]
      %v307 = vld [vmem:[#allocation3 + $0x30] sm:$0xff]
      %v308 = vld [vmem:[#allocation3 + $0x38] sm:$0xff]
      %v309 = vld [vmem:[#allocation3 + $0x40] sm:$0xff]
      %v310 = vld [vmem:[#allocation3 + $0x48] sm:$0xff]
      %v311 = vld [vmem:[%s1] sm:$0x3]
      %v322 = vunpack.c.l.b16 %v291
      %v323 = vunpack.c.l.b16 %v292
      %v324 = vunpack.c.l.b16 %v293
      %v325 = vunpack.c.l.b16 %v294
      %v326 = vunpack.c.l.b16 %v295
      %v327 = vunpack.c.l.b16 %v296
      %v328 = vunpack.c.l.b16 %v297
      %v329 = vunpack.c.l.b16 %v298
      %v330 = vunpack.c.l.b16 %v299
      %v331 = vunpack.c.l.b16 %v300
      %v332 = vpack.c.b16 %v323, %v322
      %v333 = vpack.c.b16 %v325, %v324
      %v334 = vpack.c.b16 %v327, %v326
      %v335 = vpack.c.b16 %v329, %v328
      %v336 = vpack.c.b16 %v331, %v330
      %vm337 = vcmask 31744
      %v339 = vsel %vm337, %v332, 0
      %v342 = vsel %vm337, %v333, 0
      %v345 = vsel %vm337, %v334, 0
      %v348 = vsel %vm337, %v335, 0
      %v351 = vsel %vm337, %v336, 0
      %vm353 = vcmask 1041408
      %v355 = vsel %vm353, %v311, 0
      %357 = vmatprep.subr.bf16.mxu0 0
      %358 = vmatpush1.bf16.msra.mxu0 %v355
      %359 = vmatprep.subr.bf16.mxu0 0
      %360 = vmatpush1.bf16.msra.mxu0 0
      %361 = vmatprep.subr.bf16.mxu0 0
      %362 = vmatpush1.bf16.msra.mxu0 0
      %363 = vmatprep.subr.bf16.mxu0 0
      %364 = vmatpush1.bf16.msra.mxu0 0
      %365 = vmatprep.subr.bf16.mxu0 0
      %366 = vmatpush1.bf16.msra.mxu0 0
      %367 = vmatprep.subr.bf16.mxu0 0
      %368 = vmatpush1.bf16.msra.mxu0 0
      %369 = vmatprep.subr.bf16.mxu0 0
      %370 = vmatpush1.bf16.msra.mxu0 0
      %371 = vmatprep.subr.bf16.mxu0 0
      %372 = vmatpush1.bf16.msra.mxu0 0
      %373 = vmatprep.subr.bf16.mxu0 0
      %374 = vmatpush1.bf16.msra.mxu0 0
      %375 = vmatprep.subr.bf16.mxu0 0
      %376 = vmatpush1.bf16.msra.mxu0 0
      %377 = vmatprep.subr.bf16.mxu0 0
      %378 = vmatpush1.bf16.msra.mxu0 0
      %379 = vmatprep.subr.bf16.mxu0 0
      %380 = vmatpush1.bf16.msra.mxu0 0
      %381 = vmatprep.subr.bf16.mxu0 0
      %382 = vmatpush1.bf16.msra.mxu0 0
      %383 = vmatprep.subr.bf16.mxu0 0
      %384 = vmatpush1.bf16.msra.mxu0 0
      %385 = vmatprep.subr.bf16.mxu0 0
      %386 = vmatpush1.bf16.msra.mxu0 0
      %387 = vmatprep.subr.bf16.mxu0 0
      %388 = vmatpush1.bf16.msra.mxu0 0
      %389 = vmatprep.mubr.bf16.mxu0 0
      %390 = vmatmul.mubr.bf16.gmra.mrb[0].mxu0 %v339
      %v391 = vpop.f32.mrb[0].mxu0
      %v392 = vadd.f32 0.0, %v391
      %v393 = vpop.f32.mrb[0].mxu0
      %v394 = vpop.f32.mrb[0].mxu0
      %v395 = vadd.f32 0.0, %v394
      %v396 = vpop.f32.mrb[0].mxu0
      %397 = vmatprep.mubr.bf16.mxu0 0
      %398 = vmatmul.mubr.bf16.gmra.mrb[0].mxu0 %v342
      %v399 = vpop.f32.mrb[0].mxu0
      %v400 = vadd.f32 0.0, %v399
      %v401 = vpop.f32.mrb[0].mxu0
      %v402 = vpop.f32.mrb[0].mxu0
      %v403 = vadd.f32 0.0, %v402
      %v404 = vpop.f32.mrb[0].mxu0
      %405 = vmatprep.mubr.bf16.mxu0 0
      %406 = vmatmul.mubr.bf16.gmra.mrb[0].mxu0 %v345
      %v407 = vpop.f32.mrb[0].mxu0
      %v408 = vadd.f32 0.0, %v407
      %v409 = vpop.f32.mrb[0].mxu0
      %v410 = vpop.f32.mrb[0].mxu0
      %v411 = vadd.f32 0.0, %v410
      %v412 = vpop.f32.mrb[0].mxu0
      %413 = vmatprep.mubr.bf16.mxu0 0
      %414 = vmatmul.mubr.bf16.gmra.mrb[0].mxu0 %v348
      %v415 = vpop.f32.mrb[0].mxu0
      %v416 = vadd.f32 0.0, %v415
      %v417 = vpop.f32.mrb[0].mxu0
      %v418 = vpop.f32.mrb[0].mxu0
      %v419 = vadd.f32 0.0, %v418
      %v420 = vpop.f32.mrb[0].mxu0
      %421 = vmatprep.mubr.bf16.mxu0 0
      %422 = vmatmul.mubr.bf16.gmra.mrb[0].mxu0 %v351
      %v423 = vpop.f32.mrb[0].mxu0
      %v424 = vadd.f32 0.0, %v423
      %v425 = vpop.f32.mrb[0].mxu0
      %v426 = vpop.f32.mrb[0].mxu0
      %v427 = vadd.f32 0.0, %v426
      %v428 = vpop.f32.mrb[0].mxu0
      %429 = vdwg.mxu0
      %v430 = vadd.f32 %v301, %v392
      %v431 = vadd.f32 %v302, %v395
      %v432 = vadd.f32 %v303, %v400
      %v433 = vadd.f32 %v304, %v403
      %v434 = vadd.f32 %v305, %v408
      %v435 = vadd.f32 %v306, %v411
      %v436 = vadd.f32 %v307, %v416
      %v437 = vadd.f32 %v308, %v419
      %v438 = vadd.f32 %v309, %v424
      %v439 = vadd.f32 %v310, %v427
      %440 = vst.msk [vmem:[#allocation3] sm:$0xff] %vm280, %v430
      %441 = vst.msk [vmem:[#allocation3 + $0x8] sm:$0xff] %vm280, %v431
      %442 = vst.msk [vmem:[#allocation3 + $0x10] sm:$0xff] %vm280, %v432
      %443 = vst.msk [vmem:[#allocation3 + $0x18] sm:$0xff] %vm280, %v433
      %444 = vst.msk [vmem:[#allocation3 + $0x20] sm:$0xff] %vm280, %v434
      %445 = vst.msk [vmem:[#allocation3 + $0x28] sm:$0xff] %vm280, %v435
      %446 = vst.msk [vmem:[#allocation3 + $0x30] sm:$0xff] %vm280, %v436
      %447 = vst.msk [vmem:[#allocation3 + $0x38] sm:$0xff] %vm280, %v437
      %448 = vst.msk [vmem:[#allocation3 + $0x40] sm:$0xff] %vm280, %v438
      %449 = vst.msk [vmem:[#allocation3 + $0x48] sm:$0xff] %vm280, %v439
      %v450 = vld [vmem:[%s273 + $0x30] sm:$0xc]
      %v451 = vld [vmem:[%s273 + $0x34] sm:$0xf]
      %v452 = vld [vmem:[%s273 + $0x38] sm:$0xf]
      %v453 = vld [vmem:[%s273 + $0x3c] sm:$0xf]
      %v454 = vld [vmem:[%s273 + $0x40] sm:$0xf]
      %v455 = vld [vmem:[%s273 + $0x44] sm:$0xf]
      %v456 = vld [vmem:[%s273 + $0x48] sm:$0xf]
      %v457 = vld [vmem:[%s273 + $0x4c] sm:$0xf]
      %v458 = vld [vmem:[%s273 + $0x50] sm:$0xf]
      %v459 = vld [vmem:[%s273 + $0x54] sm:$0xf]
      %v460 = vld [vmem:[%s273 + $0x58] sm:$0x3]
      %v461 = vld [vmem:[#allocation3] sm:$0xff]
      %v462 = vld [vmem:[#allocation3 + $0x8] sm:$0xff]
      %v463 = vld [vmem:[#allocation3 + $0x10] sm:$0xff]
      %v464 = vld [vmem:[#allocation3 + $0x18] sm:$0xff]
      %v465 = vld [vmem:[#allocation3 + $0x20] sm:$0xff]
      %v466 = vld [vmem:[#allocation3 + $0x28] sm:$0xff]
      %v467 = vld [vmem:[#allocation3 + $0x30] sm:$0xff]
      %v468 = vld [vmem:[#allocation3 + $0x38] sm:$0xff]
      %v469 = vld [vmem:[#allocation3 + $0x40] sm:$0xff]
      %v470 = vld [vmem:[#allocation3 + $0x48] sm:$0xff]
      %s471 = scalar_lea.vmem %s1, 2
      %v472 = vld [vmem:[%s471] sm:$0x3]
      %v484 = vunpack.c.l.b16 %v450
      %v485 = vunpack.c.l.b16 %v451
      %v486 = vunpack.c.l.b16 %v452
      %v487 = vunpack.c.l.b16 %v453
      %v488 = vunpack.c.l.b16 %v454
      %v489 = vunpack.c.l.b16 %v455
      %v490 = vunpack.c.l.b16 %v456
      %v491 = vunpack.c.l.b16 %v457
      %v492 = vunpack.c.l.b16 %v458
      %v493 = vunpack.c.l.b16 %v459
      %v494 = vunpack.c.l.b16 %v460
      %v495 = vpack.c.b16 %v485, %v484
      %v496 = vpack.c.b16 %v487, %v486
      %v497 = vpack.c.b16 %v489, %v488
      %v498 = vpack.c.b16 %v491, %v490
      %v499 = vpack.c.b16 %v493, %v492
      %v500 = vpack.c.b16 %v494, %v494
      %vm501 = vcmask 1045504
      %v502 = vrot.slane %v495, 2
      %v503 = vrot.slane %v496, 2
      %v504 = vsel %vm501, %v502, %v503
      %v505 = vrot.slane %v497, 2
      %v506 = vsel %vm501, %v503, %v505
      %v507 = vrot.slane %v498, 2
      %v508 = vsel %vm501, %v505, %v507
      %v509 = vrot.slane %v499, 2
      %v510 = vsel %vm501, %v507, %v509
      %v511 = vrot.slane %v500, 2
      %v512 = vsel %vm501, %v509, %v511
      %v514 = vsel %vm337, %v504, 0
      %v517 = vsel %vm337, %v506, 0
      %v520 = vsel %vm337, %v508, 0
      %v523 = vsel %vm337, %v510, 0
      %v526 = vsel %vm337, %v512, 0
      %v529 = vsel %vm353, %v472, 0
      %531 = vmatprep.subr.bf16.mxu0 0
      %532 = vmatpush1.bf16.msra.mxu0 %v529
      %533 = vmatprep.subr.bf16.mxu0 0
      %534 = vmatpush1.bf16.msra.mxu0 0
      %535 = vmatprep.subr.bf16.mxu0 0
      %536 = vmatpush1.bf16.msra.mxu0 0
      %537 = vmatprep.subr.bf16.mxu0 0
      %538 = vmatpush1.bf16.msra.mxu0 0
      %539 = vmatprep.subr.bf16.mxu0 0
      %540 = vmatpush1.bf16.msra.mxu0 0
      %541 = vmatprep.subr.bf16.mxu0 0
      %542 = vmatpush1.bf16.msra.mxu0 0
      %543 = vmatprep.subr.bf16.mxu0 0
      %544 = vmatpush1.bf16.msra.mxu0 0
      %545 = vmatprep.subr.bf16.mxu0 0
      %546 = vmatpush1.bf16.msra.mxu0 0
      %547 = vmatprep.subr.bf16.mxu0 0
      %548 = vmatpush1.bf16.msra.mxu0 0
      %549 = vmatprep.subr.bf16.mxu0 0
      %550 = vmatpush1.bf16.msra.mxu0 0
      %551 = vmatprep.subr.bf16.mxu0 0
      %552 = vmatpush1.bf16.msra.mxu0 0
      %553 = vmatprep.subr.bf16.mxu0 0
      %554 = vmatpush1.bf16.msra.mxu0 0
      %555 = vmatprep.subr.bf16.mxu0 0
      %556 = vmatpush1.bf16.msra.mxu0 0
      %557 = vmatprep.subr.bf16.mxu0 0
      %558 = vmatpush1.bf16.msra.mxu0 0
      %559 = vmatprep.subr.bf16.mxu0 0
      %560 = vmatpush1.bf16.msra.mxu0 0
      %561 = vmatprep.subr.bf16.mxu0 0
      %562 = vmatpush1.bf16.msra.mxu0 0
      %563 = vmatprep.mubr.bf16.mxu0 0
      %564 = vmatmul.mubr.bf16.gmra.mrb[0].mxu0 %v514
      %v565 = vpop.f32.mrb[0].mxu0
      %v566 = vadd.f32 0.0, %v565
      %v567 = vpop.f32.mrb[0].mxu0
      %v568 = vpop.f32.mrb[0].mxu0
      %v569 = vadd.f32 0.0, %v568
      %v570 = vpop.f32.mrb[0].mxu0
      %571 = vmatprep.mubr.bf16.mxu0 0
      %572 = vmatmul.mubr.bf16.gmra.mrb[0].mxu0 %v517
      %v573 = vpop.f32.mrb[0].mxu0
      %v574 = vadd.f32 0.0, %v573
      %v575 = vpop.f32.mrb[0].mxu0
      %v576 = vpop.f32.mrb[0].mxu0
      %v577 = vadd.f32 0.0, %v576
      %v578 = vpop.f32.mrb[0].mxu0
      %579 = vmatprep.mubr.bf16.mxu0 0
      %580 = vmatmul.mubr.bf16.gmra.mrb[0].mxu0 %v520
      %v581 = vpop.f32.mrb[0].mxu0
      %v582 = vadd.f32 0.0, %v581
      %v583 = vpop.f32.mrb[0].mxu0
      %v584 = vpop.f32.mrb[0].mxu0
      %v585 = vadd.f32 0.0, %v584
      %v586 = vpop.f32.mrb[0].mxu0
      %587 = vmatprep.mubr.bf16.mxu0 0
      %588 = vmatmul.mubr.bf16.gmra.mrb[0].mxu0 %v523
      %v589 = vpop.f32.mrb[0].mxu0
      %v590 = vadd.f32 0.0, %v589
      %v591 = vpop.f32.mrb[0].mxu0
      %v592 = vpop.f32.mrb[0].mxu0
      %v593 = vadd.f32 0.0, %v592
      %v594 = vpop.f32.mrb[0].mxu0
      %595 = vmatprep.mubr.bf16.mxu0 0
      %596 = vmatmul.mubr.bf16.gmra.mrb[0].mxu0 %v526
      %v597 = vpop.f32.mrb[0].mxu0
      %v598 = vadd.f32 0.0, %v597
      %v599 = vpop.f32.mrb[0].mxu0
      %v600 = vpop.f32.mrb[0].mxu0
      %v601 = vadd.f32 0.0, %v600
      %v602 = vpop.f32.mrb[0].mxu0
      %603 = vdwg.mxu0
      %v604 = vadd.f32 %v461, %v566
      %v605 = vadd.f32 %v462, %v569
      %v606 = vadd.f32 %v463, %v574
      %v607 = vadd.f32 %v464, %v577
      %v608 = vadd.f32 %v465, %v582
      %v609 = vadd.f32 %v466, %v585
      %v610 = vadd.f32 %v467, %v590
      %v611 = vadd.f32 %v468, %v593
      %v612 = vadd.f32 %v469, %v598
      %v613 = vadd.f32 %v470, %v601
      %614 = vst.msk [vmem:[#allocation3] sm:$0xff] %vm280, %v604
      %615 = vst.msk [vmem:[#allocation3 + $0x8] sm:$0xff] %vm280, %v605
      %616 = vst.msk [vmem:[#allocation3 + $0x10] sm:$0xff] %vm280, %v606
      %617 = vst.msk [vmem:[#allocation3 + $0x18] sm:$0xff] %vm280, %v607
      %618 = vst.msk [vmem:[#allocation3 + $0x20] sm:$0xff] %vm280, %v608
      %619 = vst.msk [vmem:[#allocation3 + $0x28] sm:$0xff] %vm280, %v609
      %620 = vst.msk [vmem:[#allocation3 + $0x30] sm:$0xff] %vm280, %v610
      %621 = vst.msk [vmem:[#allocation3 + $0x38] sm:$0xff] %vm280, %v611
      %622 = vst.msk [vmem:[#allocation3 + $0x40] sm:$0xff] %vm280, %v612
      %623 = vst.msk [vmem:[#allocation3 + $0x48] sm:$0xff] %vm280, %v613
      %v624 = vld [vmem:[%s273] sm:$0xf]
      %v625 = vld [vmem:[%s273 + $0x4] sm:$0xf]
      %v626 = vld [vmem:[%s273 + $0x8] sm:$0xf]
      %v627 = vld [vmem:[%s273 + $0xc] sm:$0xf]
      %v628 = vld [vmem:[%s273 + $0x10] sm:$0xf]
      %v629 = vld [vmem:[%s273 + $0x14] sm:$0xf]
      %v630 = vld [vmem:[%s273 + $0x18] sm:$0xf]
      %v631 = vld [vmem:[%s273 + $0x1c] sm:$0xf]
      %v632 = vld [vmem:[%s273 + $0x20] sm:$0xf]
      %v633 = vld [vmem:[%s273 + $0x24] sm:$0xf]
      %v634 = vld [vmem:[%s273 + $0x28] sm:$0x1]
      %v635 = vld [vmem:[#allocation3] sm:$0xff]
      %v636 = vld [vmem:[#allocation3 + $0x8] sm:$0xff]
      %v637 = vld [vmem:[#allocation3 + $0x10] sm:$0xff]
      %v638 = vld [vmem:[#allocation3 + $0x18] sm:$0xff]
      %v639 = vld [vmem:[#allocation3 + $0x20] sm:$0xff]
      %v640 = vld [vmem:[#allocation3 + $0x28] sm:$0xff]
      %v641 = vld [vmem:[#allocation3 + $0x30] sm:$0xff]
      %v642 = vld [vmem:[#allocation3 + $0x38] sm:$0xff]
      %v643 = vld [vmem:[#allocation3 + $0x40] sm:$0xff]
      %v644 = vld [vmem:[#allocation3 + $0x48] sm:$0xff]
      %s645 = scalar_lea.vmem %s1, 4
      %v646 = vld [vmem:[%s645] sm:$0x3]
      %v658 = vunpack.c.l.b16 %v624
      %v659 = vunpack.c.l.b16 %v625
      %v660 = vunpack.c.l.b16 %v626
      %v661 = vunpack.c.l.b16 %v627
      %v662 = vunpack.c.l.b16 %v628
      %v663 = vunpack.c.l.b16 %v629
      %v664 = vunpack.c.l.b16 %v630
      %v665 = vunpack.c.l.b16 %v631
      %v666 = vunpack.c.l.b16 %v632
      %v667 = vunpack.c.l.b16 %v633
      %v668 = vunpack.c.l.b16 %v634
      %v669 = vpack.c.b16 %v659, %v658
      %v670 = vpack.c.b16 %v661, %v660
      %v671 = vpack.c.b16 %v663, %v662
      %v672 = vpack.c.b16 %v665, %v664
      %v673 = vpack.c.b16 %v667, %v666
      %v674 = vpack.c.b16 %v668, %v668
      %vm675 = vsmask.f32 7424
      %v677 = vshrl.u32 %v669, 16
      %v679 = vshll.u32 %v669, 16
      %v681 = vrot.slane %v679, 1
      %v682 = vor.u32 %v677, %v681
      %v684 = vshll.u32 %v670, 16
      %v686 = vrot.slane %v684, 1
      %v687 = vsel %vm675, %v682, %v686
      %v688 = vshrl.u32 %v670, 16
      %v690 = vor.u32 %v688, %v686
      %v692 = vshll.u32 %v671, 16
      %v694 = vrot.slane %v692, 1
      %v695 = vsel %vm675, %v690, %v694
      %v696 = vshrl.u32 %v671, 16
      %v698 = vor.u32 %v696, %v694
      %v700 = vshll.u32 %v672, 16
      %v702 = vrot.slane %v700, 1
      %v703 = vsel %vm675, %v698, %v702
      %v704 = vshrl.u32 %v672, 16
      %v706 = vor.u32 %v704, %v702
      %v708 = vshll.u32 %v673, 16
      %v710 = vrot.slane %v708, 1
      %v711 = vsel %vm675, %v706, %v710
      %v712 = vshrl.u32 %v673, 16
      %v714 = vor.u32 %v712, %v710
      %v716 = vshll.u32 %v674, 16
      %v718 = vrot.slane %v716, 1
      %v719 = vsel %vm675, %v714, %v718
      %v721 = vsel %vm337, %v687, 0
      %v724 = vsel %vm337, %v695, 0
      %v727 = vsel %vm337, %v703, 0
      %v730 = vsel %vm337, %v711, 0
      %v733 = vsel %vm337, %v719, 0
      %v736 = vsel %vm353, %v646, 0
      %738 = vmatprep.subr.bf16.mxu0 0
      %739 = vmatpush1.bf16.msra.mxu0 %v736
      %740 = vmatprep.subr.bf16.mxu0 0
      %741 = vmatpush1.bf16.msra.mxu0 0
      %742 = vmatprep.subr.bf16.mxu0 0
      %743 = vmatpush1.bf16.msra.mxu0 0
      %744 = vmatprep.subr.bf16.mxu0 0
      %745 = vmatpush1.bf16.msra.mxu0 0
      %746 = vmatprep.subr.bf16.mxu0 0
      %747 = vmatpush1.bf16.msra.mxu0 0
      %748 = vmatprep.subr.bf16.mxu0 0
      %749 = vmatpush1.bf16.msra.mxu0 0
      %750 = vmatprep.subr.bf16.mxu0 0
      %751 = vmatpush1.bf16.msra.mxu0 0
      %752 = vmatprep.subr.bf16.mxu0 0
      %753 = vmatpush1.bf16.msra.mxu0 0
      %754 = vmatprep.subr.bf16.mxu0 0
      %755 = vmatpush1.bf16.msra.mxu0 0
      %756 = vmatprep.subr.bf16.mxu0 0
      %757 = vmatpush1.bf16.msra.mxu0 0
      %758 = vmatprep.subr.bf16.mxu0 0
      %759 = vmatpush1.bf16.msra.mxu0 0
      %760 = vmatprep.subr.bf16.mxu0 0
      %761 = vmatpush1.bf16.msra.mxu0 0
      %762 = vmatprep.subr.bf16.mxu0 0
      %763 = vmatpush1.bf16.msra.mxu0 0
      %764 = vmatprep.subr.bf16.mxu0 0
      %765 = vmatpush1.bf16.msra.mxu0 0
      %766 = vmatprep.subr.bf16.mxu0 0
      %767 = vmatpush1.bf16.msra.mxu0 0
      %768 = vmatprep.subr.bf16.mxu0 0
      %769 = vmatpush1.bf16.msra.mxu0 0
      %770 = vmatprep.mubr.bf16.mxu0 0
      %771 = vmatmul.mubr.bf16.gmra.mrb[0].mxu0 %v721
      %v772 = vpop.f32.mrb[0].mxu0
      %v773 = vadd.f32 0.0, %v772
      %v774 = vpop.f32.mrb[0].mxu0
      %v775 = vpop.f32.mrb[0].mxu0
      %v776 = vadd.f32 0.0, %v775
      %v777 = vpop.f32.mrb[0].mxu0
      %778 = vmatprep.mubr.bf16.mxu0 0
      %779 = vmatmul.mubr.bf16.gmra.mrb[0].mxu0 %v724
      %v780 = vpop.f32.mrb[0].mxu0
      %v781 = vadd.f32 0.0, %v780
      %v782 = vpop.f32.mrb[0].mxu0
      %v783 = vpop.f32.mrb[0].mxu0
      %v784 = vadd.f32 0.0, %v783
      %v785 = vpop.f32.mrb[0].mxu0
      %786 = vmatprep.mubr.bf16.mxu0 0
      %787 = vmatmul.mubr.bf16.gmra.mrb[0].mxu0 %v727
      %v788 = vpop.f32.mrb[0].mxu0
      %v789 = vadd.f32 0.0, %v788
      %v790 = vpop.f32.mrb[0].mxu0
      %v791 = vpop.f32.mrb[0].mxu0
      %v792 = vadd.f32 0.0, %v791
      %v793 = vpop.f32.mrb[0].mxu0
      %794 = vmatprep.mubr.bf16.mxu0 0
      %795 = vmatmul.mubr.bf16.gmra.mrb[0].mxu0 %v730
      %v796 = vpop.f32.mrb[0].mxu0
      %v797 = vadd.f32 0.0, %v796
      %v798 = vpop.f32.mrb[0].mxu0
      %v799 = vpop.f32.mrb[0].mxu0
      %v800 = vadd.f32 0.0, %v799
      %v801 = vpop.f32.mrb[0].mxu0
      %802 = vmatprep.mubr.bf16.mxu0 0
      %803 = vmatmul.mubr.bf16.gmra.mrb[0].mxu0 %v733
      %v804 = vpop.f32.mrb[0].mxu0
      %v805 = vadd.f32 0.0, %v804
      %v806 = vpop.f32.mrb[0].mxu0
      %v807 = vpop.f32.mrb[0].mxu0
      %v808 = vadd.f32 0.0, %v807
      %v809 = vpop.f32.mrb[0].mxu0
      %810 = vdwg.mxu0
      %v811 = vadd.f32 %v635, %v773
      %v812 = vadd.f32 %v636, %v776
      %v813 = vadd.f32 %v637, %v781
      %v814 = vadd.f32 %v638, %v784
      %v815 = vadd.f32 %v639, %v789
      %v816 = vadd.f32 %v640, %v792
      %v817 = vadd.f32 %v641, %v797
      %v818 = vadd.f32 %v642, %v800
      %v819 = vadd.f32 %v643, %v805
      %v820 = vadd.f32 %v644, %v808
      %821 = vst.msk [vmem:[#allocation3] sm:$0xff] %vm280, %v811
      %822 = vst.msk [vmem:[#allocation3 + $0x8] sm:$0xff] %vm280, %v812
      %823 = vst.msk [vmem:[#allocation3 + $0x10] sm:$0xff] %vm280, %v813
      %824 = vst.msk [vmem:[#allocation3 + $0x18] sm:$0xff] %vm280, %v814
      %825 = vst.msk [vmem:[#allocation3 + $0x20] sm:$0xff] %vm280, %v815
      %826 = vst.msk [vmem:[#allocation3 + $0x28] sm:$0xff] %vm280, %v816
      %827 = vst.msk [vmem:[#allocation3 + $0x30] sm:$0xff] %vm280, %v817
      %828 = vst.msk [vmem:[#allocation3 + $0x38] sm:$0xff] %vm280, %v818
      %829 = vst.msk [vmem:[#allocation3 + $0x40] sm:$0xff] %vm280, %v819
      %830 = vst.msk [vmem:[#allocation3 + $0x48] sm:$0xff] %vm280, %v820
      %v831 = vld [vmem:[%s273 + $0x64] sm:$0xf]
      %v832 = vld [vmem:[%s273 + $0x68] sm:$0xf]
      %v833 = vld [vmem:[%s273 + $0x6c] sm:$0xf]
      %v834 = vld [vmem:[%s273 + $0x70] sm:$0xf]
      %v835 = vld [vmem:[%s273 + $0x74] sm:$0xf]
      %v836 = vld [vmem:[%s273 + $0x78] sm:$0xf]
      %v837 = vld [vmem:[%s273 + $0x7c] sm:$0xf]
      %v838 = vld [vmem:[%s273 + $0x80] sm:$0xf]
      %v839 = vld [vmem:[%s273 + $0x84] sm:$0xf]
      %v840 = vld [vmem:[%s273 + $0x88] sm:$0xf]
      %v841 = vld [vmem:[#allocation3] sm:$0xff]
      %v842 = vld [vmem:[#allocation3 + $0x8] sm:$0xff]
      %v843 = vld [vmem:[#allocation3 + $0x10] sm:$0xff]
      %v844 = vld [vmem:[#allocation3 + $0x18] sm:$0xff]
      %v845 = vld [vmem:[#allocation3 + $0x20] sm:$0xff]
      %v846 = vld [vmem:[#allocation3 + $0x28] sm:$0xff]
      %v847 = vld [vmem:[#allocation3 + $0x30] sm:$0xff]
      %v848 = vld [vmem:[#allocation3 + $0x38] sm:$0xff]
      %v849 = vld [vmem:[#allocation3 + $0x40] sm:$0xff]
      %v850 = vld [vmem:[#allocation3 + $0x48] sm:$0xff]
      %s851 = scalar_lea.vmem %s1, 6
      %v852 = vld [vmem:[%s851] sm:$0x3]
      %v863 = vunpack.c.l.b16 %v831
      %v864 = vunpack.c.l.b16 %v832
      %v865 = vunpack.c.l.b16 %v833
      %v866 = vunpack.c.l.b16 %v834
      %v867 = vunpack.c.l.b16 %v835
      %v868 = vunpack.c.l.b16 %v836
      %v869 = vunpack.c.l.b16 %v837
      %v870 = vunpack.c.l.b16 %v838
      %v871 = vunpack.c.l.b16 %v839
      %v872 = vunpack.c.l.b16 %v840
      %v873 = vpack.c.b16 %v864, %v863
      %v874 = vpack.c.b16 %v866, %v865
      %v875 = vpack.c.b16 %v868, %v867
      %v876 = vpack.c.b16 %v870, %v869
      %v877 = vpack.c.b16 %v872, %v871
      %v879 = vsel %vm337, %v873, 0
      %v882 = vsel %vm337, %v874, 0
      %v885 = vsel %vm337, %v875, 0
      %v888 = vsel %vm337, %v876, 0
      %v891 = vsel %vm337, %v877, 0
      %v894 = vsel %vm353, %v852, 0
      %896 = vmatprep.subr.bf16.mxu0 0
      %897 = vmatpush1.bf16.msra.mxu0 %v894
      %898 = vmatprep.subr.bf16.mxu0 0
      %899 = vmatpush1.bf16.msra.mxu0 0
      %900 = vmatprep.subr.bf16.mxu0 0
      %901 = vmatpush1.bf16.msra.mxu0 0
      %902 = vmatprep.subr.bf16.mxu0 0
      %903 = vmatpush1.bf16.msra.mxu0 0
      %904 = vmatprep.subr.bf16.mxu0 0
      %905 = vmatpush1.bf16.msra.mxu0 0
      %906 = vmatprep.subr.bf16.mxu0 0
      %907 = vmatpush1.bf16.msra.mxu0 0
      %908 = vmatprep.subr.bf16.mxu0 0
      %909 = vmatpush1.bf16.msra.mxu0 0
      %910 = vmatprep.subr.bf16.mxu0 0
      %911 = vmatpush1.bf16.msra.mxu0 0
      %912 = vmatprep.subr.bf16.mxu0 0
      %913 = vmatpush1.bf16.msra.mxu0 0
      %914 = vmatprep.subr.bf16.mxu0 0
      %915 = vmatpush1.bf16.msra.mxu0 0
      %916 = vmatprep.subr.bf16.mxu0 0
      %917 = vmatpush1.bf16.msra.mxu0 0
      %918 = vmatprep.subr.bf16.mxu0 0
      %919 = vmatpush1.bf16.msra.mxu0 0
      %920 = vmatprep.subr.bf16.mxu0 0
      %921 = vmatpush1.bf16.msra.mxu0 0
      %922 = vmatprep.subr.bf16.mxu0 0
      %923 = vmatpush1.bf16.msra.mxu0 0
      %924 = vmatprep.subr.bf16.mxu0 0
      %925 = vmatpush1.bf16.msra.mxu0 0
      %926 = vmatprep.subr.bf16.mxu0 0
      %927 = vmatpush1.bf16.msra.mxu0 0
      %928 = vmatprep.mubr.bf16.mxu0 0
      %929 = vmatmul.mubr.bf16.gmra.mrb[0].mxu0 %v879
      %v930 = vpop.f32.mrb[0].mxu0
      %v931 = vadd.f32 0.0, %v930
      %v932 = vpop.f32.mrb[0].mxu0
      %v933 = vpop.f32.mrb[0].mxu0
      %v934 = vadd.f32 0.0, %v933
      %v935 = vpop.f32.mrb[0].mxu0
      %936 = vmatprep.mubr.bf16.mxu0 0
      %937 = vmatmul.mubr.bf16.gmra.mrb[0].mxu0 %v882
      %v938 = vpop.f32.mrb[0].mxu0
      %v939 = vadd.f32 0.0, %v938
      %v940 = vpop.f32.mrb[0].mxu0
      %v941 = vpop.f32.mrb[0].mxu0
      %v942 = vadd.f32 0.0, %v941
      %v943 = vpop.f32.mrb[0].mxu0
      %944 = vmatprep.mubr.bf16.mxu0 0
      %945 = vmatmul.mubr.bf16.gmra.mrb[0].mxu0 %v885
      %v946 = vpop.f32.mrb[0].mxu0
      %v947 = vadd.f32 0.0, %v946
      %v948 = vpop.f32.mrb[0].mxu0
      %v949 = vpop.f32.mrb[0].mxu0
      %v950 = vadd.f32 0.0, %v949
      %v951 = vpop.f32.mrb[0].mxu0
      %952 = vmatprep.mubr.bf16.mxu0 0
      %953 = vmatmul.mubr.bf16.gmra.mrb[0].mxu0 %v888
      %v954 = vpop.f32.mrb[0].mxu0
      %v955 = vadd.f32 0.0, %v954
      %v956 = vpop.f32.mrb[0].mxu0
      %v957 = vpop.f32.mrb[0].mxu0
      %v958 = vadd.f32 0.0, %v957
      %v959 = vpop.f32.mrb[0].mxu0
      %960 = vmatprep.mubr.bf16.mxu0 0
      %961 = vmatmul.mubr.bf16.gmra.mrb[0].mxu0 %v891
      %v962 = vpop.f32.mrb[0].mxu0
      %v963 = vadd.f32 0.0, %v962
      %v964 = vpop.f32.mrb[0].mxu0
      %v965 = vpop.f32.mrb[0].mxu0
      %v966 = vadd.f32 0.0, %v965
      %v967 = vpop.f32.mrb[0].mxu0
      %968 = vdwg.mxu0
      %v969 = vadd.f32 %v841, %v931
      %v970 = vadd.f32 %v842, %v934
      %v971 = vadd.f32 %v843, %v939
      %v972 = vadd.f32 %v844, %v942
      %v973 = vadd.f32 %v845, %v947
      %v974 = vadd.f32 %v846, %v950
      %v975 = vadd.f32 %v847, %v955
      %v976 = vadd.f32 %v848, %v958
      %v977 = vadd.f32 %v849, %v963
      %v978 = vadd.f32 %v850, %v966
      %979 = vst.msk [vmem:[#allocation3] sm:$0xff] %vm280, %v969
      %980 = vst.msk [vmem:[#allocation3 + $0x8] sm:$0xff] %vm280, %v970
      %981 = vst.msk [vmem:[#allocation3 + $0x10] sm:$0xff] %vm280, %v971
      %982 = vst.msk [vmem:[#allocation3 + $0x18] sm:$0xff] %vm280, %v972
      %983 = vst.msk [vmem:[#allocation3 + $0x20] sm:$0xff] %vm280, %v973
      %984 = vst.msk [vmem:[#allocation3 + $0x28] sm:$0xff] %vm280, %v974
      %985 = vst.msk [vmem:[#allocation3 + $0x30] sm:$0xff] %vm280, %v975
      %986 = vst.msk [vmem:[#allocation3 + $0x38] sm:$0xff] %vm280, %v976
      %987 = vst.msk [vmem:[#allocation3 + $0x40] sm:$0xff] %vm280, %v977
      %988 = vst.msk [vmem:[#allocation3 + $0x48] sm:$0xff] %vm280, %v978
      %v989 = vld [vmem:[%s273 + $0x94] sm:$0xc]
      %v990 = vld [vmem:[%s273 + $0x98] sm:$0xf]
      %v991 = vld [vmem:[%s273 + $0x9c] sm:$0xf]
      %v992 = vld [vmem:[%s273 + $0xa0] sm:$0xf]
      %v993 = vld [vmem:[%s273 + $0xa4] sm:$0xf]
      %v994 = vld [vmem:[%s273 + $0xa8] sm:$0xf]
      %v995 = vld [vmem:[%s273 + $0xac] sm:$0xf]
      %v996 = vld [vmem:[%s273 + $0xb0] sm:$0xf]
      %v997 = vld [vmem:[%s273 + $0xb4] sm:$0xf]
      %v998 = vld [vmem:[%s273 + $0xb8] sm:$0xf]
      %v999 = vld [vmem:[%s273 + $0xbc] sm:$0x3]
      %v1000 = vld [vmem:[#allocation3] sm:$0xff]
      %v1001 = vld [vmem:[#allocation3 + $0x8] sm:$0xff]
      %v1002 = vld [vmem:[#allocation3 + $0x10] sm:$0xff]
      %v1003 = vld [vmem:[#allocation3 + $0x18] sm:$0xff]
      %v1004 = vld [vmem:[#allocation3 + $0x20] sm:$0xff]
      %v1005 = vld [vmem:[#allocation3 + $0x28] sm:$0xff]
      %v1006 = vld [vmem:[#allocation3 + $0x30] sm:$0xff]
      %v1007 = vld [vmem:[#allocation3 + $0x38] sm:$0xff]
      %v1008 = vld [vmem:[#allocation3 + $0x40] sm:$0xff]
      %v1009 = vld [vmem:[#allocation3 + $0x48] sm:$0xff]
      %s1010 = scalar_lea.vmem %s1, 8
      %v1011 = vld [vmem:[%s1010] sm:$0x3]
      %v1023 = vunpack.c.l.b16 %v989
      %v1024 = vunpack.c.l.b16 %v990
      %v1025 = vunpack.c.l.b16 %v991
      %v1026 = vunpack.c.l.b16 %v992
      %v1027 = vunpack.c.l.b16 %v993
      %v1028 = vunpack.c.l.b16 %v994
      %v1029 = vunpack.c.l.b16 %v995
      %v1030 = vunpack.c.l.b16 %v996
      %v1031 = vunpack.c.l.b16 %v997
      %v1032 = vunpack.c.l.b16 %v998
      %v1033 = vunpack.c.l.b16 %v999
      %v1034 = vpack.c.b16 %v1024, %v1023
      %v1035 = vpack.c.b16 %v1026, %v1025
      %v1036 = vpack.c.b16 %v1028, %v1027
      %v1037 = vpack.c.b16 %v1030, %v1029
      %v1038 = vpack.c.b16 %v1032, %v1031
      %v1039 = vpack.c.b16 %v1033, %v1033
      %v1040 = vrot.slane %v1034, 2
      %v1041 = vrot.slane %v1035, 2
      %v1042 = vsel %vm501, %v1040, %v1041
      %v1043 = vrot.slane %v1036, 2
      %v1044 = vsel %vm501, %v1041, %v1043
      %v1045 = vrot.slane %v1037, 2
      %v1046 = vsel %vm501, %v1043, %v1045
      %v1047 = vrot.slane %v1038, 2
      %v1048 = vsel %vm501, %v1045, %v1047
      %v1049 = vrot.slane %v1039, 2
      %v1050 = vsel %vm501, %v1047, %v1049
      %v1052 = vsel %vm337, %v1042, 0
      %v1055 = vsel %vm337, %v1044, 0
      %v1058 = vsel %vm337, %v1046, 0
      %v1061 = vsel %vm337, %v1048, 0
      %v1064 = vsel %vm337, %v1050, 0
      %v1067 = vsel %vm353, %v1011, 0
      %1069 = vmatprep.subr.bf16.mxu0 0
      %1070 = vmatpush1.bf16.msra.mxu0 %v1067
      %1071 = vmatprep.subr.bf16.mxu0 0
      %1072 = vmatpush1.bf16.msra.mxu0 0
      %1073 = vmatprep.subr.bf16.mxu0 0
      %1074 = vmatpush1.bf16.msra.mxu0 0
      %1075 = vmatprep.subr.bf16.mxu0 0
      %1076 = vmatpush1.bf16.msra.mxu0 0
      %1077 = vmatprep.subr.bf16.mxu0 0
      %1078 = vmatpush1.bf16.msra.mxu0 0
      %1079 = vmatprep.subr.bf16.mxu0 0
      %1080 = vmatpush1.bf16.msra.mxu0 0
      %1081 = vmatprep.subr.bf16.mxu0 0
      %1082 = vmatpush1.bf16.msra.mxu0 0
      %1083 = vmatprep.subr.bf16.mxu0 0
      %1084 = vmatpush1.bf16.msra.mxu0 0
      %1085 = vmatprep.subr.bf16.mxu0 0
      %1086 = vmatpush1.bf16.msra.mxu0 0
      %1087 = vmatprep.subr.bf16.mxu0 0
      %1088 = vmatpush1.bf16.msra.mxu0 0
      %1089 = vmatprep.subr.bf16.mxu0 0
      %1090 = vmatpush1.bf16.msra.mxu0 0
      %1091 = vmatprep.subr.bf16.mxu0 0
      %1092 = vmatpush1.bf16.msra.mxu0 0
      %1093 = vmatprep.subr.bf16.mxu0 0
      %1094 = vmatpush1.bf16.msra.mxu0 0
      %1095 = vmatprep.subr.bf16.mxu0 0
      %1096 = vmatpush1.bf16.msra.mxu0 0
      %1097 = vmatprep.subr.bf16.mxu0 0
      %1098 = vmatpush1.bf16.msra.mxu0 0
      %1099 = vmatprep.subr.bf16.mxu0 0
      %1100 = vmatpush1.bf16.msra.mxu0 0
      %1101 = vmatprep.mubr.bf16.mxu0 0
      %1102 = vmatmul.mubr.bf16.gmra.mrb[0].mxu0 %v1052
      %v1103 = vpop.f32.mrb[0].mxu0
      %v1104 = vadd.f32 0.0, %v1103
      %v1105 = vpop.f32.mrb[0].mxu0
      %v1106 = vpop.f32.mrb[0].mxu0
      %v1107 = vadd.f32 0.0, %v1106
      %v1108 = vpop.f32.mrb[0].mxu0
      %1109 = vmatprep.mubr.bf16.mxu0 0
      %1110 = vmatmul.mubr.bf16.gmra.mrb[0].mxu0 %v1055
      %v1111 = vpop.f32.mrb[0].mxu0
      %v1112 = vadd.f32 0.0, %v1111
      %v1113 = vpop.f32.mrb[0].mxu0
      %v1114 = vpop.f32.mrb[0].mxu0
      %v1115 = vadd.f32 0.0, %v1114
      %v1116 = vpop.f32.mrb[0].mxu0
      %1117 = vmatprep.mubr.bf16.mxu0 0
      %1118 = vmatmul.mubr.bf16.gmra.mrb[0].mxu0 %v1058
      %v1119 = vpop.f32.mrb[0].mxu0
      %v1120 = vadd.f32 0.0, %v1119
      %v1121 = vpop.f32.mrb[0].mxu0
      %v1122 = vpop.f32.mrb[0].mxu0
      %v1123 = vadd.f32 0.0, %v1122
      %v1124 = vpop.f32.mrb[0].mxu0
      %1125 = vmatprep.mubr.bf16.mxu0 0
      %1126 = vmatmul.mubr.bf16.gmra.mrb[0].mxu0 %v1061
      %v1127 = vpop.f32.mrb[0].mxu0
      %v1128 = vadd.f32 0.0, %v1127
      %v1129 = vpop.f32.mrb[0].mxu0
      %v1130 = vpop.f32.mrb[0].mxu0
      %v1131 = vadd.f32 0.0, %v1130
      %v1132 = vpop.f32.mrb[0].mxu0
      %1133 = vmatprep.mubr.bf16.mxu0 0
      %1134 = vmatmul.mubr.bf16.gmra.mrb[0].mxu0 %v1064
      %v1135 = vpop.f32.mrb[0].mxu0
      %v1136 = vadd.f32 0.0, %v1135
      %v1137 = vpop.f32.mrb[0].mxu0
      %v1138 = vpop.f32.mrb[0].mxu0
      %v1139 = vadd.f32 0.0, %v1138
      %v1140 = vpop.f32.mrb[0].mxu0
      %1141 = vdwg.mxu0
      %v1142 = vadd.f32 %v1000, %v1104
      %v1143 = vadd.f32 %v1001, %v1107
      %v1144 = vadd.f32 %v1002, %v1112
      %v1145 = vadd.f32 %v1003, %v1115
      %v1146 = vadd.f32 %v1004, %v1120
      %v1147 = vadd.f32 %v1005, %v1123
      %v1148 = vadd.f32 %v1006, %v1128
      %v1149 = vadd.f32 %v1007, %v1131
      %v1150 = vadd.f32 %v1008, %v1136
      %v1151 = vadd.f32 %v1009, %v1139
      %1152 = vst.msk [vmem:[#allocation3] sm:$0xff] %vm280, %v1142
      %1153 = vst.msk [vmem:[#allocation3 + $0x8] sm:$0xff] %vm280, %v1143
      %1154 = vst.msk [vmem:[#allocation3 + $0x10] sm:$0xff] %vm280, %v1144
      %1155 = vst.msk [vmem:[#allocation3 + $0x18] sm:$0xff] %vm280, %v1145
      %1156 = vst.msk [vmem:[#allocation3 + $0x20] sm:$0xff] %vm280, %v1146
      %1157 = vst.msk [vmem:[#allocation3 + $0x28] sm:$0xff] %vm280, %v1147
      %1158 = vst.msk [vmem:[#allocation3 + $0x30] sm:$0xff] %vm280, %v1148
      %1159 = vst.msk [vmem:[#allocation3 + $0x38] sm:$0xff] %vm280, %v1149
      %1160 = vst.msk [vmem:[#allocation3 + $0x40] sm:$0xff] %vm280, %v1150
      %1161 = vst.msk [vmem:[#allocation3 + $0x48] sm:$0xff] %vm280, %v1151
      %v1162 = vld [vmem:[%s273 + $0x64] sm:$0xf]
      %v1163 = vld [vmem:[%s273 + $0x68] sm:$0xf]
      %v1164 = vld [vmem:[%s273 + $0x6c] sm:$0xf]
      %v1165 = vld [vmem:[%s273 + $0x70] sm:$0xf]
      %v1166 = vld [vmem:[%s273 + $0x74] sm:$0xf]
      %v1167 = vld [vmem:[%s273 + $0x78] sm:$0xf]
      %v1168 = vld [vmem:[%s273 + $0x7c] sm:$0xf]
      %v1169 = vld [vmem:[%s273 + $0x80] sm:$0xf]
      %v1170 = vld [vmem:[%s273 + $0x84] sm:$0xf]
      %v1171 = vld [vmem:[%s273 + $0x88] sm:$0xf]
      %v1172 = vld [vmem:[%s273 + $0x8c] sm:$0x1]
      %v1173 = vld [vmem:[#allocation3] sm:$0xff]
      %v1174 = vld [vmem:[#allocation3 + $0x8] sm:$0xff]
      %v1175 = vld [vmem:[#allocation3 + $0x10] sm:$0xff]
      %v1176 = vld [vmem:[#allocation3 + $0x18] sm:$0xff]
      %v1177 = vld [vmem:[#allocation3 + $0x20] sm:$0xff]
      %v1178 = vld [vmem:[#allocation3 + $0x28] sm:$0xff]
      %v1179 = vld [vmem:[#allocation3 + $0x30] sm:$0xff]
      %v1180 = vld [vmem:[#allocation3 + $0x38] sm:$0xff]
      %v1181 = vld [vmem:[#allocation3 + $0x40] sm:$0xff]
      %v1182 = vld [vmem:[#allocation3 + $0x48] sm:$0xff]
      %s1183 = scalar_lea.vmem %s1, 10
      %v1184 = vld [vmem:[%s1183] sm:$0x3]
      %v1196 = vunpack.c.l.b16 %v1162
      %v1197 = vunpack.c.l.b16 %v1163
      %v1198 = vunpack.c.l.b16 %v1164
      %v1199 = vunpack.c.l.b16 %v1165
      %v1200 = vunpack.c.l.b16 %v1166
      %v1201 = vunpack.c.l.b16 %v1167
      %v1202 = vunpack.c.l.b16 %v1168
      %v1203 = vunpack.c.l.b16 %v1169
      %v1204 = vunpack.c.l.b16 %v1170
      %v1205 = vunpack.c.l.b16 %v1171
      %v1206 = vunpack.c.l.b16 %v1172
      %v1207 = vpack.c.b16 %v1197, %v1196
      %v1208 = vpack.c.b16 %v1199, %v1198
      %v1209 = vpack.c.b16 %v1201, %v1200
      %v1210 = vpack.c.b16 %v1203, %v1202
      %v1211 = vpack.c.b16 %v1205, %v1204
      %v1212 = vpack.c.b16 %v1206, %v1206
      %v1214 = vshrl.u32 %v1207, 16
      %v1216 = vshll.u32 %v1207, 16
      %v1218 = vrot.slane %v1216, 1
      %v1219 = vor.u32 %v1214, %v1218
      %v1221 = vshll.u32 %v1208, 16
      %v1223 = vrot.slane %v1221, 1
      %v1224 = vsel %vm675, %v1219, %v1223
      %v1225 = vshrl.u32 %v1208, 16
      %v1227 = vor.u32 %v1225, %v1223
      %v1229 = vshll.u32 %v1209, 16
      %v1231 = vrot.slane %v1229, 1
      %v1232 = vsel %vm675, %v1227, %v1231
      %v1233 = vshrl.u32 %v1209, 16
      %v1235 = vor.u32 %v1233, %v1231
      %v1237 = vshll.u32 %v1210, 16
      %v1239 = vrot.slane %v1237, 1
      %v1240 = vsel %vm675, %v1235, %v1239
      %v1241 = vshrl.u32 %v1210, 16
      %v1243 = vor.u32 %v1241, %v1239
      %v1245 = vshll.u32 %v1211, 16
      %v1247 = vrot.slane %v1245, 1
      %v1248 = vsel %vm675, %v1243, %v1247
      %v1249 = vshrl.u32 %v1211, 16
      %v1251 = vor.u32 %v1249, %v1247
      %v1253 = vshll.u32 %v1212, 16
      %v1255 = vrot.slane %v1253, 1
      %v1256 = vsel %vm675, %v1251, %v1255
      %v1258 = vsel %vm337, %v1224, 0
      %v1261 = vsel %vm337, %v1232, 0
      %v1264 = vsel %vm337, %v1240, 0
      %v1267 = vsel %vm337, %v1248, 0
      %v1270 = vsel %vm337, %v1256, 0
      %v1273 = vsel %vm353, %v1184, 0
      %1275 = vmatprep.subr.bf16.mxu0 0
      %1276 = vmatpush1.bf16.msra.mxu0 %v1273
      %1277 = vmatprep.subr.bf16.mxu0 0
      %1278 = vmatpush1.bf16.msra.mxu0 0
      %1279 = vmatprep.subr.bf16.mxu0 0
      %1280 = vmatpush1.bf16.msra.mxu0 0
      %1281 = vmatprep.subr.bf16.mxu0 0
      %1282 = vmatpush1.bf16.msra.mxu0 0
      %1283 = vmatprep.subr.bf16.mxu0 0
      %1284 = vmatpush1.bf16.msra.mxu0 0
      %1285 = vmatprep.subr.bf16.mxu0 0
      %1286 = vmatpush1.bf16.msra.mxu0 0
      %1287 = vmatprep.subr.bf16.mxu0 0
      %1288 = vmatpush1.bf16.msra.mxu0 0
      %1289 = vmatprep.subr.bf16.mxu0 0
      %1290 = vmatpush1.bf16.msra.mxu0 0
      %1291 = vmatprep.subr.bf16.mxu0 0
      %1292 = vmatpush1.bf16.msra.mxu0 0
      %1293 = vmatprep.subr.bf16.mxu0 0
      %1294 = vmatpush1.bf16.msra.mxu0 0
      %1295 = vmatprep.subr.bf16.mxu0 0
      %1296 = vmatpush1.bf16.msra.mxu0 0
      %1297 = vmatprep.subr.bf16.mxu0 0
      %1298 = vmatpush1.bf16.msra.mxu0 0
      %1299 = vmatprep.subr.bf16.mxu0 0
      %1300 = vmatpush1.bf16.msra.mxu0 0
      %1301 = vmatprep.subr.bf16.mxu0 0
      %1302 = vmatpush1.bf16.msra.mxu0 0
      %1303 = vmatprep.subr.bf16.mxu0 0
      %1304 = vmatpush1.bf16.msra.mxu0 0
      %1305 = vmatprep.subr.bf16.mxu0 0
      %1306 = vmatpush1.bf16.msra.mxu0 0
      %1307 = vmatprep.mubr.bf16.mxu0 0
      %1308 = vmatmul.mubr.bf16.gmra.mrb[0].mxu0 %v1258
      %v1309 = vpop.f32.mrb[0].mxu0
      %v1310 = vadd.f32 0.0, %v1309
      %v1311 = vpop.f32.mrb[0].mxu0
      %v1312 = vpop.f32.mrb[0].mxu0
      %v1313 = vadd.f32 0.0, %v1312
      %v1314 = vpop.f32.mrb[0].mxu0
      %1315 = vmatprep.mubr.bf16.mxu0 0
      %1316 = vmatmul.mubr.bf16.gmra.mrb[0].mxu0 %v1261
      %v1317 = vpop.f32.mrb[0].mxu0
      %v1318 = vadd.f32 0.0, %v1317
      %v1319 = vpop.f32.mrb[0].mxu0
      %v1320 = vpop.f32.mrb[0].mxu0
      %v1321 = vadd.f32 0.0, %v1320
      %v1322 = vpop.f32.mrb[0].mxu0
      %1323 = vmatprep.mubr.bf16.mxu0 0
      %1324 = vmatmul.mubr.bf16.gmra.mrb[0].mxu0 %v1264
      %v1325 = vpop.f32.mrb[0].mxu0
      %v1326 = vadd.f32 0.0, %v1325
      %v1327 = vpop.f32.mrb[0].mxu0
      %v1328 = vpop.f32.mrb[0].mxu0
      %v1329 = vadd.f32 0.0, %v1328
      %v1330 = vpop.f32.mrb[0].mxu0
      %1331 = vmatprep.mubr.bf16.mxu0 0
      %1332 = vmatmul.mubr.bf16.gmra.mrb[0].mxu0 %v1267
      %v1333 = vpop.f32.mrb[0].mxu0
      %v1334 = vadd.f32 0.0, %v1333
      %v1335 = vpop.f32.mrb[0].mxu0
      %v1336 = vpop.f32.mrb[0].mxu0
      %v1337 = vadd.f32 0.0, %v1336
      %v1338 = vpop.f32.mrb[0].mxu0
      %1339 = vmatprep.mubr.bf16.mxu0 0
      %1340 = vmatmul.mubr.bf16.gmra.mrb[0].mxu0 %v1270
      %v1341 = vpop.f32.mrb[0].mxu0
      %v1342 = vadd.f32 0.0, %v1341
      %v1343 = vpop.f32.mrb[0].mxu0
      %v1344 = vpop.f32.mrb[0].mxu0
      %v1345 = vadd.f32 0.0, %v1344
      %v1346 = vpop.f32.mrb[0].mxu0
      %1347 = vdwg.mxu0
      %v1348 = vadd.f32 %v1173, %v1310
      %v1349 = vadd.f32 %v1174, %v1313
      %v1350 = vadd.f32 %v1175, %v1318
      %v1351 = vadd.f32 %v1176, %v1321
      %v1352 = vadd.f32 %v1177, %v1326
      %v1353 = vadd.f32 %v1178, %v1329
      %v1354 = vadd.f32 %v1179, %v1334
      %v1355 = vadd.f32 %v1180, %v1337
      %v1356 = vadd.f32 %v1181, %v1342
      %v1357 = vadd.f32 %v1182, %v1345
      %1358 = vst.msk [vmem:[#allocation3] sm:$0xff] %vm280, %v1348
      %1359 = vst.msk [vmem:[#allocation3 + $0x8] sm:$0xff] %vm280, %v1349
      %1360 = vst.msk [vmem:[#allocation3 + $0x10] sm:$0xff] %vm280, %v1350
      %1361 = vst.msk [vmem:[#allocation3 + $0x18] sm:$0xff] %vm280, %v1351
      %1362 = vst.msk [vmem:[#allocation3 + $0x20] sm:$0xff] %vm280, %v1352
      %1363 = vst.msk [vmem:[#allocation3 + $0x28] sm:$0xff] %vm280, %v1353
      %1364 = vst.msk [vmem:[#allocation3 + $0x30] sm:$0xff] %vm280, %v1354
      %1365 = vst.msk [vmem:[#allocation3 + $0x38] sm:$0xff] %vm280, %v1355
      %1366 = vst.msk [vmem:[#allocation3 + $0x40] sm:$0xff] %vm280, %v1356
      %1367 = vst.msk [vmem:[#allocation3 + $0x48] sm:$0xff] %vm280, %v1357
      %v1368 = vld [vmem:[%s273 + $0x4] sm:$0xe]
      %v1369 = vld [vmem:[%s273 + $0x8] sm:$0xf]
      %v1370 = vld [vmem:[%s273 + $0xc] sm:$0xf]
      %v1371 = vld [vmem:[%s273 + $0x10] sm:$0xf]
      %v1372 = vld [vmem:[%s273 + $0x14] sm:$0xf]
      %v1373 = vld [vmem:[%s273 + $0x18] sm:$0xf]
      %v1374 = vld [vmem:[%s273 + $0x1c] sm:$0xf]
      %v1375 = vld [vmem:[%s273 + $0x20] sm:$0xf]
      %v1376 = vld [vmem:[%s273 + $0x24] sm:$0xf]
      %v1377 = vld [vmem:[%s273 + $0x28] sm:$0xf]
      %v1378 = vld [vmem:[%s273 + $0x2c] sm:$0x1]
      %v1379 = vld [vmem:[#allocation3] sm:$0xff]
      %v1380 = vld [vmem:[#allocation3 + $0x8] sm:$0xff]
      %v1381 = vld [vmem:[#allocation3 + $0x10] sm:$0xff]
      %v1382 = vld [vmem:[#allocation3 + $0x18] sm:$0xff]
      %v1383 = vld [vmem:[#allocation3 + $0x20] sm:$0xff]
      %v1384 = vld [vmem:[#allocation3 + $0x28] sm:$0xff]
      %v1385 = vld [vmem:[#allocation3 + $0x30] sm:$0xff]
      %v1386 = vld [vmem:[#allocation3 + $0x38] sm:$0xff]
      %v1387 = vld [vmem:[#allocation3 + $0x40] sm:$0xff]
      %v1388 = vld [vmem:[#allocation3 + $0x48] sm:$0xff]
      %s1389 = scalar_lea.vmem %s1, 12
      %v1390 = vld [vmem:[%s1389] sm:$0x3]
      %v1402 = vunpack.c.l.b16 %v1368
      %v1403 = vunpack.c.l.b16 %v1369
      %v1404 = vunpack.c.l.b16 %v1370
      %v1405 = vunpack.c.l.b16 %v1371
      %v1406 = vunpack.c.l.b16 %v1372
      %v1407 = vunpack.c.l.b16 %v1373
      %v1408 = vunpack.c.l.b16 %v1374
      %v1409 = vunpack.c.l.b16 %v1375
      %v1410 = vunpack.c.l.b16 %v1376
      %v1411 = vunpack.c.l.b16 %v1377
      %v1412 = vunpack.c.l.b16 %v1378
      %v1413 = vpack.c.b16 %v1403, %v1402
      %v1414 = vpack.c.b16 %v1405, %v1404
      %v1415 = vpack.c.b16 %v1407, %v1406
      %v1416 = vpack.c.b16 %v1409, %v1408
      %v1417 = vpack.c.b16 %v1411, %v1410
      %v1418 = vpack.c.b16 %v1412, %v1412
      %vm1419 = vcmask 1046528
      %v1420 = vrot.slane %v1413, 1
      %v1421 = vrot.slane %v1414, 1
      %v1422 = vsel %vm1419, %v1420, %v1421
      %v1423 = vrot.slane %v1415, 1
      %v1424 = vsel %vm1419, %v1421, %v1423
      %v1425 = vrot.slane %v1416, 1
      %v1426 = vsel %vm1419, %v1423, %v1425
      %v1427 = vrot.slane %v1417, 1
      %v1428 = vsel %vm1419, %v1425, %v1427
      %v1429 = vrot.slane %v1418, 1
      %v1430 = vsel %vm1419, %v1427, %v1429
      %v1432 = vsel %vm337, %v1422, 0
      %v1435 = vsel %vm337, %v1424, 0
      %v1438 = vsel %vm337, %v1426, 0
      %v1441 = vsel %vm337, %v1428, 0
      %v1444 = vsel %vm337, %v1430, 0
      %v1447 = vsel %vm353, %v1390, 0
      %1449 = vmatprep.subr.bf16.mxu0 0
      %1450 = vmatpush1.bf16.msra.mxu0 %v1447
      %1451 = vmatprep.subr.bf16.mxu0 0
      %1452 = vmatpush1.bf16.msra.mxu0 0
      %1453 = vmatprep.subr.bf16.mxu0 0
      %1454 = vmatpush1.bf16.msra.mxu0 0
      %1455 = vmatprep.subr.bf16.mxu0 0
      %1456 = vmatpush1.bf16.msra.mxu0 0
      %1457 = vmatprep.subr.bf16.mxu0 0
      %1458 = vmatpush1.bf16.msra.mxu0 0
      %1459 = vmatprep.subr.bf16.mxu0 0
      %1460 = vmatpush1.bf16.msra.mxu0 0
      %1461 = vmatprep.subr.bf16.mxu0 0
      %1462 = vmatpush1.bf16.msra.mxu0 0
      %1463 = vmatprep.subr.bf16.mxu0 0
      %1464 = vmatpush1.bf16.msra.mxu0 0
      %1465 = vmatprep.subr.bf16.mxu0 0
      %1466 = vmatpush1.bf16.msra.mxu0 0
      %1467 = vmatprep.subr.bf16.mxu0 0
      %1468 = vmatpush1.bf16.msra.mxu0 0
      %1469 = vmatprep.subr.bf16.mxu0 0
      %1470 = vmatpush1.bf16.msra.mxu0 0
      %1471 = vmatprep.subr.bf16.mxu0 0
      %1472 = vmatpush1.bf16.msra.mxu0 0
      %1473 = vmatprep.subr.bf16.mxu0 0
      %1474 = vmatpush1.bf16.msra.mxu0 0
      %1475 = vmatprep.subr.bf16.mxu0 0
      %1476 = vmatpush1.bf16.msra.mxu0 0
      %1477 = vmatprep.subr.bf16.mxu0 0
      %1478 = vmatpush1.bf16.msra.mxu0 0
      %1479 = vmatprep.subr.bf16.mxu0 0
      %1480 = vmatpush1.bf16.msra.mxu0 0
      %1481 = vmatprep.mubr.bf16.mxu0 0
      %1482 = vmatmul.mubr.bf16.gmra.mrb[0].mxu0 %v1432
      %v1483 = vpop.f32.mrb[0].mxu0
      %v1484 = vadd.f32 0.0, %v1483
      %v1485 = vpop.f32.mrb[0].mxu0
      %v1486 = vpop.f32.mrb[0].mxu0
      %v1487 = vadd.f32 0.0, %v1486
      %v1488 = vpop.f32.mrb[0].mxu0
      %1489 = vmatprep.mubr.bf16.mxu0 0
      %1490 = vmatmul.mubr.bf16.gmra.mrb[0].mxu0 %v1435
      %v1491 = vpop.f32.mrb[0].mxu0
      %v1492 = vadd.f32 0.0, %v1491
      %v1493 = vpop.f32.mrb[0].mxu0
      %v1494 = vpop.f32.mrb[0].mxu0
      %v1495 = vadd.f32 0.0, %v1494
      %v1496 = vpop.f32.mrb[0].mxu0
      %1497 = vmatprep.mubr.bf16.mxu0 0
      %1498 = vmatmul.mubr.bf16.gmra.mrb[0].mxu0 %v1438
      %v1499 = vpop.f32.mrb[0].mxu0
      %v1500 = vadd.f32 0.0, %v1499
      %v1501 = vpop.f32.mrb[0].mxu0
      %v1502 = vpop.f32.mrb[0].mxu0
      %v1503 = vadd.f32 0.0, %v1502
      %v1504 = vpop.f32.mrb[0].mxu0
      %1505 = vmatprep.mubr.bf16.mxu0 0
      %1506 = vmatmul.mubr.bf16.gmra.mrb[0].mxu0 %v1441
      %v1507 = vpop.f32.mrb[0].mxu0
      %v1508 = vadd.f32 0.0, %v1507
      %v1509 = vpop.f32.mrb[0].mxu0
      %v1510 = vpop.f32.mrb[0].mxu0
      %v1511 = vadd.f32 0.0, %v1510
      %v1512 = vpop.f32.mrb[0].mxu0
      %1513 = vmatprep.mubr.bf16.mxu0 0
      %1514 = vmatmul.mubr.bf16.gmra.mrb[0].mxu0 %v1444
      %v1515 = vpop.f32.mrb[0].mxu0
      %v1516 = vadd.f32 0.0, %v1515
      %v1517 = vpop.f32.mrb[0].mxu0
      %v1518 = vpop.f32.mrb[0].mxu0
      %v1519 = vadd.f32 0.0, %v1518
      %v1520 = vpop.f32.mrb[0].mxu0
      %1521 = vdwg.mxu0
      %v1522 = vadd.f32 %v1379, %v1484
      %v1523 = vadd.f32 %v1380, %v1487
      %v1524 = vadd.f32 %v1381, %v1492
      %v1525 = vadd.f32 %v1382, %v1495
      %v1526 = vadd.f32 %v1383, %v1500
      %v1527 = vadd.f32 %v1384, %v1503
      %v1528 = vadd.f32 %v1385, %v1508
      %v1529 = vadd.f32 %v1386, %v1511
      %v1530 = vadd.f32 %v1387, %v1516
      %v1531 = vadd.f32 %v1388, %v1519
      %1532 = vst.msk [vmem:[#allocation3] sm:$0xff] %vm280, %v1522
      %1533 = vst.msk [vmem:[#allocation3 + $0x8] sm:$0xff] %vm280, %v1523
      %1534 = vst.msk [vmem:[#allocation3 + $0x10] sm:$0xff] %vm280, %v1524
      %1535 = vst.msk [vmem:[#allocation3 + $0x18] sm:$0xff] %vm280, %v1525
      %1536 = vst.msk [vmem:[#allocation3 + $0x20] sm:$0xff] %vm280, %v1526
      %1537 = vst.msk [vmem:[#allocation3 + $0x28] sm:$0xff] %vm280, %v1527
      %1538 = vst.msk [vmem:[#allocation3 + $0x30] sm:$0xff] %vm280, %v1528
      %1539 = vst.msk [vmem:[#allocation3 + $0x38] sm:$0xff] %vm280, %v1529
      %1540 = vst.msk [vmem:[#allocation3 + $0x40] sm:$0xff] %vm280, %v1530
      %1541 = vst.msk [vmem:[#allocation3 + $0x48] sm:$0xff] %vm280, %v1531
      %v1542 = vld [vmem:[%s273 + $0x34] sm:$0x8]
      %v1543 = vld [vmem:[%s273 + $0x38] sm:$0xf]
      %v1544 = vld [vmem:[%s273 + $0x3c] sm:$0xf]
      %v1545 = vld [vmem:[%s273 + $0x40] sm:$0xf]
      %v1546 = vld [vmem:[%s273 + $0x44] sm:$0xf]
      %v1547 = vld [vmem:[%s273 + $0x48] sm:$0xf]
      %v1548 = vld [vmem:[%s273 + $0x4c] sm:$0xf]
      %v1549 = vld [vmem:[%s273 + $0x50] sm:$0xf]
      %v1550 = vld [vmem:[%s273 + $0x54] sm:$0xf]
      %v1551 = vld [vmem:[%s273 + $0x58] sm:$0xf]
      %v1552 = vld [vmem:[%s273 + $0x5c] sm:$0x7]
      %v1553 = vld [vmem:[#allocation3] sm:$0xff]
      %v1554 = vld [vmem:[#allocation3 + $0x8] sm:$0xff]
      %v1555 = vld [vmem:[#allocation3 + $0x10] sm:$0xff]
      %v1556 = vld [vmem:[#allocation3 + $0x18] sm:$0xff]
      %v1557 = vld [vmem:[#allocation3 + $0x20] sm:$0xff]
      %v1558 = vld [vmem:[#allocation3 + $0x28] sm:$0xff]
      %v1559 = vld [vmem:[#allocation3 + $0x30] sm:$0xff]
      %v1560 = vld [vmem:[#allocation3 + $0x38] sm:$0xff]
      %v1561 = vld [vmem:[#allocation3 + $0x40] sm:$0xff]
      %v1562 = vld [vmem:[#allocation3 + $0x48] sm:$0xff]
      %s1563 = scalar_lea.vmem %s1, 14
      %v1564 = vld [vmem:[%s1563] sm:$0x3]
      %v1576 = vunpack.c.l.b16 %v1542
      %v1577 = vunpack.c.l.b16 %v1543
      %v1578 = vunpack.c.l.b16 %v1544
      %v1579 = vunpack.c.l.b16 %v1545
      %v1580 = vunpack.c.l.b16 %v1546
      %v1581 = vunpack.c.l.b16 %v1547
      %v1582 = vunpack.c.l.b16 %v1548
      %v1583 = vunpack.c.l.b16 %v1549
      %v1584 = vunpack.c.l.b16 %v1550
      %v1585 = vunpack.c.l.b16 %v1551
      %v1586 = vunpack.c.l.b16 %v1552
      %v1587 = vpack.c.b16 %v1577, %v1576
      %v1588 = vpack.c.b16 %v1579, %v1578
      %v1589 = vpack.c.b16 %v1581, %v1580
      %v1590 = vpack.c.b16 %v1583, %v1582
      %v1591 = vpack.c.b16 %v1585, %v1584
      %v1592 = vpack.c.b16 %v1586, %v1586
      %vm1593 = vcmask 1044480
      %v1594 = vrot.slane %v1587, 3
      %v1595 = vrot.slane %v1588, 3
      %v1596 = vsel %vm1593, %v1594, %v1595
      %v1597 = vrot.slane %v1589, 3
      %v1598 = vsel %vm1593, %v1595, %v1597
      %v1599 = vrot.slane %v1590, 3
      %v1600 = vsel %vm1593, %v1597, %v1599
      %v1601 = vrot.slane %v1591, 3
      %v1602 = vsel %vm1593, %v1599, %v1601
      %v1603 = vrot.slane %v1592, 3
      %v1604 = vsel %vm1593, %v1601, %v1603
      %v1606 = vsel %vm337, %v1596, 0
      %v1609 = vsel %vm337, %v1598, 0
      %v1612 = vsel %vm337, %v1600, 0
      %v1615 = vsel %vm337, %v1602, 0
      %v1618 = vsel %vm337, %v1604, 0
      %v1621 = vsel %vm353, %v1564, 0
      %1623 = vmatprep.subr.bf16.mxu0 0
      %1624 = vmatpush1.bf16.msra.mxu0 %v1621
      %1625 = vmatprep.subr.bf16.mxu0 0
      %1626 = vmatpush1.bf16.msra.mxu0 0
      %1627 = vmatprep.subr.bf16.mxu0 0
      %1628 = vmatpush1.bf16.msra.mxu0 0
      %1629 = vmatprep.subr.bf16.mxu0 0
      %1630 = vmatpush1.bf16.msra.mxu0 0
      %1631 = vmatprep.subr.bf16.mxu0 0
      %1632 = vmatpush1.bf16.msra.mxu0 0
      %1633 = vmatprep.subr.bf16.mxu0 0
      %1634 = vmatpush1.bf16.msra.mxu0 0
      %1635 = vmatprep.subr.bf16.mxu0 0
      %1636 = vmatpush1.bf16.msra.mxu0 0
      %1637 = vmatprep.subr.bf16.mxu0 0
      %1638 = vmatpush1.bf16.msra.mxu0 0
      %1639 = vmatprep.subr.bf16.mxu0 0
      %1640 = vmatpush1.bf16.msra.mxu0 0
      %1641 = vmatprep.subr.bf16.mxu0 0
      %1642 = vmatpush1.bf16.msra.mxu0 0
      %1643 = vmatprep.subr.bf16.mxu0 0
      %1644 = vmatpush1.bf16.msra.mxu0 0
      %1645 = vmatprep.subr.bf16.mxu0 0
      %1646 = vmatpush1.bf16.msra.mxu0 0
      %1647 = vmatprep.subr.bf16.mxu0 0
      %1648 = vmatpush1.bf16.msra.mxu0 0
      %1649 = vmatprep.subr.bf16.mxu0 0
      %1650 = vmatpush1.bf16.msra.mxu0 0
      %1651 = vmatprep.subr.bf16.mxu0 0
      %1652 = vmatpush1.bf16.msra.mxu0 0
      %1653 = vmatprep.subr.bf16.mxu0 0
      %1654 = vmatpush1.bf16.msra.mxu0 0
      %1655 = vmatprep.mubr.bf16.mxu0 0
      %1656 = vmatmul.mubr.bf16.gmra.mrb[0].mxu0 %v1606
      %v1657 = vpop.f32.mrb[0].mxu0
      %v1658 = vadd.f32 0.0, %v1657
      %v1659 = vpop.f32.mrb[0].mxu0
      %v1660 = vpop.f32.mrb[0].mxu0
      %v1661 = vadd.f32 0.0, %v1660
      %v1662 = vpop.f32.mrb[0].mxu0
      %1663 = vmatprep.mubr.bf16.mxu0 0
      %1664 = vmatmul.mubr.bf16.gmra.mrb[0].mxu0 %v1609
      %v1665 = vpop.f32.mrb[0].mxu0
      %v1666 = vadd.f32 0.0, %v1665
      %v1667 = vpop.f32.mrb[0].mxu0
      %v1668 = vpop.f32.mrb[0].mxu0
      %v1669 = vadd.f32 0.0, %v1668
      %v1670 = vpop.f32.mrb[0].mxu0
      %1671 = vmatprep.mubr.bf16.mxu0 0
      %1672 = vmatmul.mubr.bf16.gmra.mrb[0].mxu0 %v1612
      %v1673 = vpop.f32.mrb[0].mxu0
      %v1674 = vadd.f32 0.0, %v1673
      %v1675 = vpop.f32.mrb[0].mxu0
      %v1676 = vpop.f32.mrb[0].mxu0
      %v1677 = vadd.f32 0.0, %v1676
      %v1678 = vpop.f32.mrb[0].mxu0
      %1679 = vmatprep.mubr.bf16.mxu0 0
      %1680 = vmatmul.mubr.bf16.gmra.mrb[0].mxu0 %v1615
      %v1681 = vpop.f32.mrb[0].mxu0
      %v1682 = vadd.f32 0.0, %v1681
      %v1683 = vpop.f32.mrb[0].mxu0
      %v1684 = vpop.f32.mrb[0].mxu0
      %v1685 = vadd.f32 0.0, %v1684
      %v1686 = vpop.f32.mrb[0].mxu0
      %1687 = vmatprep.mubr.bf16.mxu0 0
      %1688 = vmatmul.mubr.bf16.gmra.mrb[0].mxu0 %v1618
      %v1689 = vpop.f32.mrb[0].mxu0
      %v1690 = vadd.f32 0.0, %v1689
      %v1691 = vpop.f32.mrb[0].mxu0
      %v1692 = vpop.f32.mrb[0].mxu0
      %v1693 = vadd.f32 0.0, %v1692
      %v1694 = vpop.f32.mrb[0].mxu0
      %1695 = vdwg.mxu0
      %v1696 = vadd.f32 %v1553, %v1658
      %v1697 = vadd.f32 %v1554, %v1661
      %v1698 = vadd.f32 %v1555, %v1666
      %v1699 = vadd.f32 %v1556, %v1669
      %v1700 = vadd.f32 %v1557, %v1674
      %v1701 = vadd.f32 %v1558, %v1677
      %v1702 = vadd.f32 %v1559, %v1682
      %v1703 = vadd.f32 %v1560, %v1685
      %v1704 = vadd.f32 %v1561, %v1690
      %v1705 = vadd.f32 %v1562, %v1693
      %1706 = vst.msk [vmem:[#allocation3] sm:$0xff] %vm280, %v1696
      %1707 = vst.msk [vmem:[#allocation3 + $0x8] sm:$0xff] %vm280, %v1697
      %1708 = vst.msk [vmem:[#allocation3 + $0x10] sm:$0xff] %vm280, %v1698
      %1709 = vst.msk [vmem:[#allocation3 + $0x18] sm:$0xff] %vm280, %v1699
      %1710 = vst.msk [vmem:[#allocation3 + $0x20] sm:$0xff] %vm280, %v1700
      %1711 = vst.msk [vmem:[#allocation3 + $0x28] sm:$0xff] %vm280, %v1701
      %1712 = vst.msk [vmem:[#allocation3 + $0x30] sm:$0xff] %vm280, %v1702
      %1713 = vst.msk [vmem:[#allocation3 + $0x38] sm:$0xff] %vm280, %v1703
      %1714 = vst.msk [vmem:[#allocation3 + $0x40] sm:$0xff] %vm280, %v1704
      %1715 = vst.msk [vmem:[#allocation3 + $0x48] sm:$0xff] %vm280, %v1705
      %v1716 = vld [vmem:[%s273 + $0x4] sm:$0xe]
      %v1717 = vld [vmem:[%s273 + $0x8] sm:$0xf]
      %v1718 = vld [vmem:[%s273 + $0xc] sm:$0xf]
      %v1719 = vld [vmem:[%s273 + $0x10] sm:$0xf]
      %v1720 = vld [vmem:[%s273 + $0x14] sm:$0xf]
      %v1721 = vld [vmem:[%s273 + $0x18] sm:$0xf]
      %v1722 = vld [vmem:[%s273 + $0x1c] sm:$0xf]
      %v1723 = vld [vmem:[%s273 + $0x20] sm:$0xf]
      %v1724 = vld [vmem:[%s273 + $0x24] sm:$0xf]
      %v1725 = vld [vmem:[%s273 + $0x28] sm:$0xf]
      %v1726 = vld [vmem:[%s273 + $0x2c] sm:$0x3]
      %v1727 = vld [vmem:[#allocation3] sm:$0xff]
      %v1728 = vld [vmem:[#allocation3 + $0x8] sm:$0xff]
      %v1729 = vld [vmem:[#allocation3 + $0x10] sm:$0xff]
      %v1730 = vld [vmem:[#allocation3 + $0x18] sm:$0xff]
      %v1731 = vld [vmem:[#allocation3 + $0x20] sm:$0xff]
      %v1732 = vld [vmem:[#allocation3 + $0x28] sm:$0xff]
      %v1733 = vld [vmem:[#allocation3 + $0x30] sm:$0xff]
      %v1734 = vld [vmem:[#allocation3 + $0x38] sm:$0xff]
      %v1735 = vld [vmem:[#allocation3 + $0x40] sm:$0xff]
      %v1736 = vld [vmem:[#allocation3 + $0x48] sm:$0xff]
      %s1737 = scalar_lea.vmem %s1, 16
      %v1738 = vld [vmem:[%s1737] sm:$0x3]
      %v1750 = vunpack.c.l.b16 %v1716
      %v1751 = vunpack.c.l.b16 %v1717
      %v1752 = vunpack.c.l.b16 %v1718
      %v1753 = vunpack.c.l.b16 %v1719
      %v1754 = vunpack.c.l.b16 %v1720
      %v1755 = vunpack.c.l.b16 %v1721
      %v1756 = vunpack.c.l.b16 %v1722
      %v1757 = vunpack.c.l.b16 %v1723
      %v1758 = vunpack.c.l.b16 %v1724
      %v1759 = vunpack.c.l.b16 %v1725
      %v1760 = vunpack.c.l.b16 %v1726
      %v1761 = vpack.c.b16 %v1751, %v1750
      %v1762 = vpack.c.b16 %v1753, %v1752
      %v1763 = vpack.c.b16 %v1755, %v1754
      %v1764 = vpack.c.b16 %v1757, %v1756
      %v1765 = vpack.c.b16 %v1759, %v1758
      %v1766 = vpack.c.b16 %v1760, %v1760
      %vm1767 = vsmask.f32 6400
      %v1769 = vshrl.u32 %v1761, 16
      %v1771 = vrot.slane %v1769, 1
      %v1772 = vshll.u32 %v1761, 16
      %v1774 = vrot.slane %v1772, 2
      %v1775 = vor.u32 %v1771, %v1774
      %v1777 = vshrl.u32 %v1762, 16
      %v1779 = vrot.slane %v1777, 1
      %v1780 = vshll.u32 %v1762, 16
      %v1782 = vrot.slane %v1780, 2
      %v1783 = vor.u32 %v1779, %v1782
      %v1784 = vsel %vm1767, %v1775, %v1783
      %v1786 = vshrl.u32 %v1763, 16
      %v1788 = vrot.slane %v1786, 1
      %v1789 = vshll.u32 %v1763, 16
      %v1791 = vrot.slane %v1789, 2
      %v1792 = vor.u32 %v1788, %v1791
      %v1793 = vsel %vm1767, %v1783, %v1792
      %v1795 = vshrl.u32 %v1764, 16
      %v1797 = vrot.slane %v1795, 1
      %v1798 = vshll.u32 %v1764, 16
      %v1800 = vrot.slane %v1798, 2
      %v1801 = vor.u32 %v1797, %v1800
      %v1802 = vsel %vm1767, %v1792, %v1801
      %v1804 = vshrl.u32 %v1765, 16
      %v1806 = vrot.slane %v1804, 1
      %v1807 = vshll.u32 %v1765, 16
      %v1809 = vrot.slane %v1807, 2
      %v1810 = vor.u32 %v1806, %v1809
      %v1811 = vsel %vm1767, %v1801, %v1810
      %v1813 = vshrl.u32 %v1766, 16
      %v1815 = vrot.slane %v1813, 1
      %v1816 = vshll.u32 %v1766, 16
      %v1818 = vrot.slane %v1816, 2
      %v1819 = vor.u32 %v1815, %v1818
      %v1820 = vsel %vm1767, %v1810, %v1819
      %v1822 = vsel %vm337, %v1784, 0
      %v1825 = vsel %vm337, %v1793, 0
      %v1828 = vsel %vm337, %v1802, 0
      %v1831 = vsel %vm337, %v1811, 0
      %v1834 = vsel %vm337, %v1820, 0
      %v1837 = vsel %vm353, %v1738, 0
      %1839 = vmatprep.subr.bf16.mxu0 0
      %1840 = vmatpush1.bf16.msra.mxu0 %v1837
      %1841 = vmatprep.subr.bf16.mxu0 0
      %1842 = vmatpush1.bf16.msra.mxu0 0
      %1843 = vmatprep.subr.bf16.mxu0 0
      %1844 = vmatpush1.bf16.msra.mxu0 0
      %1845 = vmatprep.subr.bf16.mxu0 0
      %1846 = vmatpush1.bf16.msra.mxu0 0
      %1847 = vmatprep.subr.bf16.mxu0 0
      %1848 = vmatpush1.bf16.msra.mxu0 0
      %1849 = vmatprep.subr.bf16.mxu0 0
      %1850 = vmatpush1.bf16.msra.mxu0 0
      %1851 = vmatprep.subr.bf16.mxu0 0
      %1852 = vmatpush1.bf16.msra.mxu0 0
      %1853 = vmatprep.subr.bf16.mxu0 0
      %1854 = vmatpush1.bf16.msra.mxu0 0
      %1855 = vmatprep.subr.bf16.mxu0 0
      %1856 = vmatpush1.bf16.msra.mxu0 0
      %1857 = vmatprep.subr.bf16.mxu0 0
      %1858 = vmatpush1.bf16.msra.mxu0 0
      %1859 = vmatprep.subr.bf16.mxu0 0
      %1860 = vmatpush1.bf16.msra.mxu0 0
      %1861 = vmatprep.subr.bf16.mxu0 0
      %1862 = vmatpush1.bf16.msra.mxu0 0
      %1863 = vmatprep.subr.bf16.mxu0 0
      %1864 = vmatpush1.bf16.msra.mxu0 0
      %1865 = vmatprep.subr.bf16.mxu0 0
      %1866 = vmatpush1.bf16.msra.mxu0 0
      %1867 = vmatprep.subr.bf16.mxu0 0
      %1868 = vmatpush1.bf16.msra.mxu0 0
      %1869 = vmatprep.subr.bf16.mxu0 0
      %1870 = vmatpush1.bf16.msra.mxu0 0
      %1871 = vmatprep.mubr.bf16.mxu0 0
      %1872 = vmatmul.mubr.bf16.gmra.mrb[0].mxu0 %v1822
      %v1873 = vpop.f32.mrb[0].mxu0
      %v1874 = vadd.f32 0.0, %v1873
      %v1875 = vpop.f32.mrb[0].mxu0
      %v1876 = vpop.f32.mrb[0].mxu0
      %v1877 = vadd.f32 0.0, %v1876
      %v1878 = vpop.f32.mrb[0].mxu0
      %1879 = vmatprep.mubr.bf16.mxu0 0
      %1880 = vmatmul.mubr.bf16.gmra.mrb[0].mxu0 %v1825
      %v1881 = vpop.f32.mrb[0].mxu0
      %v1882 = vadd.f32 0.0, %v1881
      %v1883 = vpop.f32.mrb[0].mxu0
      %v1884 = vpop.f32.mrb[0].mxu0
      %v1885 = vadd.f32 0.0, %v1884
      %v1886 = vpop.f32.mrb[0].mxu0
      %1887 = vmatprep.mubr.bf16.mxu0 0
      %1888 = vmatmul.mubr.bf16.gmra.mrb[0].mxu0 %v1828
      %v1889 = vpop.f32.mrb[0].mxu0
      %v1890 = vadd.f32 0.0, %v1889
      %v1891 = vpop.f32.mrb[0].mxu0
      %v1892 = vpop.f32.mrb[0].mxu0
      %v1893 = vadd.f32 0.0, %v1892
      %v1894 = vpop.f32.mrb[0].mxu0
      %1895 = vmatprep.mubr.bf16.mxu0 0
      %1896 = vmatmul.mubr.bf16.gmra.mrb[0].mxu0 %v1831
      %v1897 = vpop.f32.mrb[0].mxu0
      %v1898 = vadd.f32 0.0, %v1897
      %v1899 = vpop.f32.mrb[0].mxu0
      %v1900 = vpop.f32.mrb[0].mxu0
      %v1901 = vadd.f32 0.0, %v1900
      %v1902 = vpop.f32.mrb[0].mxu0
      %1903 = vmatprep.mubr.bf16.mxu0 0
      %1904 = vmatmul.mubr.bf16.gmra.mrb[0].mxu0 %v1834
      %v1905 = vpop.f32.mrb[0].mxu0
      %v1906 = vadd.f32 0.0, %v1905
      %v1907 = vpop.f32.mrb[0].mxu0
      %v1908 = vpop.f32.mrb[0].mxu0
      %v1909 = vadd.f32 0.0, %v1908
      %v1910 = vpop.f32.mrb[0].mxu0
      %1911 = vdwg.mxu0
      %v1912 = vadd.f32 %v1727, %v1874
      %v1913 = vadd.f32 %v1728, %v1877
      %v1914 = vadd.f32 %v1729, %v1882
      %v1915 = vadd.f32 %v1730, %v1885
      %v1916 = vadd.f32 %v1731, %v1890
      %v1917 = vadd.f32 %v1732, %v1893
      %v1918 = vadd.f32 %v1733, %v1898
      %v1919 = vadd.f32 %v1734, %v1901
      %v1920 = vadd.f32 %v1735, %v1906
      %v1921 = vadd.f32 %v1736, %v1909
      %1922 = vst.msk [vmem:[#allocation3] sm:$0xff] %vm280, %v1912
      %1923 = vst.msk [vmem:[#allocation3 + $0x8] sm:$0xff] %vm280, %v1913
      %1924 = vst.msk [vmem:[#allocation3 + $0x10] sm:$0xff] %vm280, %v1914
      %1925 = vst.msk [vmem:[#allocation3 + $0x18] sm:$0xff] %vm280, %v1915
      %1926 = vst.msk [vmem:[#allocation3 + $0x20] sm:$0xff] %vm280, %v1916
      %1927 = vst.msk [vmem:[#allocation3 + $0x28] sm:$0xff] %vm280, %v1917
      %1928 = vst.msk [vmem:[#allocation3 + $0x30] sm:$0xff] %vm280, %v1918
      %1929 = vst.msk [vmem:[#allocation3 + $0x38] sm:$0xff] %vm280, %v1919
      %1930 = vst.msk [vmem:[#allocation3 + $0x40] sm:$0xff] %vm280, %v1920
      %1931 = vst.msk [vmem:[#allocation3 + $0x48] sm:$0xff] %vm280, %v1921
      %v1932 = vld [vmem:[#allocation3] sm:$0xff]
      %v1933 = vld [vmem:[#allocation3 + $0x8] sm:$0xff]
      %v1934 = vld [vmem:[#allocation3 + $0x10] sm:$0xff]
      %v1935 = vld [vmem:[#allocation3 + $0x18] sm:$0xff]
      %v1936 = vld [vmem:[#allocation3 + $0x20] sm:$0xff]
      %v1937 = vld [vmem:[#allocation3 + $0x28] sm:$0xff]
      %v1938 = vld [vmem:[#allocation3 + $0x30] sm:$0xff]
      %v1939 = vld [vmem:[#allocation3 + $0x38] sm:$0xff]
      %v1940 = vld [vmem:[#allocation3 + $0x40] sm:$0xff]
      %v1941 = vld [vmem:[#allocation3 + $0x48] sm:$0xff]
      %v1942 = vld [vmem:[%s4] sm:$0x1]
      %v1944 = vlaneseq
      %v1945 = vshrl.u32 %v1944, 7
      %v1946 = vsub.s32 0, %v1945
      %v1947 = vrot.slane %v1942, %v1946
      %v1949 = vadd.f32 %v1932, %v1947
      %v1950 = vadd.f32 %v1933, %v1947
      %v1951 = vadd.f32 %v1934, %v1947
      %v1952 = vadd.f32 %v1935, %v1947
      %v1953 = vadd.f32 %v1936, %v1947
      %v1954 = vadd.f32 %v1937, %v1947
      %v1955 = vadd.f32 %v1938, %v1947
      %v1956 = vadd.f32 %v1939, %v1947
      %v1957 = vadd.f32 %v1940, %v1947
      %v1958 = vadd.f32 %v1941, %v1947
      %v1959 = vmax.f32 %v1949, 0.0
      %v1960 = vmax.f32 %v1950, 0.0
      %v1961 = vmax.f32 %v1951, 0.0
      %v1962 = vmax.f32 %v1952, 0.0
      %v1963 = vmax.f32 %v1953, 0.0
      %v1964 = vmax.f32 %v1954, 0.0
      %v1965 = vmax.f32 %v1955, 0.0
      %v1966 = vmax.f32 %v1956, 0.0
      %v1967 = vmax.f32 %v1957, 0.0
      %v1968 = vmax.f32 %v1958, 0.0
      %v1969 = vld [vmem:[%s6] sm:$0xff]
      %v1970 = vld [vmem:[%s6 + $0x8] sm:$0xff]
      %v1971 = vld [vmem:[%s6 + $0x10] sm:$0xff]
      %v1972 = vld [vmem:[%s6 + $0x18] sm:$0xff]
      %v1973 = vld [vmem:[%s6 + $0x20] sm:$0xff]
      %v1974 = vld [vmem:[%s6 + $0x28] sm:$0xff]
      %v1975 = vld [vmem:[%s6 + $0x30] sm:$0xff]
      %v1976 = vld [vmem:[%s6 + $0x38] sm:$0xff]
      %v1977 = vld [vmem:[%s6 + $0x40] sm:$0xff]
      %v1978 = vld [vmem:[%s6 + $0x48] sm:$0xff]
      %1980 = vset.pattern.permute.xlu0 0
      %1981 = vperm.xlu0 %1980, %v1969
      %v1982 = vpop.permute.xlu0 %1981
      %1985 = vset.pattern.permute.xlu0 0
      %1986 = vperm.xlu0 %1985, %v1970
      %v1987 = vpop.permute.xlu0 %1986
      %1990 = vset.pattern.permute.xlu0 0
      %1991 = vperm.xlu0 %1990, %v1971
      %v1992 = vpop.permute.xlu0 %1991
      %1995 = vset.pattern.permute.xlu0 0
      %1996 = vperm.xlu0 %1995, %v1972
      %v1997 = vpop.permute.xlu0 %1996
      %2000 = vset.pattern.permute.xlu0 0
      %2001 = vperm.xlu0 %2000, %v1973
      %v2002 = vpop.permute.xlu0 %2001
      %2005 = vset.pattern.permute.xlu0 0
      %2006 = vperm.xlu0 %2005, %v1974
      %v2007 = vpop.permute.xlu0 %2006
      %2010 = vset.pattern.permute.xlu0 0
      %2011 = vperm.xlu0 %2010, %v1975
      %v2012 = vpop.permute.xlu0 %2011
      %2015 = vset.pattern.permute.xlu0 0
      %2016 = vperm.xlu0 %2015, %v1976
      %v2017 = vpop.permute.xlu0 %2016
      %2020 = vset.pattern.permute.xlu0 0
      %2021 = vperm.xlu0 %2020, %v1977
      %v2022 = vpop.permute.xlu0 %2021
      %2025 = vset.pattern.permute.xlu0 0
      %2026 = vperm.xlu0 %2025, %v1978
      %v2027 = vpop.permute.xlu0 %2026
      %v2029 = vmul.f32 %v1959, %v1982
      %v2030 = vmul.f32 %v1960, %v1987
      %v2031 = vmul.f32 %v1961, %v1992
      %v2032 = vmul.f32 %v1962, %v1997
      %v2033 = vmul.f32 %v1963, %v2002
      %v2034 = vmul.f32 %v1964, %v2007
      %v2035 = vmul.f32 %v1965, %v2012
      %v2036 = vmul.f32 %v1966, %v2017
      %v2037 = vmul.f32 %v1967, %v2022
      %v2038 = vmul.f32 %v1968, %v2027
      %v2039 = vpack.c.bf16 %v2030, %v2029
      %v2040 = vpack.c.bf16 %v2032, %v2031
      %v2041 = vpack.c.bf16 %v2034, %v2033
      %v2042 = vpack.c.bf16 %v2036, %v2035
      %v2043 = vpack.c.bf16 %v2038, %v2037
      %vm2044 = vcmask 60416
      %2045 = vst.msk [vmem:[#allocation2] sm:$0xf] %vm2044, 0
      %2046 = vst.msk [vmem:[#allocation2 + $0x4] sm:$0xf] %vm2044, 0
      %2047 = vst.msk [vmem:[#allocation2 + $0x8] sm:$0xf] %vm2044, 0
      %2048 = vst.msk [vmem:[#allocation2 + $0xc] sm:$0xf] %vm2044, 0
      %2049 = vst.msk [vmem:[#allocation2 + $0x10] sm:$0xf] %vm2044, 0
      %2050 = vst.msk [vmem:[#allocation2 + $0x14] sm:$0xf] %vm2044, 0
      %2051 = vst.msk [vmem:[#allocation2 + $0x18] sm:$0xf] %vm2044, 0
      %2052 = vst.msk [vmem:[#allocation2 + $0x1c] sm:$0xf] %vm2044, 0
      %2053 = vst.msk [vmem:[#allocation2 + $0x20] sm:$0xf] %vm2044, 0
      %2054 = vst.msk [vmem:[#allocation2 + $0x24] sm:$0xf] %vm2044, 0
      %2055 = vst.msk [vmem:[#allocation2 + $0x28] sm:$0xf] %vm2044, 0
      %2056 = vst.msk [vmem:[#allocation2 + $0x2c] sm:$0xf] %vm2044, 0
      %2057 = vst.msk [vmem:[#allocation2 + $0x30] sm:$0xf] %vm2044, 0
      %vm2058 = vcmask 59392
      %2059 = vst.msk [vmem:[#allocation2 + $0x34] sm:$0x7] %vm2058, 0
      %v2065 = vunpack.c.l.b16 %v2039
      %v2066 = vunpack.c.h.b16 %v2039
      %v2067 = vunpack.c.l.b16 %v2040
      %v2068 = vunpack.c.h.b16 %v2040
      %v2069 = vunpack.c.l.b16 %v2041
      %v2070 = vunpack.c.h.b16 %v2041
      %v2071 = vunpack.c.l.b16 %v2042
      %v2072 = vunpack.c.h.b16 %v2042
      %v2073 = vunpack.c.l.b16 %v2043
      %v2074 = vunpack.c.h.b16 %v2043
      %v2075 = vpack.c.b16 %v2065, %v2065
      %v2076 = vpack.c.b16 %v2066, %v2066
      %v2077 = vpack.c.b16 %v2067, %v2067
      %v2078 = vpack.c.b16 %v2068, %v2068
      %v2079 = vpack.c.b16 %v2069, %v2069
      %v2080 = vpack.c.b16 %v2070, %v2070
      %v2081 = vpack.c.b16 %v2071, %v2071
      %v2082 = vpack.c.b16 %v2072, %v2072
      %v2083 = vpack.c.b16 %v2073, %v2073
      %v2084 = vpack.c.b16 %v2074, %v2074
      %vm2085 = vsmask.f32 1280
      %vm2086 = vsmask.f32 5392
      %vm2087 = vmor %vm2085, %vm2086
      %v2089 = vshrl.u32 %v2075, 16
      %v2091 = vrot.slane %v2089, 6
      %v2092 = vshll.u32 %v2075, 16
      %v2094 = vrot.slane %v2092, 7
      %v2095 = vor.u32 %v2091, %v2094
      %v2096 = vrot.slane %v2095, 4
      %v2098 = vshrl.u32 %v2076, 16
      %v2100 = vrot.slane %v2098, 6
      %v2101 = vshll.u32 %v2076, 16
      %v2103 = vrot.slane %v2101, 7
      %v2104 = vor.u32 %v2100, %v2103
      %v2105 = vsel %vm2087, %v2096, %v2104
      %v2106 = vrot.slane %v2104, 4
      %v2108 = vshrl.u32 %v2077, 16
      %v2110 = vrot.slane %v2108, 6
      %v2111 = vshll.u32 %v2077, 16
      %v2113 = vrot.slane %v2111, 7
      %v2114 = vor.u32 %v2110, %v2113
      %v2115 = vsel %vm2087, %v2106, %v2114
      %v2116 = vrot.slane %v2114, 4
      %v2118 = vshrl.u32 %v2078, 16
      %v2120 = vrot.slane %v2118, 6
      %v2121 = vshll.u32 %v2078, 16
      %v2123 = vrot.slane %v2121, 7
      %v2124 = vor.u32 %v2120, %v2123
      %v2125 = vsel %vm2087, %v2116, %v2124
      %v2126 = vrot.slane %v2124, 4
      %v2128 = vshrl.u32 %v2079, 16
      %v2130 = vrot.slane %v2128, 6
      %v2131 = vshll.u32 %v2079, 16
      %v2133 = vrot.slane %v2131, 7
      %v2134 = vor.u32 %v2130, %v2133
      %v2135 = vsel %vm2087, %v2126, %v2134
      %v2136 = vrot.slane %v2134, 4
      %v2138 = vshrl.u32 %v2080, 16
      %v2140 = vrot.slane %v2138, 6
      %v2141 = vshll.u32 %v2080, 16
      %v2143 = vrot.slane %v2141, 7
      %v2144 = vor.u32 %v2140, %v2143
      %v2145 = vsel %vm2087, %v2136, %v2144
      %v2146 = vrot.slane %v2144, 4
      %v2148 = vshrl.u32 %v2081, 16
      %v2150 = vrot.slane %v2148, 6
      %v2151 = vshll.u32 %v2081, 16
      %v2153 = vrot.slane %v2151, 7
      %v2154 = vor.u32 %v2150, %v2153
      %v2155 = vsel %vm2087, %v2146, %v2154
      %v2156 = vrot.slane %v2154, 4
      %v2158 = vshrl.u32 %v2082, 16
      %v2160 = vrot.slane %v2158, 6
      %v2161 = vshll.u32 %v2082, 16
      %v2163 = vrot.slane %v2161, 7
      %v2164 = vor.u32 %v2160, %v2163
      %v2165 = vsel %vm2087, %v2156, %v2164
      %v2166 = vrot.slane %v2164, 4
      %v2168 = vshrl.u32 %v2083, 16
      %v2170 = vrot.slane %v2168, 6
      %v2171 = vshll.u32 %v2083, 16
      %v2173 = vrot.slane %v2171, 7
      %v2174 = vor.u32 %v2170, %v2173
      %v2175 = vsel %vm2087, %v2166, %v2174
      %v2176 = vrot.slane %v2174, 4
      %v2178 = vshrl.u32 %v2084, 16
      %v2180 = vrot.slane %v2178, 6
      %v2181 = vshll.u32 %v2084, 16
      %v2183 = vrot.slane %v2181, 7
      %v2184 = vor.u32 %v2180, %v2183
      %v2185 = vsel %vm2087, %v2176, %v2184
      %v2186 = vrot.slane %v2184, 4
      %vm2198 = vcmask 60417
      %vm2199 = vsmask.f32 7942
      %vm2200 = vmand %vm2198, %vm2199
      %v2201 = vld [vmem:[#allocation2 + $0x4] sm:$0xe]
      %v2202 = vsel %vm2200, %v2095, %v2201
      %2203 = vst [vmem:[#allocation2 + $0x4] sm:$0xe] %v2202
      %2204 = vst.msk [vmem:[#allocation2 + $0x8] sm:$0xf] %vm2044, %v2105
      %2205 = vst.msk [vmem:[#allocation2 + $0xc] sm:$0xf] %vm2044, %v2115
      %2206 = vst.msk [vmem:[#allocation2 + $0x10] sm:$0xf] %vm2044, %v2125
      %2207 = vst.msk [vmem:[#allocation2 + $0x14] sm:$0xf] %vm2044, %v2135
      %2208 = vst.msk [vmem:[#allocation2 + $0x18] sm:$0xf] %vm2044, %v2145
      %2209 = vst.msk [vmem:[#allocation2 + $0x1c] sm:$0xf] %vm2044, %v2155
      %2210 = vst.msk [vmem:[#allocation2 + $0x20] sm:$0xf] %vm2044, %v2165
      %2211 = vst.msk [vmem:[#allocation2 + $0x24] sm:$0xf] %vm2044, %v2175
      %2212 = vst.msk [vmem:[#allocation2 + $0x28] sm:$0xf] %vm2044, %v2185
      %vm2213 = vcmask 58368
      %vm2214 = vmand %vm2213, %vm2085
      %v2215 = vld [vmem:[#allocation2 + $0x2c] sm:$0x3]
      %v2216 = vsel %vm2214, %v2186, %v2215
      %2217 = vst [vmem:[#allocation2 + $0x2c] sm:$0x3] %v2216
      %2218 = vst.msk [vmem:[#allocation3] sm:$0xff] %vm280, 0.0
      %2219 = vst.msk [vmem:[#allocation3 + $0x8] sm:$0xff] %vm280, 0.0
      %2220 = vst.msk [vmem:[#allocation3 + $0x10] sm:$0xff] %vm280, 0.0
      %2221 = vst.msk [vmem:[#allocation3 + $0x18] sm:$0xff] %vm280, 0.0
      %2222 = vst.msk [vmem:[#allocation3 + $0x20] sm:$0xff] %vm280, 0.0
      %2223 = vst.msk [vmem:[#allocation3 + $0x28] sm:$0xff] %vm280, 0.0
      %2224 = vst.msk [vmem:[#allocation3 + $0x30] sm:$0xff] %vm280, 0.0
      %2225 = vst.msk [vmem:[#allocation3 + $0x38] sm:$0xff] %vm280, 0.0
      %2226 = vst.msk [vmem:[#allocation3 + $0x40] sm:$0xff] %vm280, 0.0
      %2227 = vst.msk [vmem:[#allocation3 + $0x48] sm:$0xff] %vm280, 0.0
      %v2228 = vld [vmem:[#allocation2] sm:$0xf]
      %v2229 = vld [vmem:[#allocation2 + $0x4] sm:$0xf]
      %v2230 = vld [vmem:[#allocation2 + $0x8] sm:$0xf]
      %v2231 = vld [vmem:[#allocation2 + $0xc] sm:$0xf]
      %v2232 = vld [vmem:[#allocation2 + $0x10] sm:$0xf]
      %v2233 = vld [vmem:[#allocation2 + $0x14] sm:$0xf]
      %v2234 = vld [vmem:[#allocation2 + $0x18] sm:$0xf]
      %v2235 = vld [vmem:[#allocation2 + $0x1c] sm:$0xf]
      %v2236 = vld [vmem:[#allocation2 + $0x20] sm:$0xf]
      %v2237 = vld [vmem:[#allocation2 + $0x24] sm:$0xf]
      %v2238 = vld [vmem:[#allocation3] sm:$0xff]
      %v2239 = vld [vmem:[#allocation3 + $0x8] sm:$0xff]
      %v2240 = vld [vmem:[#allocation3 + $0x10] sm:$0xff]
      %v2241 = vld [vmem:[#allocation3 + $0x18] sm:$0xff]
      %v2242 = vld [vmem:[#allocation3 + $0x20] sm:$0xff]
      %v2243 = vld [vmem:[#allocation3 + $0x28] sm:$0xff]
      %v2244 = vld [vmem:[#allocation3 + $0x30] sm:$0xff]
      %v2245 = vld [vmem:[#allocation3 + $0x38] sm:$0xff]
      %v2246 = vld [vmem:[#allocation3 + $0x40] sm:$0xff]
      %v2247 = vld [vmem:[#allocation3 + $0x48] sm:$0xff]
      %v2248 = vld [vmem:[%s2] sm:$0xf]
      %v2259 = vunpack.c.l.b16 %v2228
      %v2260 = vunpack.c.l.b16 %v2229
      %v2261 = vunpack.c.l.b16 %v2230
      %v2262 = vunpack.c.l.b16 %v2231
      %v2263 = vunpack.c.l.b16 %v2232
      %v2264 = vunpack.c.l.b16 %v2233
      %v2265 = vunpack.c.l.b16 %v2234
      %v2266 = vunpack.c.l.b16 %v2235
      %v2267 = vunpack.c.l.b16 %v2236
      %v2268 = vunpack.c.l.b16 %v2237
      %v2269 = vpack.c.b16 %v2260, %v2259
      %v2270 = vpack.c.b16 %v2262, %v2261
      %v2271 = vpack.c.b16 %v2264, %v2263
      %v2272 = vpack.c.b16 %v2266, %v2265
      %v2273 = vpack.c.b16 %v2268, %v2267
      %v2275 = vsel %vm280, %v2269, 0
      %v2278 = vsel %vm280, %v2270, 0
      %v2281 = vsel %vm280, %v2271, 0
      %v2284 = vsel %vm280, %v2272, 0
      %v2287 = vsel %vm280, %v2273, 0
      %vm2289 = vcmask 1043456
      %v2291 = vsel %vm2289, %v2248, 0
      %2293 = vmatprep.subr.bf16.mxu0 0
      %2294 = vmatpush1.bf16.msra.mxu0 %v2291
      %2295 = vmatprep.subr.bf16.mxu0 0
      %2296 = vmatpush1.bf16.msra.mxu0 0
      %2297 = vmatprep.subr.bf16.mxu0 0
      %2298 = vmatpush1.bf16.msra.mxu0 0
      %2299 = vmatprep.subr.bf16.mxu0 0
      %2300 = vmatpush1.bf16.msra.mxu0 0
      %2301 = vmatprep.subr.bf16.mxu0 0
      %2302 = vmatpush1.bf16.msra.mxu0 0
      %2303 = vmatprep.subr.bf16.mxu0 0
      %2304 = vmatpush1.bf16.msra.mxu0 0
      %2305 = vmatprep.subr.bf16.mxu0 0
      %2306 = vmatpush1.bf16.msra.mxu0 0
      %2307 = vmatprep.subr.bf16.mxu0 0
      %2308 = vmatpush1.bf16.msra.mxu0 0
      %2309 = vmatprep.subr.bf16.mxu0 0
      %2310 = vmatpush1.bf16.msra.mxu0 0
      %2311 = vmatprep.subr.bf16.mxu0 0
      %2312 = vmatpush1.bf16.msra.mxu0 0
      %2313 = vmatprep.subr.bf16.mxu0 0
      %2314 = vmatpush1.bf16.msra.mxu0 0
      %2315 = vmatprep.subr.bf16.mxu0 0
      %2316 = vmatpush1.bf16.msra.mxu0 0
      %2317 = vmatprep.subr.bf16.mxu0 0
      %2318 = vmatpush1.bf16.msra.mxu0 0
      %2319 = vmatprep.subr.bf16.mxu0 0
      %2320 = vmatpush1.bf16.msra.mxu0 0
      %2321 = vmatprep.subr.bf16.mxu0 0
      %2322 = vmatpush1.bf16.msra.mxu0 0
      %2323 = vmatprep.subr.bf16.mxu0 0
      %2324 = vmatpush1.bf16.msra.mxu0 0
      %2325 = vmatprep.mubr.bf16.mxu0 0
      %2326 = vmatmul.mubr.bf16.gmra.mrb[0].mxu0 %v2275
      %v2327 = vpop.f32.mrb[0].mxu0
      %v2328 = vadd.f32 0.0, %v2327
      %v2329 = vpop.f32.mrb[0].mxu0
      %v2330 = vpop.f32.mrb[0].mxu0
      %v2331 = vadd.f32 0.0, %v2330
      %v2332 = vpop.f32.mrb[0].mxu0
      %2333 = vmatprep.mubr.bf16.mxu0 0
      %2334 = vmatmul.mubr.bf16.gmra.mrb[0].mxu0 %v2278
      %v2335 = vpop.f32.mrb[0].mxu0
      %v2336 = vadd.f32 0.0, %v2335
      %v2337 = vpop.f32.mrb[0].mxu0
      %v2338 = vpop.f32.mrb[0].mxu0
      %v2339 = vadd.f32 0.0, %v2338
      %v2340 = vpop.f32.mrb[0].mxu0
      %2341 = vmatprep.mubr.bf16.mxu0 0
      %2342 = vmatmul.mubr.bf16.gmra.mrb[0].mxu0 %v2281
      %v2343 = vpop.f32.mrb[0].mxu0
      %v2344 = vadd.f32 0.0, %v2343
      %v2345 = vpop.f32.mrb[0].mxu0
      %v2346 = vpop.f32.mrb[0].mxu0
      %v2347 = vadd.f32 0.0, %v2346
      %v2348 = vpop.f32.mrb[0].mxu0
      %2349 = vmatprep.mubr.bf16.mxu0 0
      %2350 = vmatmul.mubr.bf16.gmra.mrb[0].mxu0 %v2284
      %v2351 = vpop.f32.mrb[0].mxu0
      %v2352 = vadd.f32 0.0, %v2351
      %v2353 = vpop.f32.mrb[0].mxu0
      %v2354 = vpop.f32.mrb[0].mxu0
      %v2355 = vadd.f32 0.0, %v2354
      %v2356 = vpop.f32.mrb[0].mxu0
      %2357 = vmatprep.mubr.bf16.mxu0 0
      %2358 = vmatmul.mubr.bf16.gmra.mrb[0].mxu0 %v2287
      %v2359 = vpop.f32.mrb[0].mxu0
      %v2360 = vadd.f32 0.0, %v2359
      %v2361 = vpop.f32.mrb[0].mxu0
      %v2362 = vpop.f32.mrb[0].mxu0
      %v2363 = vadd.f32 0.0, %v2362
      %v2364 = vpop.f32.mrb[0].mxu0
      %2365 = vdwg.mxu0
      %v2366 = vadd.f32 %v2238, %v2328
      %v2367 = vadd.f32 %v2239, %v2331
      %v2368 = vadd.f32 %v2240, %v2336
      %v2369 = vadd.f32 %v2241, %v2339
      %v2370 = vadd.f32 %v2242, %v2344
      %v2371 = vadd.f32 %v2243, %v2347
      %v2372 = vadd.f32 %v2244, %v2352
      %v2373 = vadd.f32 %v2245, %v2355
      %v2374 = vadd.f32 %v2246, %v2360
      %v2375 = vadd.f32 %v2247, %v2363
      %2376 = vst.msk [vmem:[#allocation3] sm:$0xff] %vm280, %v2366
      %2377 = vst.msk [vmem:[#allocation3 + $0x8] sm:$0xff] %vm280, %v2367
      %2378 = vst.msk [vmem:[#allocation3 + $0x10] sm:$0xff] %vm280, %v2368
      %2379 = vst.msk [vmem:[#allocation3 + $0x18] sm:$0xff] %vm280, %v2369
      %2380 = vst.msk [vmem:[#allocation3 + $0x20] sm:$0xff] %vm280, %v2370
      %2381 = vst.msk [vmem:[#allocation3 + $0x28] sm:$0xff] %vm280, %v2371
      %2382 = vst.msk [vmem:[#allocation3 + $0x30] sm:$0xff] %vm280, %v2372
      %2383 = vst.msk [vmem:[#allocation3 + $0x38] sm:$0xff] %vm280, %v2373
      %2384 = vst.msk [vmem:[#allocation3 + $0x40] sm:$0xff] %vm280, %v2374
      %2385 = vst.msk [vmem:[#allocation3 + $0x48] sm:$0xff] %vm280, %v2375
      %v2386 = vld [vmem:[#allocation2] sm:$0xf]
      %v2387 = vld [vmem:[#allocation2 + $0x4] sm:$0xf]
      %v2388 = vld [vmem:[#allocation2 + $0x8] sm:$0xf]
      %v2389 = vld [vmem:[#allocation2 + $0xc] sm:$0xf]
      %v2390 = vld [vmem:[#allocation2 + $0x10] sm:$0xf]
      %v2391 = vld [vmem:[#allocation2 + $0x14] sm:$0xf]
      %v2392 = vld [vmem:[#allocation2 + $0x18] sm:$0xf]
      %v2393 = vld [vmem:[#allocation2 + $0x1c] sm:$0xf]
      %v2394 = vld [vmem:[#allocation2 + $0x20] sm:$0xf]
      %v2395 = vld [vmem:[#allocation2 + $0x24] sm:$0xf]
      %v2396 = vld [vmem:[#allocation2 + $0x28] sm:$0x1]
      %v2397 = vld [vmem:[#allocation3] sm:$0xff]
      %v2398 = vld [vmem:[#allocation3 + $0x8] sm:$0xff]
      %v2399 = vld [vmem:[#allocation3 + $0x10] sm:$0xff]
      %v2400 = vld [vmem:[#allocation3 + $0x18] sm:$0xff]
      %v2401 = vld [vmem:[#allocation3 + $0x20] sm:$0xff]
      %v2402 = vld [vmem:[#allocation3 + $0x28] sm:$0xff]
      %v2403 = vld [vmem:[#allocation3 + $0x30] sm:$0xff]
      %v2404 = vld [vmem:[#allocation3 + $0x38] sm:$0xff]
      %v2405 = vld [vmem:[#allocation3 + $0x40] sm:$0xff]
      %v2406 = vld [vmem:[#allocation3 + $0x48] sm:$0xff]
      %s2407 = scalar_lea.vmem %s2, 4
      %v2408 = vld [vmem:[%s2407] sm:$0xf]
      %v2420 = vunpack.c.l.b16 %v2386
      %v2421 = vunpack.c.l.b16 %v2387
      %v2422 = vunpack.c.l.b16 %v2388
      %v2423 = vunpack.c.l.b16 %v2389
      %v2424 = vunpack.c.l.b16 %v2390
      %v2425 = vunpack.c.l.b16 %v2391
      %v2426 = vunpack.c.l.b16 %v2392
      %v2427 = vunpack.c.l.b16 %v2393
      %v2428 = vunpack.c.l.b16 %v2394
      %v2429 = vunpack.c.l.b16 %v2395
      %v2430 = vunpack.c.l.b16 %v2396
      %v2431 = vpack.c.b16 %v2421, %v2420
      %v2432 = vpack.c.b16 %v2423, %v2422
      %v2433 = vpack.c.b16 %v2425, %v2424
      %v2434 = vpack.c.b16 %v2427, %v2426
      %v2435 = vpack.c.b16 %v2429, %v2428
      %v2436 = vpack.c.b16 %v2430, %v2430
      %v2438 = vshrl.u32 %v2431, 16
      %v2440 = vshll.u32 %v2431, 16
      %v2442 = vrot.slane %v2440, 1
      %v2443 = vor.u32 %v2438, %v2442
      %v2445 = vshll.u32 %v2432, 16
      %v2447 = vrot.slane %v2445, 1
      %v2448 = vsel %vm675, %v2443, %v2447
      %v2449 = vshrl.u32 %v2432, 16
      %v2451 = vor.u32 %v2449, %v2447
      %v2453 = vshll.u32 %v2433, 16
      %v2455 = vrot.slane %v2453, 1
      %v2456 = vsel %vm675, %v2451, %v2455
      %v2457 = vshrl.u32 %v2433, 16
      %v2459 = vor.u32 %v2457, %v2455
      %v2461 = vshll.u32 %v2434, 16
      %v2463 = vrot.slane %v2461, 1
      %v2464 = vsel %vm675, %v2459, %v2463
      %v2465 = vshrl.u32 %v2434, 16
      %v2467 = vor.u32 %v2465, %v2463
      %v2469 = vshll.u32 %v2435, 16
      %v2471 = vrot.slane %v2469, 1
      %v2472 = vsel %vm675, %v2467, %v2471
      %v2473 = vshrl.u32 %v2435, 16
      %v2475 = vor.u32 %v2473, %v2471
      %v2477 = vshll.u32 %v2436, 16
      %v2479 = vrot.slane %v2477, 1
      %v2480 = vsel %vm675, %v2475, %v2479
      %v2482 = vsel %vm280, %v2448, 0
      %v2485 = vsel %vm280, %v2456, 0
      %v2488 = vsel %vm280, %v2464, 0
      %v2491 = vsel %vm280, %v2472, 0
      %v2494 = vsel %vm280, %v2480, 0
      %v2497 = vsel %vm2289, %v2408, 0
      %2499 = vmatprep.subr.bf16.mxu0 0
      %2500 = vmatpush1.bf16.msra.mxu0 %v2497
      %2501 = vmatprep.subr.bf16.mxu0 0
      %2502 = vmatpush1.bf16.msra.mxu0 0
      %2503 = vmatprep.subr.bf16.mxu0 0
      %2504 = vmatpush1.bf16.msra.mxu0 0
      %2505 = vmatprep.subr.bf16.mxu0 0
      %2506 = vmatpush1.bf16.msra.mxu0 0
      %2507 = vmatprep.subr.bf16.mxu0 0
      %2508 = vmatpush1.bf16.msra.mxu0 0
      %2509 = vmatprep.subr.bf16.mxu0 0
      %2510 = vmatpush1.bf16.msra.mxu0 0
      %2511 = vmatprep.subr.bf16.mxu0 0
      %2512 = vmatpush1.bf16.msra.mxu0 0
      %2513 = vmatprep.subr.bf16.mxu0 0
      %2514 = vmatpush1.bf16.msra.mxu0 0
      %2515 = vmatprep.subr.bf16.mxu0 0
      %2516 = vmatpush1.bf16.msra.mxu0 0
      %2517 = vmatprep.subr.bf16.mxu0 0
      %2518 = vmatpush1.bf16.msra.mxu0 0
      %2519 = vmatprep.subr.bf16.mxu0 0
      %2520 = vmatpush1.bf16.msra.mxu0 0
      %2521 = vmatprep.subr.bf16.mxu0 0
      %2522 = vmatpush1.bf16.msra.mxu0 0
      %2523 = vmatprep.subr.bf16.mxu0 0
      %2524 = vmatpush1.bf16.msra.mxu0 0
      %2525 = vmatprep.subr.bf16.mxu0 0
      %2526 = vmatpush1.bf16.msra.mxu0 0
      %2527 = vmatprep.subr.bf16.mxu0 0
      %2528 = vmatpush1.bf16.msra.mxu0 0
      %2529 = vmatprep.subr.bf16.mxu0 0
      %2530 = vmatpush1.bf16.msra.mxu0 0
      %2531 = vmatprep.mubr.bf16.mxu0 0
      %2532 = vmatmul.mubr.bf16.gmra.mrb[0].mxu0 %v2482
      %v2533 = vpop.f32.mrb[0].mxu0
      %v2534 = vadd.f32 0.0, %v2533
      %v2535 = vpop.f32.mrb[0].mxu0
      %v2536 = vpop.f32.mrb[0].mxu0
      %v2537 = vadd.f32 0.0, %v2536
      %v2538 = vpop.f32.mrb[0].mxu0
      %2539 = vmatprep.mubr.bf16.mxu0 0
      %2540 = vmatmul.mubr.bf16.gmra.mrb[0].mxu0 %v2485
      %v2541 = vpop.f32.mrb[0].mxu0
      %v2542 = vadd.f32 0.0, %v2541
      %v2543 = vpop.f32.mrb[0].mxu0
      %v2544 = vpop.f32.mrb[0].mxu0
      %v2545 = vadd.f32 0.0, %v2544
      %v2546 = vpop.f32.mrb[0].mxu0
      %2547 = vmatprep.mubr.bf16.mxu0 0
      %2548 = vmatmul.mubr.bf16.gmra.mrb[0].mxu0 %v2488
      %v2549 = vpop.f32.mrb[0].mxu0
      %v2550 = vadd.f32 0.0, %v2549
      %v2551 = vpop.f32.mrb[0].mxu0
      %v2552 = vpop.f32.mrb[0].mxu0
      %v2553 = vadd.f32 0.0, %v2552
      %v2554 = vpop.f32.mrb[0].mxu0
      %2555 = vmatprep.mubr.bf16.mxu0 0
      %2556 = vmatmul.mubr.bf16.gmra.mrb[0].mxu0 %v2491
      %v2557 = vpop.f32.mrb[0].mxu0
      %v2558 = vadd.f32 0.0, %v2557
      %v2559 = vpop.f32.mrb[0].mxu0
      %v2560 = vpop.f32.mrb[0].mxu0
      %v2561 = vadd.f32 0.0, %v2560
      %v2562 = vpop.f32.mrb[0].mxu0
      %2563 = vmatprep.mubr.bf16.mxu0 0
      %2564 = vmatmul.mubr.bf16.gmra.mrb[0].mxu0 %v2494
      %v2565 = vpop.f32.mrb[0].mxu0
      %v2566 = vadd.f32 0.0, %v2565
      %v2567 = vpop.f32.mrb[0].mxu0
      %v2568 = vpop.f32.mrb[0].mxu0
      %v2569 = vadd.f32 0.0, %v2568
      %v2570 = vpop.f32.mrb[0].mxu0
      %2571 = vdwg.mxu0
      %v2572 = vadd.f32 %v2397, %v2534
      %v2573 = vadd.f32 %v2398, %v2537
      %v2574 = vadd.f32 %v2399, %v2542
      %v2575 = vadd.f32 %v2400, %v2545
      %v2576 = vadd.f32 %v2401, %v2550
      %v2577 = vadd.f32 %v2402, %v2553
      %v2578 = vadd.f32 %v2403, %v2558
      %v2579 = vadd.f32 %v2404, %v2561
      %v2580 = vadd.f32 %v2405, %v2566
      %v2581 = vadd.f32 %v2406, %v2569
      %2582 = vst.msk [vmem:[#allocation3] sm:$0xff] %vm280, %v2572
      %2583 = vst.msk [vmem:[#allocation3 + $0x8] sm:$0xff] %vm280, %v2573
      %2584 = vst.msk [vmem:[#allocation3 + $0x10] sm:$0xff] %vm280, %v2574
      %2585 = vst.msk [vmem:[#allocation3 + $0x18] sm:$0xff] %vm280, %v2575
      %2586 = vst.msk [vmem:[#allocation3 + $0x20] sm:$0xff] %vm280, %v2576
      %2587 = vst.msk [vmem:[#allocation3 + $0x28] sm:$0xff] %vm280, %v2577
      %2588 = vst.msk [vmem:[#allocation3 + $0x30] sm:$0xff] %vm280, %v2578
      %2589 = vst.msk [vmem:[#allocation3 + $0x38] sm:$0xff] %vm280, %v2579
      %2590 = vst.msk [vmem:[#allocation3 + $0x40] sm:$0xff] %vm280, %v2580
      %2591 = vst.msk [vmem:[#allocation3 + $0x48] sm:$0xff] %vm280, %v2581
      %v2592 = vld [vmem:[#allocation2] sm:$0xe]
      %v2593 = vld [vmem:[#allocation2 + $0x4] sm:$0xf]
      %v2594 = vld [vmem:[#allocation2 + $0x8] sm:$0xf]
      %v2595 = vld [vmem:[#allocation2 + $0xc] sm:$0xf]
      %v2596 = vld [vmem:[#allocation2 + $0x10] sm:$0xf]
      %v2597 = vld [vmem:[#allocation2 + $0x14] sm:$0xf]
      %v2598 = vld [vmem:[#allocation2 + $0x18] sm:$0xf]
      %v2599 = vld [vmem:[#allocation2 + $0x1c] sm:$0xf]
      %v2600 = vld [vmem:[#allocation2 + $0x20] sm:$0xf]
      %v2601 = vld [vmem:[#allocation2 + $0x24] sm:$0xf]
      %v2602 = vld [vmem:[#allocation2 + $0x28] sm:$0x1]
      %v2603 = vld [vmem:[#allocation3] sm:$0xff]
      %v2604 = vld [vmem:[#allocation3 + $0x8] sm:$0xff]
      %v2605 = vld [vmem:[#allocation3 + $0x10] sm:$0xff]
      %v2606 = vld [vmem:[#allocation3 + $0x18] sm:$0xff]
      %v2607 = vld [vmem:[#allocation3 + $0x20] sm:$0xff]
      %v2608 = vld [vmem:[#allocation3 + $0x28] sm:$0xff]
      %v2609 = vld [vmem:[#allocation3 + $0x30] sm:$0xff]
      %v2610 = vld [vmem:[#allocation3 + $0x38] sm:$0xff]
      %v2611 = vld [vmem:[#allocation3 + $0x40] sm:$0xff]
      %v2612 = vld [vmem:[#allocation3 + $0x48] sm:$0xff]
      %s2613 = scalar_lea.vmem %s2, 8
      %v2614 = vld [vmem:[%s2613] sm:$0xf]
      %v2626 = vunpack.c.l.b16 %v2592
      %v2627 = vunpack.c.l.b16 %v2593
      %v2628 = vunpack.c.l.b16 %v2594
      %v2629 = vunpack.c.l.b16 %v2595
      %v2630 = vunpack.c.l.b16 %v2596
      %v2631 = vunpack.c.l.b16 %v2597
      %v2632 = vunpack.c.l.b16 %v2598
      %v2633 = vunpack.c.l.b16 %v2599
      %v2634 = vunpack.c.l.b16 %v2600
      %v2635 = vunpack.c.l.b16 %v2601
      %v2636 = vunpack.c.l.b16 %v2602
      %v2637 = vpack.c.b16 %v2627, %v2626
      %v2638 = vpack.c.b16 %v2629, %v2628
      %v2639 = vpack.c.b16 %v2631, %v2630
      %v2640 = vpack.c.b16 %v2633, %v2632
      %v2641 = vpack.c.b16 %v2635, %v2634
      %v2642 = vpack.c.b16 %v2636, %v2636
      %v2643 = vrot.slane %v2637, 1
      %v2644 = vrot.slane %v2638, 1
      %v2645 = vsel %vm1419, %v2643, %v2644
      %v2646 = vrot.slane %v2639, 1
      %v2647 = vsel %vm1419, %v2644, %v2646
      %v2648 = vrot.slane %v2640, 1
      %v2649 = vsel %vm1419, %v2646, %v2648
      %v2650 = vrot.slane %v2641, 1
      %v2651 = vsel %vm1419, %v2648, %v2650
      %v2652 = vrot.slane %v2642, 1
      %v2653 = vsel %vm1419, %v2650, %v2652
      %v2655 = vsel %vm280, %v2645, 0
      %v2658 = vsel %vm280, %v2647, 0
      %v2661 = vsel %vm280, %v2649, 0
      %v2664 = vsel %vm280, %v2651, 0
      %v2667 = vsel %vm280, %v2653, 0
      %v2670 = vsel %vm2289, %v2614, 0
      %2672 = vmatprep.subr.bf16.mxu0 0
      %2673 = vmatpush1.bf16.msra.mxu0 %v2670
      %2674 = vmatprep.subr.bf16.mxu0 0
      %2675 = vmatpush1.bf16.msra.mxu0 0
      %2676 = vmatprep.subr.bf16.mxu0 0
      %2677 = vmatpush1.bf16.msra.mxu0 0
      %2678 = vmatprep.subr.bf16.mxu0 0
      %2679 = vmatpush1.bf16.msra.mxu0 0
      %2680 = vmatprep.subr.bf16.mxu0 0
      %2681 = vmatpush1.bf16.msra.mxu0 0
      %2682 = vmatprep.subr.bf16.mxu0 0
      %2683 = vmatpush1.bf16.msra.mxu0 0
      %2684 = vmatprep.subr.bf16.mxu0 0
      %2685 = vmatpush1.bf16.msra.mxu0 0
      %2686 = vmatprep.subr.bf16.mxu0 0
      %2687 = vmatpush1.bf16.msra.mxu0 0
      %2688 = vmatprep.subr.bf16.mxu0 0
      %2689 = vmatpush1.bf16.msra.mxu0 0
      %2690 = vmatprep.subr.bf16.mxu0 0
      %2691 = vmatpush1.bf16.msra.mxu0 0
      %2692 = vmatprep.subr.bf16.mxu0 0
      %2693 = vmatpush1.bf16.msra.mxu0 0
      %2694 = vmatprep.subr.bf16.mxu0 0
      %2695 = vmatpush1.bf16.msra.mxu0 0
      %2696 = vmatprep.subr.bf16.mxu0 0
      %2697 = vmatpush1.bf16.msra.mxu0 0
      %2698 = vmatprep.subr.bf16.mxu0 0
      %2699 = vmatpush1.bf16.msra.mxu0 0
      %2700 = vmatprep.subr.bf16.mxu0 0
      %2701 = vmatpush1.bf16.msra.mxu0 0
      %2702 = vmatprep.subr.bf16.mxu0 0
      %2703 = vmatpush1.bf16.msra.mxu0 0
      %2704 = vmatprep.mubr.bf16.mxu0 0
      %2705 = vmatmul.mubr.bf16.gmra.mrb[0].mxu0 %v2655
      %v2706 = vpop.f32.mrb[0].mxu0
      %v2707 = vadd.f32 0.0, %v2706
      %v2708 = vpop.f32.mrb[0].mxu0
      %v2709 = vpop.f32.mrb[0].mxu0
      %v2710 = vadd.f32 0.0, %v2709
      %v2711 = vpop.f32.mrb[0].mxu0
      %2712 = vmatprep.mubr.bf16.mxu0 0
      %2713 = vmatmul.mubr.bf16.gmra.mrb[0].mxu0 %v2658
      %v2714 = vpop.f32.mrb[0].mxu0
      %v2715 = vadd.f32 0.0, %v2714
      %v2716 = vpop.f32.mrb[0].mxu0
      %v2717 = vpop.f32.mrb[0].mxu0
      %v2718 = vadd.f32 0.0, %v2717
      %v2719 = vpop.f32.mrb[0].mxu0
      %2720 = vmatprep.mubr.bf16.mxu0 0
      %2721 = vmatmul.mubr.bf16.gmra.mrb[0].mxu0 %v2661
      %v2722 = vpop.f32.mrb[0].mxu0
      %v2723 = vadd.f32 0.0, %v2722
      %v2724 = vpop.f32.mrb[0].mxu0
      %v2725 = vpop.f32.mrb[0].mxu0
      %v2726 = vadd.f32 0.0, %v2725
      %v2727 = vpop.f32.mrb[0].mxu0
      %2728 = vmatprep.mubr.bf16.mxu0 0
      %2729 = vmatmul.mubr.bf16.gmra.mrb[0].mxu0 %v2664
      %v2730 = vpop.f32.mrb[0].mxu0
      %v2731 = vadd.f32 0.0, %v2730
      %v2732 = vpop.f32.mrb[0].mxu0
      %v2733 = vpop.f32.mrb[0].mxu0
      %v2734 = vadd.f32 0.0, %v2733
      %v2735 = vpop.f32.mrb[0].mxu0
      %2736 = vmatprep.mubr.bf16.mxu0 0
      %2737 = vmatmul.mubr.bf16.gmra.mrb[0].mxu0 %v2667
      %v2738 = vpop.f32.mrb[0].mxu0
      %v2739 = vadd.f32 0.0, %v2738
      %v2740 = vpop.f32.mrb[0].mxu0
      %v2741 = vpop.f32.mrb[0].mxu0
      %v2742 = vadd.f32 0.0, %v2741
      %v2743 = vpop.f32.mrb[0].mxu0
      %2744 = vdwg.mxu0
      %v2745 = vadd.f32 %v2603, %v2707
      %v2746 = vadd.f32 %v2604, %v2710
      %v2747 = vadd.f32 %v2605, %v2715
      %v2748 = vadd.f32 %v2606, %v2718
      %v2749 = vadd.f32 %v2607, %v2723
      %v2750 = vadd.f32 %v2608, %v2726
      %v2751 = vadd.f32 %v2609, %v2731
      %v2752 = vadd.f32 %v2610, %v2734
      %v2753 = vadd.f32 %v2611, %v2739
      %v2754 = vadd.f32 %v2612, %v2742
      %2755 = vst.msk [vmem:[#allocation3] sm:$0xff] %vm280, %v2745
      %2756 = vst.msk [vmem:[#allocation3 + $0x8] sm:$0xff] %vm280, %v2746
      %2757 = vst.msk [vmem:[#allocation3 + $0x10] sm:$0xff] %vm280, %v2747
      %2758 = vst.msk [vmem:[#allocation3 + $0x18] sm:$0xff] %vm280, %v2748
      %2759 = vst.msk [vmem:[#allocation3 + $0x20] sm:$0xff] %vm280, %v2749
      %2760 = vst.msk [vmem:[#allocation3 + $0x28] sm:$0xff] %vm280, %v2750
      %2761 = vst.msk [vmem:[#allocation3 + $0x30] sm:$0xff] %vm280, %v2751
      %2762 = vst.msk [vmem:[#allocation3 + $0x38] sm:$0xff] %vm280, %v2752
      %2763 = vst.msk [vmem:[#allocation3 + $0x40] sm:$0xff] %vm280, %v2753
      %2764 = vst.msk [vmem:[#allocation3 + $0x48] sm:$0xff] %vm280, %v2754
      %v2765 = vld [vmem:[#allocation2 + $0x4] sm:$0xe]
      %v2766 = vld [vmem:[#allocation2 + $0x8] sm:$0xf]
      %v2767 = vld [vmem:[#allocation2 + $0xc] sm:$0xf]
      %v2768 = vld [vmem:[#allocation2 + $0x10] sm:$0xf]
      %v2769 = vld [vmem:[#allocation2 + $0x14] sm:$0xf]
      %v2770 = vld [vmem:[#allocation2 + $0x18] sm:$0xf]
      %v2771 = vld [vmem:[#allocation2 + $0x1c] sm:$0xf]
      %v2772 = vld [vmem:[#allocation2 + $0x20] sm:$0xf]
      %v2773 = vld [vmem:[#allocation2 + $0x24] sm:$0xf]
      %v2774 = vld [vmem:[#allocation2 + $0x28] sm:$0xf]
      %v2775 = vld [vmem:[#allocation2 + $0x2c] sm:$0x1]
      %v2776 = vld [vmem:[#allocation3] sm:$0xff]
      %v2777 = vld [vmem:[#allocation3 + $0x8] sm:$0xff]
      %v2778 = vld [vmem:[#allocation3 + $0x10] sm:$0xff]
      %v2779 = vld [vmem:[#allocation3 + $0x18] sm:$0xff]
      %v2780 = vld [vmem:[#allocation3 + $0x20] sm:$0xff]
      %v2781 = vld [vmem:[#allocation3 + $0x28] sm:$0xff]
      %v2782 = vld [vmem:[#allocation3 + $0x30] sm:$0xff]
      %v2783 = vld [vmem:[#allocation3 + $0x38] sm:$0xff]
      %v2784 = vld [vmem:[#allocation3 + $0x40] sm:$0xff]
      %v2785 = vld [vmem:[#allocation3 + $0x48] sm:$0xff]
      %s2786 = scalar_lea.vmem %s2, 12
      %v2787 = vld [vmem:[%s2786] sm:$0xf]
      %v2799 = vunpack.c.l.b16 %v2765
      %v2800 = vunpack.c.l.b16 %v2766
      %v2801 = vunpack.c.l.b16 %v2767
      %v2802 = vunpack.c.l.b16 %v2768
      %v2803 = vunpack.c.l.b16 %v2769
      %v2804 = vunpack.c.l.b16 %v2770
      %v2805 = vunpack.c.l.b16 %v2771
      %v2806 = vunpack.c.l.b16 %v2772
      %v2807 = vunpack.c.l.b16 %v2773
      %v2808 = vunpack.c.l.b16 %v2774
      %v2809 = vunpack.c.l.b16 %v2775
      %v2810 = vpack.c.b16 %v2800, %v2799
      %v2811 = vpack.c.b16 %v2802, %v2801
      %v2812 = vpack.c.b16 %v2804, %v2803
      %v2813 = vpack.c.b16 %v2806, %v2805
      %v2814 = vpack.c.b16 %v2808, %v2807
      %v2815 = vpack.c.b16 %v2809, %v2809
      %v2816 = vrot.slane %v2810, 1
      %v2817 = vrot.slane %v2811, 1
      %v2818 = vsel %vm1419, %v2816, %v2817
      %v2819 = vrot.slane %v2812, 1
      %v2820 = vsel %vm1419, %v2817, %v2819
      %v2821 = vrot.slane %v2813, 1
      %v2822 = vsel %vm1419, %v2819, %v2821
      %v2823 = vrot.slane %v2814, 1
      %v2824 = vsel %vm1419, %v2821, %v2823
      %v2825 = vrot.slane %v2815, 1
      %v2826 = vsel %vm1419, %v2823, %v2825
      %v2828 = vsel %vm280, %v2818, 0
      %v2831 = vsel %vm280, %v2820, 0
      %v2834 = vsel %vm280, %v2822, 0
      %v2837 = vsel %vm280, %v2824, 0
      %v2840 = vsel %vm280, %v2826, 0
      %v2843 = vsel %vm2289, %v2787, 0
      %2845 = vmatprep.subr.bf16.mxu0 0
      %2846 = vmatpush1.bf16.msra.mxu0 %v2843
      %2847 = vmatprep.subr.bf16.mxu0 0
      %2848 = vmatpush1.bf16.msra.mxu0 0
      %2849 = vmatprep.subr.bf16.mxu0 0
      %2850 = vmatpush1.bf16.msra.mxu0 0
      %2851 = vmatprep.subr.bf16.mxu0 0
      %2852 = vmatpush1.bf16.msra.mxu0 0
      %2853 = vmatprep.subr.bf16.mxu0 0
      %2854 = vmatpush1.bf16.msra.mxu0 0
      %2855 = vmatprep.subr.bf16.mxu0 0
      %2856 = vmatpush1.bf16.msra.mxu0 0
      %2857 = vmatprep.subr.bf16.mxu0 0
      %2858 = vmatpush1.bf16.msra.mxu0 0
      %2859 = vmatprep.subr.bf16.mxu0 0
      %2860 = vmatpush1.bf16.msra.mxu0 0
      %2861 = vmatprep.subr.bf16.mxu0 0
      %2862 = vmatpush1.bf16.msra.mxu0 0
      %2863 = vmatprep.subr.bf16.mxu0 0
      %2864 = vmatpush1.bf16.msra.mxu0 0
      %2865 = vmatprep.subr.bf16.mxu0 0
      %2866 = vmatpush1.bf16.msra.mxu0 0
      %2867 = vmatprep.subr.bf16.mxu0 0
      %2868 = vmatpush1.bf16.msra.mxu0 0
      %2869 = vmatprep.subr.bf16.mxu0 0
      %2870 = vmatpush1.bf16.msra.mxu0 0
      %2871 = vmatprep.subr.bf16.mxu0 0
      %2872 = vmatpush1.bf16.msra.mxu0 0
      %2873 = vmatprep.subr.bf16.mxu0 0
      %2874 = vmatpush1.bf16.msra.mxu0 0
      %2875 = vmatprep.subr.bf16.mxu0 0
      %2876 = vmatpush1.bf16.msra.mxu0 0
      %2877 = vmatprep.mubr.bf16.mxu0 0
      %2878 = vmatmul.mubr.bf16.gmra.mrb[0].mxu0 %v2828
      %v2879 = vpop.f32.mrb[0].mxu0
      %v2880 = vadd.f32 0.0, %v2879
      %v2881 = vpop.f32.mrb[0].mxu0
      %v2882 = vpop.f32.mrb[0].mxu0
      %v2883 = vadd.f32 0.0, %v2882
      %v2884 = vpop.f32.mrb[0].mxu0
      %2885 = vmatprep.mubr.bf16.mxu0 0
      %2886 = vmatmul.mubr.bf16.gmra.mrb[0].mxu0 %v2831
      %v2887 = vpop.f32.mrb[0].mxu0
      %v2888 = vadd.f32 0.0, %v2887
      %v2889 = vpop.f32.mrb[0].mxu0
      %v2890 = vpop.f32.mrb[0].mxu0
      %v2891 = vadd.f32 0.0, %v2890
      %v2892 = vpop.f32.mrb[0].mxu0
      %2893 = vmatprep.mubr.bf16.mxu0 0
      %2894 = vmatmul.mubr.bf16.gmra.mrb[0].mxu0 %v2834
      %v2895 = vpop.f32.mrb[0].mxu0
      %v2896 = vadd.f32 0.0, %v2895
      %v2897 = vpop.f32.mrb[0].mxu0
      %v2898 = vpop.f32.mrb[0].mxu0
      %v2899 = vadd.f32 0.0, %v2898
      %v2900 = vpop.f32.mrb[0].mxu0
      %2901 = vmatprep.mubr.bf16.mxu0 0
      %2902 = vmatmul.mubr.bf16.gmra.mrb[0].mxu0 %v2837
      %v2903 = vpop.f32.mrb[0].mxu0
      %v2904 = vadd.f32 0.0, %v2903
      %v2905 = vpop.f32.mrb[0].mxu0
      %v2906 = vpop.f32.mrb[0].mxu0
      %v2907 = vadd.f32 0.0, %v2906
      %v2908 = vpop.f32.mrb[0].mxu0
      %2909 = vmatprep.mubr.bf16.mxu0 0
      %2910 = vmatmul.mubr.bf16.gmra.mrb[0].mxu0 %v2840
      %v2911 = vpop.f32.mrb[0].mxu0
      %v2912 = vadd.f32 0.0, %v2911
      %v2913 = vpop.f32.mrb[0].mxu0
      %v2914 = vpop.f32.mrb[0].mxu0
      %v2915 = vadd.f32 0.0, %v2914
      %v2916 = vpop.f32.mrb[0].mxu0
      %2917 = vdwg.mxu0
      %v2918 = vadd.f32 %v2776, %v2880
      %v2919 = vadd.f32 %v2777, %v2883
      %v2920 = vadd.f32 %v2778, %v2888
      %v2921 = vadd.f32 %v2779, %v2891
      %v2922 = vadd.f32 %v2780, %v2896
      %v2923 = vadd.f32 %v2781, %v2899
      %v2924 = vadd.f32 %v2782, %v2904
      %v2925 = vadd.f32 %v2783, %v2907
      %v2926 = vadd.f32 %v2784, %v2912
      %v2927 = vadd.f32 %v2785, %v2915
      %2928 = vst.msk [vmem:[#allocation3] sm:$0xff] %vm280, %v2918
      %2929 = vst.msk [vmem:[#allocation3 + $0x8] sm:$0xff] %vm280, %v2919
      %2930 = vst.msk [vmem:[#allocation3 + $0x10] sm:$0xff] %vm280, %v2920
      %2931 = vst.msk [vmem:[#allocation3 + $0x18] sm:$0xff] %vm280, %v2921
      %2932 = vst.msk [vmem:[#allocation3 + $0x20] sm:$0xff] %vm280, %v2922
      %2933 = vst.msk [vmem:[#allocation3 + $0x28] sm:$0xff] %vm280, %v2923
      %2934 = vst.msk [vmem:[#allocation3 + $0x30] sm:$0xff] %vm280, %v2924
      %2935 = vst.msk [vmem:[#allocation3 + $0x38] sm:$0xff] %vm280, %v2925
      %2936 = vst.msk [vmem:[#allocation3 + $0x40] sm:$0xff] %vm280, %v2926
      %2937 = vst.msk [vmem:[#allocation3 + $0x48] sm:$0xff] %vm280, %v2927
      %v2938 = vld [vmem:[#allocation2 + $0x4] sm:$0xe]
      %v2939 = vld [vmem:[#allocation2 + $0x8] sm:$0xf]
      %v2940 = vld [vmem:[#allocation2 + $0xc] sm:$0xf]
      %v2941 = vld [vmem:[#allocation2 + $0x10] sm:$0xf]
      %v2942 = vld [vmem:[#allocation2 + $0x14] sm:$0xf]
      %v2943 = vld [vmem:[#allocation2 + $0x18] sm:$0xf]
      %v2944 = vld [vmem:[#allocation2 + $0x1c] sm:$0xf]
      %v2945 = vld [vmem:[#allocation2 + $0x20] sm:$0xf]
      %v2946 = vld [vmem:[#allocation2 + $0x24] sm:$0xf]
      %v2947 = vld [vmem:[#allocation2 + $0x28] sm:$0xf]
      %v2948 = vld [vmem:[#allocation2 + $0x2c] sm:$0x3]
      %v2949 = vld [vmem:[#allocation3] sm:$0xff]
      %v2950 = vld [vmem:[#allocation3 + $0x8] sm:$0xff]
      %v2951 = vld [vmem:[#allocation3 + $0x10] sm:$0xff]
      %v2952 = vld [vmem:[#allocation3 + $0x18] sm:$0xff]
      %v2953 = vld [vmem:[#allocation3 + $0x20] sm:$0xff]
      %v2954 = vld [vmem:[#allocation3 + $0x28] sm:$0xff]
      %v2955 = vld [vmem:[#allocation3 + $0x30] sm:$0xff]
      %v2956 = vld [vmem:[#allocation3 + $0x38] sm:$0xff]
      %v2957 = vld [vmem:[#allocation3 + $0x40] sm:$0xff]
      %v2958 = vld [vmem:[#allocation3 + $0x48] sm:$0xff]
      %s2959 = scalar_lea.vmem %s2, 16
      %v2960 = vld [vmem:[%s2959] sm:$0xf]
      %v2972 = vunpack.c.l.b16 %v2938
      %v2973 = vunpack.c.l.b16 %v2939
      %v2974 = vunpack.c.l.b16 %v2940
      %v2975 = vunpack.c.l.b16 %v2941
      %v2976 = vunpack.c.l.b16 %v2942
      %v2977 = vunpack.c.l.b16 %v2943
      %v2978 = vunpack.c.l.b16 %v2944
      %v2979 = vunpack.c.l.b16 %v2945
      %v2980 = vunpack.c.l.b16 %v2946
      %v2981 = vunpack.c.l.b16 %v2947
      %v2982 = vunpack.c.l.b16 %v2948
      %v2983 = vpack.c.b16 %v2973, %v2972
      %v2984 = vpack.c.b16 %v2975, %v2974
      %v2985 = vpack.c.b16 %v2977, %v2976
      %v2986 = vpack.c.b16 %v2979, %v2978
      %v2987 = vpack.c.b16 %v2981, %v2980
      %v2988 = vpack.c.b16 %v2982, %v2982
      %v2990 = vshrl.u32 %v2983, 16
      %v2992 = vrot.slane %v2990, 1
      %v2993 = vshll.u32 %v2983, 16
      %v2995 = vrot.slane %v2993, 2
      %v2996 = vor.u32 %v2992, %v2995
      %v2998 = vshrl.u32 %v2984, 16
      %v3000 = vrot.slane %v2998, 1
      %v3001 = vshll.u32 %v2984, 16
      %v3003 = vrot.slane %v3001, 2
      %v3004 = vor.u32 %v3000, %v3003
      %v3005 = vsel %vm1767, %v2996, %v3004
      %v3007 = vshrl.u32 %v2985, 16
      %v3009 = vrot.slane %v3007, 1
      %v3010 = vshll.u32 %v2985, 16
      %v3012 = vrot.slane %v3010, 2
      %v3013 = vor.u32 %v3009, %v3012
      %v3014 = vsel %vm1767, %v3004, %v3013
      %v3016 = vshrl.u32 %v2986, 16
      %v3018 = vrot.slane %v3016, 1
      %v3019 = vshll.u32 %v2986, 16
      %v3021 = vrot.slane %v3019, 2
      %v3022 = vor.u32 %v3018, %v3021
      %v3023 = vsel %vm1767, %v3013, %v3022
      %v3025 = vshrl.u32 %v2987, 16
      %v3027 = vrot.slane %v3025, 1
      %v3028 = vshll.u32 %v2987, 16
      %v3030 = vrot.slane %v3028, 2
      %v3031 = vor.u32 %v3027, %v3030
      %v3032 = vsel %vm1767, %v3022, %v3031
      %v3034 = vshrl.u32 %v2988, 16
      %v3036 = vrot.slane %v3034, 1
      %v3037 = vshll.u32 %v2988, 16
      %v3039 = vrot.slane %v3037, 2
      %v3040 = vor.u32 %v3036, %v3039
      %v3041 = vsel %vm1767, %v3031, %v3040
      %v3043 = vsel %vm280, %v3005, 0
      %v3046 = vsel %vm280, %v3014, 0
      %v3049 = vsel %vm280, %v3023, 0
      %v3052 = vsel %vm280, %v3032, 0
      %v3055 = vsel %vm280, %v3041, 0
      %v3058 = vsel %vm2289, %v2960, 0
      %3060 = vmatprep.subr.bf16.mxu0 0
      %3061 = vmatpush1.bf16.msra.mxu0 %v3058
      %3062 = vmatprep.subr.bf16.mxu0 0
      %3063 = vmatpush1.bf16.msra.mxu0 0
      %3064 = vmatprep.subr.bf16.mxu0 0
      %3065 = vmatpush1.bf16.msra.mxu0 0
      %3066 = vmatprep.subr.bf16.mxu0 0
      %3067 = vmatpush1.bf16.msra.mxu0 0
      %3068 = vmatprep.subr.bf16.mxu0 0
      %3069 = vmatpush1.bf16.msra.mxu0 0
      %3070 = vmatprep.subr.bf16.mxu0 0
      %3071 = vmatpush1.bf16.msra.mxu0 0
      %3072 = vmatprep.subr.bf16.mxu0 0
      %3073 = vmatpush1.bf16.msra.mxu0 0
      %3074 = vmatprep.subr.bf16.mxu0 0
      %3075 = vmatpush1.bf16.msra.mxu0 0
      %3076 = vmatprep.subr.bf16.mxu0 0
      %3077 = vmatpush1.bf16.msra.mxu0 0
      %3078 = vmatprep.subr.bf16.mxu0 0
      %3079 = vmatpush1.bf16.msra.mxu0 0
      %3080 = vmatprep.subr.bf16.mxu0 0
      %3081 = vmatpush1.bf16.msra.mxu0 0
      %3082 = vmatprep.subr.bf16.mxu0 0
      %3083 = vmatpush1.bf16.msra.mxu0 0
      %3084 = vmatprep.subr.bf16.mxu0 0
      %3085 = vmatpush1.bf16.msra.mxu0 0
      %3086 = vmatprep.subr.bf16.mxu0 0
      %3087 = vmatpush1.bf16.msra.mxu0 0
      %3088 = vmatprep.subr.bf16.mxu0 0
      %3089 = vmatpush1.bf16.msra.mxu0 0
      %3090 = vmatprep.subr.bf16.mxu0 0
      %3091 = vmatpush1.bf16.msra.mxu0 0
      %3092 = vmatprep.mubr.bf16.mxu0 0
      %3093 = vmatmul.mubr.bf16.gmra.mrb[0].mxu0 %v3043
      %v3094 = vpop.f32.mrb[0].mxu0
      %v3095 = vadd.f32 0.0, %v3094
      %v3096 = vpop.f32.mrb[0].mxu0
      %v3097 = vpop.f32.mrb[0].mxu0
      %v3098 = vadd.f32 0.0, %v3097
      %v3099 = vpop.f32.mrb[0].mxu0
      %3100 = vmatprep.mubr.bf16.mxu0 0
      %3101 = vmatmul.mubr.bf16.gmra.mrb[0].mxu0 %v3046
      %v3102 = vpop.f32.mrb[0].mxu0
      %v3103 = vadd.f32 0.0, %v3102
      %v3104 = vpop.f32.mrb[0].mxu0
      %v3105 = vpop.f32.mrb[0].mxu0
      %v3106 = vadd.f32 0.0, %v3105
      %v3107 = vpop.f32.mrb[0].mxu0
      %3108 = vmatprep.mubr.bf16.mxu0 0
      %3109 = vmatmul.mubr.bf16.gmra.mrb[0].mxu0 %v3049
      %v3110 = vpop.f32.mrb[0].mxu0
      %v3111 = vadd.f32 0.0, %v3110
      %v3112 = vpop.f32.mrb[0].mxu0
      %v3113 = vpop.f32.mrb[0].mxu0
      %v3114 = vadd.f32 0.0, %v3113
      %v3115 = vpop.f32.mrb[0].mxu0
      %3116 = vmatprep.mubr.bf16.mxu0 0
      %3117 = vmatmul.mubr.bf16.gmra.mrb[0].mxu0 %v3052
      %v3118 = vpop.f32.mrb[0].mxu0
      %v3119 = vadd.f32 0.0, %v3118
      %v3120 = vpop.f32.mrb[0].mxu0
      %v3121 = vpop.f32.mrb[0].mxu0
      %v3122 = vadd.f32 0.0, %v3121
      %v3123 = vpop.f32.mrb[0].mxu0
      %3124 = vmatprep.mubr.bf16.mxu0 0
      %3125 = vmatmul.mubr.bf16.gmra.mrb[0].mxu0 %v3055
      %v3126 = vpop.f32.mrb[0].mxu0
      %v3127 = vadd.f32 0.0, %v3126
      %v3128 = vpop.f32.mrb[0].mxu0
      %v3129 = vpop.f32.mrb[0].mxu0
      %v3130 = vadd.f32 0.0, %v3129
      %v3131 = vpop.f32.mrb[0].mxu0
      %3132 = vdwg.mxu0
      %v3133 = vadd.f32 %v2949, %v3095
      %v3134 = vadd.f32 %v2950, %v3098
      %v3135 = vadd.f32 %v2951, %v3103
      %v3136 = vadd.f32 %v2952, %v3106
      %v3137 = vadd.f32 %v2953, %v3111
      %v3138 = vadd.f32 %v2954, %v3114
      %v3139 = vadd.f32 %v2955, %v3119
      %v3140 = vadd.f32 %v2956, %v3122
      %v3141 = vadd.f32 %v2957, %v3127
      %v3142 = vadd.f32 %v2958, %v3130
      %3143 = vst.msk [vmem:[#allocation3] sm:$0xff] %vm280, %v3133
      %3144 = vst.msk [vmem:[#allocation3 + $0x8] sm:$0xff] %vm280, %v3134
      %3145 = vst.msk [vmem:[#allocation3 + $0x10] sm:$0xff] %vm280, %v3135
      %3146 = vst.msk [vmem:[#allocation3 + $0x18] sm:$0xff] %vm280, %v3136
      %3147 = vst.msk [vmem:[#allocation3 + $0x20] sm:$0xff] %vm280, %v3137
      %3148 = vst.msk [vmem:[#allocation3 + $0x28] sm:$0xff] %vm280, %v3138
      %3149 = vst.msk [vmem:[#allocation3 + $0x30] sm:$0xff] %vm280, %v3139
      %3150 = vst.msk [vmem:[#allocation3 + $0x38] sm:$0xff] %vm280, %v3140
      %3151 = vst.msk [vmem:[#allocation3 + $0x40] sm:$0xff] %vm280, %v3141
      %3152 = vst.msk [vmem:[#allocation3 + $0x48] sm:$0xff] %vm280, %v3142
      %v3153 = vld [vmem:[#allocation2 + $0x4] sm:$0xc]
      %v3154 = vld [vmem:[#allocation2 + $0x8] sm:$0xf]
      %v3155 = vld [vmem:[#allocation2 + $0xc] sm:$0xf]
      %v3156 = vld [vmem:[#allocation2 + $0x10] sm:$0xf]
      %v3157 = vld [vmem:[#allocation2 + $0x14] sm:$0xf]
      %v3158 = vld [vmem:[#allocation2 + $0x18] sm:$0xf]
      %v3159 = vld [vmem:[#allocation2 + $0x1c] sm:$0xf]
      %v3160 = vld [vmem:[#allocation2 + $0x20] sm:$0xf]
      %v3161 = vld [vmem:[#allocation2 + $0x24] sm:$0xf]
      %v3162 = vld [vmem:[#allocation2 + $0x28] sm:$0xf]
      %v3163 = vld [vmem:[#allocation2 + $0x2c] sm:$0x3]
      %v3164 = vld [vmem:[#allocation3] sm:$0xff]
      %v3165 = vld [vmem:[#allocation3 + $0x8] sm:$0xff]
      %v3166 = vld [vmem:[#allocation3 + $0x10] sm:$0xff]
      %v3167 = vld [vmem:[#allocation3 + $0x18] sm:$0xff]
      %v3168 = vld [vmem:[#allocation3 + $0x20] sm:$0xff]
      %v3169 = vld [vmem:[#allocation3 + $0x28] sm:$0xff]
      %v3170 = vld [vmem:[#allocation3 + $0x30] sm:$0xff]
      %v3171 = vld [vmem:[#allocation3 + $0x38] sm:$0xff]
      %v3172 = vld [vmem:[#allocation3 + $0x40] sm:$0xff]
      %v3173 = vld [vmem:[#allocation3 + $0x48] sm:$0xff]
      %s3174 = scalar_lea.vmem %s2, 20
      %v3175 = vld [vmem:[%s3174] sm:$0xf]
      %v3187 = vunpack.c.l.b16 %v3153
      %v3188 = vunpack.c.l.b16 %v3154
      %v3189 = vunpack.c.l.b16 %v3155
      %v3190 = vunpack.c.l.b16 %v3156
      %v3191 = vunpack.c.l.b16 %v3157
      %v3192 = vunpack.c.l.b16 %v3158
      %v3193 = vunpack.c.l.b16 %v3159
      %v3194 = vunpack.c.l.b16 %v3160
      %v3195 = vunpack.c.l.b16 %v3161
      %v3196 = vunpack.c.l.b16 %v3162
      %v3197 = vunpack.c.l.b16 %v3163
      %v3198 = vpack.c.b16 %v3188, %v3187
      %v3199 = vpack.c.b16 %v3190, %v3189
      %v3200 = vpack.c.b16 %v3192, %v3191
      %v3201 = vpack.c.b16 %v3194, %v3193
      %v3202 = vpack.c.b16 %v3196, %v3195
      %v3203 = vpack.c.b16 %v3197, %v3197
      %v3204 = vrot.slane %v3198, 2
      %v3205 = vrot.slane %v3199, 2
      %v3206 = vsel %vm501, %v3204, %v3205
      %v3207 = vrot.slane %v3200, 2
      %v3208 = vsel %vm501, %v3205, %v3207
      %v3209 = vrot.slane %v3201, 2
      %v3210 = vsel %vm501, %v3207, %v3209
      %v3211 = vrot.slane %v3202, 2
      %v3212 = vsel %vm501, %v3209, %v3211
      %v3213 = vrot.slane %v3203, 2
      %v3214 = vsel %vm501, %v3211, %v3213
      %v3216 = vsel %vm280, %v3206, 0
      %v3219 = vsel %vm280, %v3208, 0
      %v3222 = vsel %vm280, %v3210, 0
      %v3225 = vsel %vm280, %v3212, 0
      %v3228 = vsel %vm280, %v3214, 0
      %v3231 = vsel %vm2289, %v3175, 0
      %3233 = vmatprep.subr.bf16.mxu0 0
      %3234 = vmatpush1.bf16.msra.mxu0 %v3231
      %3235 = vmatprep.subr.bf16.mxu0 0
      %3236 = vmatpush1.bf16.msra.mxu0 0
      %3237 = vmatprep.subr.bf16.mxu0 0
      %3238 = vmatpush1.bf16.msra.mxu0 0
      %3239 = vmatprep.subr.bf16.mxu0 0
      %3240 = vmatpush1.bf16.msra.mxu0 0
      %3241 = vmatprep.subr.bf16.mxu0 0
      %3242 = vmatpush1.bf16.msra.mxu0 0
      %3243 = vmatprep.subr.bf16.mxu0 0
      %3244 = vmatpush1.bf16.msra.mxu0 0
      %3245 = vmatprep.subr.bf16.mxu0 0
      %3246 = vmatpush1.bf16.msra.mxu0 0
      %3247 = vmatprep.subr.bf16.mxu0 0
      %3248 = vmatpush1.bf16.msra.mxu0 0
      %3249 = vmatprep.subr.bf16.mxu0 0
      %3250 = vmatpush1.bf16.msra.mxu0 0
      %3251 = vmatprep.subr.bf16.mxu0 0
      %3252 = vmatpush1.bf16.msra.mxu0 0
      %3253 = vmatprep.subr.bf16.mxu0 0
      %3254 = vmatpush1.bf16.msra.mxu0 0
      %3255 = vmatprep.subr.bf16.mxu0 0
      %3256 = vmatpush1.bf16.msra.mxu0 0
      %3257 = vmatprep.subr.bf16.mxu0 0
      %3258 = vmatpush1.bf16.msra.mxu0 0
      %3259 = vmatprep.subr.bf16.mxu0 0
      %3260 = vmatpush1.bf16.msra.mxu0 0
      %3261 = vmatprep.subr.bf16.mxu0 0
      %3262 = vmatpush1.bf16.msra.mxu0 0
      %3263 = vmatprep.subr.bf16.mxu0 0
      %3264 = vmatpush1.bf16.msra.mxu0 0
      %3265 = vmatprep.mubr.bf16.mxu0 0
      %3266 = vmatmul.mubr.bf16.gmra.mrb[0].mxu0 %v3216
      %v3267 = vpop.f32.mrb[0].mxu0
      %v3268 = vadd.f32 0.0, %v3267
      %v3269 = vpop.f32.mrb[0].mxu0
      %v3270 = vpop.f32.mrb[0].mxu0
      %v3271 = vadd.f32 0.0, %v3270
      %v3272 = vpop.f32.mrb[0].mxu0
      %3273 = vmatprep.mubr.bf16.mxu0 0
      %3274 = vmatmul.mubr.bf16.gmra.mrb[0].mxu0 %v3219
      %v3275 = vpop.f32.mrb[0].mxu0
      %v3276 = vadd.f32 0.0, %v3275
      %v3277 = vpop.f32.mrb[0].mxu0
      %v3278 = vpop.f32.mrb[0].mxu0
      %v3279 = vadd.f32 0.0, %v3278
      %v3280 = vpop.f32.mrb[0].mxu0
      %3281 = vmatprep.mubr.bf16.mxu0 0
      %3282 = vmatmul.mubr.bf16.gmra.mrb[0].mxu0 %v3222
      %v3283 = vpop.f32.mrb[0].mxu0
      %v3284 = vadd.f32 0.0, %v3283
      %v3285 = vpop.f32.mrb[0].mxu0
      %v3286 = vpop.f32.mrb[0].mxu0
      %v3287 = vadd.f32 0.0, %v3286
      %v3288 = vpop.f32.mrb[0].mxu0
      %3289 = vmatprep.mubr.bf16.mxu0 0
      %3290 = vmatmul.mubr.bf16.gmra.mrb[0].mxu0 %v3225
      %v3291 = vpop.f32.mrb[0].mxu0
      %v3292 = vadd.f32 0.0, %v3291
      %v3293 = vpop.f32.mrb[0].mxu0
      %v3294 = vpop.f32.mrb[0].mxu0
      %v3295 = vadd.f32 0.0, %v3294
      %v3296 = vpop.f32.mrb[0].mxu0
      %3297 = vmatprep.mubr.bf16.mxu0 0
      %3298 = vmatmul.mubr.bf16.gmra.mrb[0].mxu0 %v3228
      %v3299 = vpop.f32.mrb[0].mxu0
      %v3300 = vadd.f32 0.0, %v3299
      %v3301 = vpop.f32.mrb[0].mxu0
      %v3302 = vpop.f32.mrb[0].mxu0
      %v3303 = vadd.f32 0.0, %v3302
      %v3304 = vpop.f32.mrb[0].mxu0
      %3305 = vdwg.mxu0
      %v3306 = vadd.f32 %v3164, %v3268
      %v3307 = vadd.f32 %v3165, %v3271
      %v3308 = vadd.f32 %v3166, %v3276
      %v3309 = vadd.f32 %v3167, %v3279
      %v3310 = vadd.f32 %v3168, %v3284
      %v3311 = vadd.f32 %v3169, %v3287
      %v3312 = vadd.f32 %v3170, %v3292
      %v3313 = vadd.f32 %v3171, %v3295
      %v3314 = vadd.f32 %v3172, %v3300
      %v3315 = vadd.f32 %v3173, %v3303
      %3316 = vst.msk [vmem:[#allocation3] sm:$0xff] %vm280, %v3306
      %3317 = vst.msk [vmem:[#allocation3 + $0x8] sm:$0xff] %vm280, %v3307
      %3318 = vst.msk [vmem:[#allocation3 + $0x10] sm:$0xff] %vm280, %v3308
      %3319 = vst.msk [vmem:[#allocation3 + $0x18] sm:$0xff] %vm280, %v3309
      %3320 = vst.msk [vmem:[#allocation3 + $0x20] sm:$0xff] %vm280, %v3310
      %3321 = vst.msk [vmem:[#allocation3 + $0x28] sm:$0xff] %vm280, %v3311
      %3322 = vst.msk [vmem:[#allocation3 + $0x30] sm:$0xff] %vm280, %v3312
      %3323 = vst.msk [vmem:[#allocation3 + $0x38] sm:$0xff] %vm280, %v3313
      %3324 = vst.msk [vmem:[#allocation3 + $0x40] sm:$0xff] %vm280, %v3314
      %3325 = vst.msk [vmem:[#allocation3 + $0x48] sm:$0xff] %vm280, %v3315
      %v3326 = vld [vmem:[#allocation2 + $0x8] sm:$0xc]
      %v3327 = vld [vmem:[#allocation2 + $0xc] sm:$0xf]
      %v3328 = vld [vmem:[#allocation2 + $0x10] sm:$0xf]
      %v3329 = vld [vmem:[#allocation2 + $0x14] sm:$0xf]
      %v3330 = vld [vmem:[#allocation2 + $0x18] sm:$0xf]
      %v3331 = vld [vmem:[#allocation2 + $0x1c] sm:$0xf]
      %v3332 = vld [vmem:[#allocation2 + $0x20] sm:$0xf]
      %v3333 = vld [vmem:[#allocation2 + $0x24] sm:$0xf]
      %v3334 = vld [vmem:[#allocation2 + $0x28] sm:$0xf]
      %v3335 = vld [vmem:[#allocation2 + $0x2c] sm:$0xf]
      %v3336 = vld [vmem:[#allocation2 + $0x30] sm:$0x3]
      %v3337 = vld [vmem:[#allocation3] sm:$0xff]
      %v3338 = vld [vmem:[#allocation3 + $0x8] sm:$0xff]
      %v3339 = vld [vmem:[#allocation3 + $0x10] sm:$0xff]
      %v3340 = vld [vmem:[#allocation3 + $0x18] sm:$0xff]
      %v3341 = vld [vmem:[#allocation3 + $0x20] sm:$0xff]
      %v3342 = vld [vmem:[#allocation3 + $0x28] sm:$0xff]
      %v3343 = vld [vmem:[#allocation3 + $0x30] sm:$0xff]
      %v3344 = vld [vmem:[#allocation3 + $0x38] sm:$0xff]
      %v3345 = vld [vmem:[#allocation3 + $0x40] sm:$0xff]
      %v3346 = vld [vmem:[#allocation3 + $0x48] sm:$0xff]
      %s3347 = scalar_lea.vmem %s2, 24
      %v3348 = vld [vmem:[%s3347] sm:$0xf]
      %v3360 = vunpack.c.l.b16 %v3326
      %v3361 = vunpack.c.l.b16 %v3327
      %v3362 = vunpack.c.l.b16 %v3328
      %v3363 = vunpack.c.l.b16 %v3329
      %v3364 = vunpack.c.l.b16 %v3330
      %v3365 = vunpack.c.l.b16 %v3331
      %v3366 = vunpack.c.l.b16 %v3332
      %v3367 = vunpack.c.l.b16 %v3333
      %v3368 = vunpack.c.l.b16 %v3334
      %v3369 = vunpack.c.l.b16 %v3335
      %v3370 = vunpack.c.l.b16 %v3336
      %v3371 = vpack.c.b16 %v3361, %v3360
      %v3372 = vpack.c.b16 %v3363, %v3362
      %v3373 = vpack.c.b16 %v3365, %v3364
      %v3374 = vpack.c.b16 %v3367, %v3366
      %v3375 = vpack.c.b16 %v3369, %v3368
      %v3376 = vpack.c.b16 %v3370, %v3370
      %v3377 = vrot.slane %v3371, 2
      %v3378 = vrot.slane %v3372, 2
      %v3379 = vsel %vm501, %v3377, %v3378
      %v3380 = vrot.slane %v3373, 2
      %v3381 = vsel %vm501, %v3378, %v3380
      %v3382 = vrot.slane %v3374, 2
      %v3383 = vsel %vm501, %v3380, %v3382
      %v3384 = vrot.slane %v3375, 2
      %v3385 = vsel %vm501, %v3382, %v3384
      %v3386 = vrot.slane %v3376, 2
      %v3387 = vsel %vm501, %v3384, %v3386
      %v3389 = vsel %vm280, %v3379, 0
      %v3392 = vsel %vm280, %v3381, 0
      %v3395 = vsel %vm280, %v3383, 0
      %v3398 = vsel %vm280, %v3385, 0
      %v3401 = vsel %vm280, %v3387, 0
      %v3404 = vsel %vm2289, %v3348, 0
      %3406 = vmatprep.subr.bf16.mxu0 0
      %3407 = vmatpush1.bf16.msra.mxu0 %v3404
      %3408 = vmatprep.subr.bf16.mxu0 0
      %3409 = vmatpush1.bf16.msra.mxu0 0
      %3410 = vmatprep.subr.bf16.mxu0 0
      %3411 = vmatpush1.bf16.msra.mxu0 0
      %3412 = vmatprep.subr.bf16.mxu0 0
      %3413 = vmatpush1.bf16.msra.mxu0 0
      %3414 = vmatprep.subr.bf16.mxu0 0
      %3415 = vmatpush1.bf16.msra.mxu0 0
      %3416 = vmatprep.subr.bf16.mxu0 0
      %3417 = vmatpush1.bf16.msra.mxu0 0
      %3418 = vmatprep.subr.bf16.mxu0 0
      %3419 = vmatpush1.bf16.msra.mxu0 0
      %3420 = vmatprep.subr.bf16.mxu0 0
      %3421 = vmatpush1.bf16.msra.mxu0 0
      %3422 = vmatprep.subr.bf16.mxu0 0
      %3423 = vmatpush1.bf16.msra.mxu0 0
      %3424 = vmatprep.subr.bf16.mxu0 0
      %3425 = vmatpush1.bf16.msra.mxu0 0
      %3426 = vmatprep.subr.bf16.mxu0 0
      %3427 = vmatpush1.bf16.msra.mxu0 0
      %3428 = vmatprep.subr.bf16.mxu0 0
      %3429 = vmatpush1.bf16.msra.mxu0 0
      %3430 = vmatprep.subr.bf16.mxu0 0
      %3431 = vmatpush1.bf16.msra.mxu0 0
      %3432 = vmatprep.subr.bf16.mxu0 0
      %3433 = vmatpush1.bf16.msra.mxu0 0
      %3434 = vmatprep.subr.bf16.mxu0 0
      %3435 = vmatpush1.bf16.msra.mxu0 0
      %3436 = vmatprep.subr.bf16.mxu0 0
      %3437 = vmatpush1.bf16.msra.mxu0 0
      %3438 = vmatprep.mubr.bf16.mxu0 0
      %3439 = vmatmul.mubr.bf16.gmra.mrb[0].mxu0 %v3389
      %v3440 = vpop.f32.mrb[0].mxu0
      %v3441 = vadd.f32 0.0, %v3440
      %v3442 = vpop.f32.mrb[0].mxu0
      %v3443 = vpop.f32.mrb[0].mxu0
      %v3444 = vadd.f32 0.0, %v3443
      %v3445 = vpop.f32.mrb[0].mxu0
      %3446 = vmatprep.mubr.bf16.mxu0 0
      %3447 = vmatmul.mubr.bf16.gmra.mrb[0].mxu0 %v3392
      %v3448 = vpop.f32.mrb[0].mxu0
      %v3449 = vadd.f32 0.0, %v3448
      %v3450 = vpop.f32.mrb[0].mxu0
      %v3451 = vpop.f32.mrb[0].mxu0
      %v3452 = vadd.f32 0.0, %v3451
      %v3453 = vpop.f32.mrb[0].mxu0
      %3454 = vmatprep.mubr.bf16.mxu0 0
      %3455 = vmatmul.mubr.bf16.gmra.mrb[0].mxu0 %v3395
      %v3456 = vpop.f32.mrb[0].mxu0
      %v3457 = vadd.f32 0.0, %v3456
      %v3458 = vpop.f32.mrb[0].mxu0
      %v3459 = vpop.f32.mrb[0].mxu0
      %v3460 = vadd.f32 0.0, %v3459
      %v3461 = vpop.f32.mrb[0].mxu0
      %3462 = vmatprep.mubr.bf16.mxu0 0
      %3463 = vmatmul.mubr.bf16.gmra.mrb[0].mxu0 %v3398
      %v3464 = vpop.f32.mrb[0].mxu0
      %v3465 = vadd.f32 0.0, %v3464
      %v3466 = vpop.f32.mrb[0].mxu0
      %v3467 = vpop.f32.mrb[0].mxu0
      %v3468 = vadd.f32 0.0, %v3467
      %v3469 = vpop.f32.mrb[0].mxu0
      %3470 = vmatprep.mubr.bf16.mxu0 0
      %3471 = vmatmul.mubr.bf16.gmra.mrb[0].mxu0 %v3401
      %v3472 = vpop.f32.mrb[0].mxu0
      %v3473 = vadd.f32 0.0, %v3472
      %v3474 = vpop.f32.mrb[0].mxu0
      %v3475 = vpop.f32.mrb[0].mxu0
      %v3476 = vadd.f32 0.0, %v3475
      %v3477 = vpop.f32.mrb[0].mxu0
      %3478 = vdwg.mxu0
      %v3479 = vadd.f32 %v3337, %v3441
      %v3480 = vadd.f32 %v3338, %v3444
      %v3481 = vadd.f32 %v3339, %v3449
      %v3482 = vadd.f32 %v3340, %v3452
      %v3483 = vadd.f32 %v3341, %v3457
      %v3484 = vadd.f32 %v3342, %v3460
      %v3485 = vadd.f32 %v3343, %v3465
      %v3486 = vadd.f32 %v3344, %v3468
      %v3487 = vadd.f32 %v3345, %v3473
      %v3488 = vadd.f32 %v3346, %v3476
      %3489 = vst.msk [vmem:[#allocation3] sm:$0xff] %vm280, %v3479
      %3490 = vst.msk [vmem:[#allocation3 + $0x8] sm:$0xff] %vm280, %v3480
      %3491 = vst.msk [vmem:[#allocation3 + $0x10] sm:$0xff] %vm280, %v3481
      %3492 = vst.msk [vmem:[#allocation3 + $0x18] sm:$0xff] %vm280, %v3482
      %3493 = vst.msk [vmem:[#allocation3 + $0x20] sm:$0xff] %vm280, %v3483
      %3494 = vst.msk [vmem:[#allocation3 + $0x28] sm:$0xff] %vm280, %v3484
      %3495 = vst.msk [vmem:[#allocation3 + $0x30] sm:$0xff] %vm280, %v3485
      %3496 = vst.msk [vmem:[#allocation3 + $0x38] sm:$0xff] %vm280, %v3486
      %3497 = vst.msk [vmem:[#allocation3 + $0x40] sm:$0xff] %vm280, %v3487
      %3498 = vst.msk [vmem:[#allocation3 + $0x48] sm:$0xff] %vm280, %v3488
      %v3499 = vld [vmem:[#allocation2 + $0x8] sm:$0xc]
      %v3500 = vld [vmem:[#allocation2 + $0xc] sm:$0xf]
      %v3501 = vld [vmem:[#allocation2 + $0x10] sm:$0xf]
      %v3502 = vld [vmem:[#allocation2 + $0x14] sm:$0xf]
      %v3503 = vld [vmem:[#allocation2 + $0x18] sm:$0xf]
      %v3504 = vld [vmem:[#allocation2 + $0x1c] sm:$0xf]
      %v3505 = vld [vmem:[#allocation2 + $0x20] sm:$0xf]
      %v3506 = vld [vmem:[#allocation2 + $0x24] sm:$0xf]
      %v3507 = vld [vmem:[#allocation2 + $0x28] sm:$0xf]
      %v3508 = vld [vmem:[#allocation2 + $0x2c] sm:$0xf]
      %v3509 = vld [vmem:[#allocation2 + $0x30] sm:$0x7]
      %v3510 = vld [vmem:[#allocation3] sm:$0xff]
      %v3511 = vld [vmem:[#allocation3 + $0x8] sm:$0xff]
      %v3512 = vld [vmem:[#allocation3 + $0x10] sm:$0xff]
      %v3513 = vld [vmem:[#allocation3 + $0x18] sm:$0xff]
      %v3514 = vld [vmem:[#allocation3 + $0x20] sm:$0xff]
      %v3515 = vld [vmem:[#allocation3 + $0x28] sm:$0xff]
      %v3516 = vld [vmem:[#allocation3 + $0x30] sm:$0xff]
      %v3517 = vld [vmem:[#allocation3 + $0x38] sm:$0xff]
      %v3518 = vld [vmem:[#allocation3 + $0x40] sm:$0xff]
      %v3519 = vld [vmem:[#allocation3 + $0x48] sm:$0xff]
      %s3520 = scalar_lea.vmem %s2, 28
      %v3521 = vld [vmem:[%s3520] sm:$0xf]
      %v3533 = vunpack.c.l.b16 %v3499
      %v3534 = vunpack.c.l.b16 %v3500
      %v3535 = vunpack.c.l.b16 %v3501
      %v3536 = vunpack.c.l.b16 %v3502
      %v3537 = vunpack.c.l.b16 %v3503
      %v3538 = vunpack.c.l.b16 %v3504
      %v3539 = vunpack.c.l.b16 %v3505
      %v3540 = vunpack.c.l.b16 %v3506
      %v3541 = vunpack.c.l.b16 %v3507
      %v3542 = vunpack.c.l.b16 %v3508
      %v3543 = vunpack.c.l.b16 %v3509
      %v3544 = vpack.c.b16 %v3534, %v3533
      %v3545 = vpack.c.b16 %v3536, %v3535
      %v3546 = vpack.c.b16 %v3538, %v3537
      %v3547 = vpack.c.b16 %v3540, %v3539
      %v3548 = vpack.c.b16 %v3542, %v3541
      %v3549 = vpack.c.b16 %v3543, %v3543
      %vm3550 = vsmask.f32 5376
      %v3552 = vshrl.u32 %v3544, 16
      %v3554 = vrot.slane %v3552, 2
      %v3555 = vshll.u32 %v3544, 16
      %v3557 = vrot.slane %v3555, 3
      %v3558 = vor.u32 %v3554, %v3557
      %v3560 = vshrl.u32 %v3545, 16
      %v3562 = vrot.slane %v3560, 2
      %v3563 = vshll.u32 %v3545, 16
      %v3565 = vrot.slane %v3563, 3
      %v3566 = vor.u32 %v3562, %v3565
      %v3567 = vsel %vm3550, %v3558, %v3566
      %v3569 = vshrl.u32 %v3546, 16
      %v3571 = vrot.slane %v3569, 2
      %v3572 = vshll.u32 %v3546, 16
      %v3574 = vrot.slane %v3572, 3
      %v3575 = vor.u32 %v3571, %v3574
      %v3576 = vsel %vm3550, %v3566, %v3575
      %v3578 = vshrl.u32 %v3547, 16
      %v3580 = vrot.slane %v3578, 2
      %v3581 = vshll.u32 %v3547, 16
      %v3583 = vrot.slane %v3581, 3
      %v3584 = vor.u32 %v3580, %v3583
      %v3585 = vsel %vm3550, %v3575, %v3584
      %v3587 = vshrl.u32 %v3548, 16
      %v3589 = vrot.slane %v3587, 2
      %v3590 = vshll.u32 %v3548, 16
      %v3592 = vrot.slane %v3590, 3
      %v3593 = vor.u32 %v3589, %v3592
      %v3594 = vsel %vm3550, %v3584, %v3593
      %v3596 = vshrl.u32 %v3549, 16
      %v3598 = vrot.slane %v3596, 2
      %v3599 = vshll.u32 %v3549, 16
      %v3601 = vrot.slane %v3599, 3
      %v3602 = vor.u32 %v3598, %v3601
      %v3603 = vsel %vm3550, %v3593, %v3602
      %v3605 = vsel %vm280, %v3567, 0
      %v3608 = vsel %vm280, %v3576, 0
      %v3611 = vsel %vm280, %v3585, 0
      %v3614 = vsel %vm280, %v3594, 0
      %v3617 = vsel %vm280, %v3603, 0
      %v3620 = vsel %vm2289, %v3521, 0
      %3622 = vmatprep.subr.bf16.mxu0 0
      %3623 = vmatpush1.bf16.msra.mxu0 %v3620
      %3624 = vmatprep.subr.bf16.mxu0 0
      %3625 = vmatpush1.bf16.msra.mxu0 0
      %3626 = vmatprep.subr.bf16.mxu0 0
      %3627 = vmatpush1.bf16.msra.mxu0 0
      %3628 = vmatprep.subr.bf16.mxu0 0
      %3629 = vmatpush1.bf16.msra.mxu0 0
      %3630 = vmatprep.subr.bf16.mxu0 0
      %3631 = vmatpush1.bf16.msra.mxu0 0
      %3632 = vmatprep.subr.bf16.mxu0 0
      %3633 = vmatpush1.bf16.msra.mxu0 0
      %3634 = vmatprep.subr.bf16.mxu0 0
      %3635 = vmatpush1.bf16.msra.mxu0 0
      %3636 = vmatprep.subr.bf16.mxu0 0
      %3637 = vmatpush1.bf16.msra.mxu0 0
      %3638 = vmatprep.subr.bf16.mxu0 0
      %3639 = vmatpush1.bf16.msra.mxu0 0
      %3640 = vmatprep.subr.bf16.mxu0 0
      %3641 = vmatpush1.bf16.msra.mxu0 0
      %3642 = vmatprep.subr.bf16.mxu0 0
      %3643 = vmatpush1.bf16.msra.mxu0 0
      %3644 = vmatprep.subr.bf16.mxu0 0
      %3645 = vmatpush1.bf16.msra.mxu0 0
      %3646 = vmatprep.subr.bf16.mxu0 0
      %3647 = vmatpush1.bf16.msra.mxu0 0
      %3648 = vmatprep.subr.bf16.mxu0 0
      %3649 = vmatpush1.bf16.msra.mxu0 0
      %3650 = vmatprep.subr.bf16.mxu0 0
      %3651 = vmatpush1.bf16.msra.mxu0 0
      %3652 = vmatprep.subr.bf16.mxu0 0
      %3653 = vmatpush1.bf16.msra.mxu0 0
      %3654 = vmatprep.mubr.bf16.mxu0 0
      %3655 = vmatmul.mubr.bf16.gmra.mrb[0].mxu0 %v3605
      %v3656 = vpop.f32.mrb[0].mxu0
      %v3657 = vadd.f32 0.0, %v3656
      %v3658 = vpop.f32.mrb[0].mxu0
      %v3659 = vpop.f32.mrb[0].mxu0
      %v3660 = vadd.f32 0.0, %v3659
      %v3661 = vpop.f32.mrb[0].mxu0
      %3662 = vmatprep.mubr.bf16.mxu0 0
      %3663 = vmatmul.mubr.bf16.gmra.mrb[0].mxu0 %v3608
      %v3664 = vpop.f32.mrb[0].mxu0
      %v3665 = vadd.f32 0.0, %v3664
      %v3666 = vpop.f32.mrb[0].mxu0
      %v3667 = vpop.f32.mrb[0].mxu0
      %v3668 = vadd.f32 0.0, %v3667
      %v3669 = vpop.f32.mrb[0].mxu0
      %3670 = vmatprep.mubr.bf16.mxu0 0
      %3671 = vmatmul.mubr.bf16.gmra.mrb[0].mxu0 %v3611
      %v3672 = vpop.f32.mrb[0].mxu0
      %v3673 = vadd.f32 0.0, %v3672
      %v3674 = vpop.f32.mrb[0].mxu0
      %v3675 = vpop.f32.mrb[0].mxu0
      %v3676 = vadd.f32 0.0, %v3675
      %v3677 = vpop.f32.mrb[0].mxu0
      %3678 = vmatprep.mubr.bf16.mxu0 0
      %3679 = vmatmul.mubr.bf16.gmra.mrb[0].mxu0 %v3614
      %v3680 = vpop.f32.mrb[0].mxu0
      %v3681 = vadd.f32 0.0, %v3680
      %v3682 = vpop.f32.mrb[0].mxu0
      %v3683 = vpop.f32.mrb[0].mxu0
      %v3684 = vadd.f32 0.0, %v3683
      %v3685 = vpop.f32.mrb[0].mxu0
      %3686 = vmatprep.mubr.bf16.mxu0 0
      %3687 = vmatmul.mubr.bf16.gmra.mrb[0].mxu0 %v3617
      %v3688 = vpop.f32.mrb[0].mxu0
      %v3689 = vadd.f32 0.0, %v3688
      %v3690 = vpop.f32.mrb[0].mxu0
      %v3691 = vpop.f32.mrb[0].mxu0
      %v3692 = vadd.f32 0.0, %v3691
      %v3693 = vpop.f32.mrb[0].mxu0
      %3694 = vdwg.mxu0
      %v3695 = vadd.f32 %v3510, %v3657
      %v3696 = vadd.f32 %v3511, %v3660
      %v3697 = vadd.f32 %v3512, %v3665
      %v3698 = vadd.f32 %v3513, %v3668
      %v3699 = vadd.f32 %v3514, %v3673
      %v3700 = vadd.f32 %v3515, %v3676
      %v3701 = vadd.f32 %v3516, %v3681
      %v3702 = vadd.f32 %v3517, %v3684
      %v3703 = vadd.f32 %v3518, %v3689
      %v3704 = vadd.f32 %v3519, %v3692
      %3705 = vst.msk [vmem:[#allocation3] sm:$0xff] %vm280, %v3695
      %3706 = vst.msk [vmem:[#allocation3 + $0x8] sm:$0xff] %vm280, %v3696
      %3707 = vst.msk [vmem:[#allocation3 + $0x10] sm:$0xff] %vm280, %v3697
      %3708 = vst.msk [vmem:[#allocation3 + $0x18] sm:$0xff] %vm280, %v3698
      %3709 = vst.msk [vmem:[#allocation3 + $0x20] sm:$0xff] %vm280, %v3699
      %3710 = vst.msk [vmem:[#allocation3 + $0x28] sm:$0xff] %vm280, %v3700
      %3711 = vst.msk [vmem:[#allocation3 + $0x30] sm:$0xff] %vm280, %v3701
      %3712 = vst.msk [vmem:[#allocation3 + $0x38] sm:$0xff] %vm280, %v3702
      %3713 = vst.msk [vmem:[#allocation3 + $0x40] sm:$0xff] %vm280, %v3703
      %3714 = vst.msk [vmem:[#allocation3 + $0x48] sm:$0xff] %vm280, %v3704
      %v3715 = vld [vmem:[#allocation2 + $0x8] sm:$0x8]
      %v3716 = vld [vmem:[#allocation2 + $0xc] sm:$0xf]
      %v3717 = vld [vmem:[#allocation2 + $0x10] sm:$0xf]
      %v3718 = vld [vmem:[#allocation2 + $0x14] sm:$0xf]
      %v3719 = vld [vmem:[#allocation2 + $0x18] sm:$0xf]
      %v3720 = vld [vmem:[#allocation2 + $0x1c] sm:$0xf]
      %v3721 = vld [vmem:[#allocation2 + $0x20] sm:$0xf]
      %v3722 = vld [vmem:[#allocation2 + $0x24] sm:$0xf]
      %v3723 = vld [vmem:[#allocation2 + $0x28] sm:$0xf]
      %v3724 = vld [vmem:[#allocation2 + $0x2c] sm:$0xf]
      %v3725 = vld [vmem:[#allocation2 + $0x30] sm:$0x7]
      %v3726 = vld [vmem:[#allocation3] sm:$0xff]
      %v3727 = vld [vmem:[#allocation3 + $0x8] sm:$0xff]
      %v3728 = vld [vmem:[#allocation3 + $0x10] sm:$0xff]
      %v3729 = vld [vmem:[#allocation3 + $0x18] sm:$0xff]
      %v3730 = vld [vmem:[#allocation3 + $0x20] sm:$0xff]
      %v3731 = vld [vmem:[#allocation3 + $0x28] sm:$0xff]
      %v3732 = vld [vmem:[#allocation3 + $0x30] sm:$0xff]
      %v3733 = vld [vmem:[#allocation3 + $0x38] sm:$0xff]
      %v3734 = vld [vmem:[#allocation3 + $0x40] sm:$0xff]
      %v3735 = vld [vmem:[#allocation3 + $0x48] sm:$0xff]
      %s3736 = scalar_lea.vmem %s2, 32
      %v3737 = vld [vmem:[%s3736] sm:$0xf]
      %v3749 = vunpack.c.l.b16 %v3715
      %v3750 = vunpack.c.l.b16 %v3716
      %v3751 = vunpack.c.l.b16 %v3717
      %v3752 = vunpack.c.l.b16 %v3718
      %v3753 = vunpack.c.l.b16 %v3719
      %v3754 = vunpack.c.l.b16 %v3720
      %v3755 = vunpack.c.l.b16 %v3721
      %v3756 = vunpack.c.l.b16 %v3722
      %v3757 = vunpack.c.l.b16 %v3723
      %v3758 = vunpack.c.l.b16 %v3724
      %v3759 = vunpack.c.l.b16 %v3725
      %v3760 = vpack.c.b16 %v3750, %v3749
      %v3761 = vpack.c.b16 %v3752, %v3751
      %v3762 = vpack.c.b16 %v3754, %v3753
      %v3763 = vpack.c.b16 %v3756, %v3755
      %v3764 = vpack.c.b16 %v3758, %v3757
      %v3765 = vpack.c.b16 %v3759, %v3759
      %v3766 = vrot.slane %v3760, 3
      %v3767 = vrot.slane %v3761, 3
      %v3768 = vsel %vm1593, %v3766, %v3767
      %v3769 = vrot.slane %v3762, 3
      %v3770 = vsel %vm1593, %v3767, %v3769
      %v3771 = vrot.slane %v3763, 3
      %v3772 = vsel %vm1593, %v3769, %v3771
      %v3773 = vrot.slane %v3764, 3
      %v3774 = vsel %vm1593, %v3771, %v3773
      %v3775 = vrot.slane %v3765, 3
      %v3776 = vsel %vm1593, %v3773, %v3775
      %v3778 = vsel %vm280, %v3768, 0
      %v3781 = vsel %vm280, %v3770, 0
      %v3784 = vsel %vm280, %v3772, 0
      %v3787 = vsel %vm280, %v3774, 0
      %v3790 = vsel %vm280, %v3776, 0
      %v3793 = vsel %vm2289, %v3737, 0
      %3795 = vmatprep.subr.bf16.mxu0 0
      %3796 = vmatpush1.bf16.msra.mxu0 %v3793
      %3797 = vmatprep.subr.bf16.mxu0 0
      %3798 = vmatpush1.bf16.msra.mxu0 0
      %3799 = vmatprep.subr.bf16.mxu0 0
      %3800 = vmatpush1.bf16.msra.mxu0 0
      %3801 = vmatprep.subr.bf16.mxu0 0
      %3802 = vmatpush1.bf16.msra.mxu0 0
      %3803 = vmatprep.subr.bf16.mxu0 0
      %3804 = vmatpush1.bf16.msra.mxu0 0
      %3805 = vmatprep.subr.bf16.mxu0 0
      %3806 = vmatpush1.bf16.msra.mxu0 0
      %3807 = vmatprep.subr.bf16.mxu0 0
      %3808 = vmatpush1.bf16.msra.mxu0 0
      %3809 = vmatprep.subr.bf16.mxu0 0
      %3810 = vmatpush1.bf16.msra.mxu0 0
      %3811 = vmatprep.subr.bf16.mxu0 0
      %3812 = vmatpush1.bf16.msra.mxu0 0
      %3813 = vmatprep.subr.bf16.mxu0 0
      %3814 = vmatpush1.bf16.msra.mxu0 0
      %3815 = vmatprep.subr.bf16.mxu0 0
      %3816 = vmatpush1.bf16.msra.mxu0 0
      %3817 = vmatprep.subr.bf16.mxu0 0
      %3818 = vmatpush1.bf16.msra.mxu0 0
      %3819 = vmatprep.subr.bf16.mxu0 0
      %3820 = vmatpush1.bf16.msra.mxu0 0
      %3821 = vmatprep.subr.bf16.mxu0 0
      %3822 = vmatpush1.bf16.msra.mxu0 0
      %3823 = vmatprep.subr.bf16.mxu0 0
      %3824 = vmatpush1.bf16.msra.mxu0 0
      %3825 = vmatprep.subr.bf16.mxu0 0
      %3826 = vmatpush1.bf16.msra.mxu0 0
      %3827 = vmatprep.mubr.bf16.mxu0 0
      %3828 = vmatmul.mubr.bf16.gmra.mrb[0].mxu0 %v3778
      %v3829 = vpop.f32.mrb[0].mxu0
      %v3830 = vadd.f32 0.0, %v3829
      %v3831 = vpop.f32.mrb[0].mxu0
      %v3832 = vpop.f32.mrb[0].mxu0
      %v3833 = vadd.f32 0.0, %v3832
      %v3834 = vpop.f32.mrb[0].mxu0
      %3835 = vmatprep.mubr.bf16.mxu0 0
      %3836 = vmatmul.mubr.bf16.gmra.mrb[0].mxu0 %v3781
      %v3837 = vpop.f32.mrb[0].mxu0
      %v3838 = vadd.f32 0.0, %v3837
      %v3839 = vpop.f32.mrb[0].mxu0
      %v3840 = vpop.f32.mrb[0].mxu0
      %v3841 = vadd.f32 0.0, %v3840
      %v3842 = vpop.f32.mrb[0].mxu0
      %3843 = vmatprep.mubr.bf16.mxu0 0
      %3844 = vmatmul.mubr.bf16.gmra.mrb[0].mxu0 %v3784
      %v3845 = vpop.f32.mrb[0].mxu0
      %v3846 = vadd.f32 0.0, %v3845
      %v3847 = vpop.f32.mrb[0].mxu0
      %v3848 = vpop.f32.mrb[0].mxu0
      %v3849 = vadd.f32 0.0, %v3848
      %v3850 = vpop.f32.mrb[0].mxu0
      %3851 = vmatprep.mubr.bf16.mxu0 0
      %3852 = vmatmul.mubr.bf16.gmra.mrb[0].mxu0 %v3787
      %v3853 = vpop.f32.mrb[0].mxu0
      %v3854 = vadd.f32 0.0, %v3853
      %v3855 = vpop.f32.mrb[0].mxu0
      %v3856 = vpop.f32.mrb[0].mxu0
      %v3857 = vadd.f32 0.0, %v3856
      %v3858 = vpop.f32.mrb[0].mxu0
      %3859 = vmatprep.mubr.bf16.mxu0 0
      %3860 = vmatmul.mubr.bf16.gmra.mrb[0].mxu0 %v3790
      %v3861 = vpop.f32.mrb[0].mxu0
      %v3862 = vadd.f32 0.0, %v3861
      %v3863 = vpop.f32.mrb[0].mxu0
      %v3864 = vpop.f32.mrb[0].mxu0
      %v3865 = vadd.f32 0.0, %v3864
      %v3866 = vpop.f32.mrb[0].mxu0
      %3867 = vdwg.mxu0
      %v3868 = vadd.f32 %v3726, %v3830
      %v3869 = vadd.f32 %v3727, %v3833
      %v3870 = vadd.f32 %v3728, %v3838
      %v3871 = vadd.f32 %v3729, %v3841
      %v3872 = vadd.f32 %v3730, %v3846
      %v3873 = vadd.f32 %v3731, %v3849
      %v3874 = vadd.f32 %v3732, %v3854
      %v3875 = vadd.f32 %v3733, %v3857
      %v3876 = vadd.f32 %v3734, %v3862
      %v3877 = vadd.f32 %v3735, %v3865
      %3878 = vst.msk [vmem:[#allocation3] sm:$0xff] %vm280, %v3868
      %3879 = vst.msk [vmem:[#allocation3 + $0x8] sm:$0xff] %vm280, %v3869
      %3880 = vst.msk [vmem:[#allocation3 + $0x10] sm:$0xff] %vm280, %v3870
      %3881 = vst.msk [vmem:[#allocation3 + $0x18] sm:$0xff] %vm280, %v3871
      %3882 = vst.msk [vmem:[#allocation3 + $0x20] sm:$0xff] %vm280, %v3872
      %3883 = vst.msk [vmem:[#allocation3 + $0x28] sm:$0xff] %vm280, %v3873
      %3884 = vst.msk [vmem:[#allocation3 + $0x30] sm:$0xff] %vm280, %v3874
      %3885 = vst.msk [vmem:[#allocation3 + $0x38] sm:$0xff] %vm280, %v3875
      %3886 = vst.msk [vmem:[#allocation3 + $0x40] sm:$0xff] %vm280, %v3876
      %3887 = vst.msk [vmem:[#allocation3 + $0x48] sm:$0xff] %vm280, %v3877
      %v3888 = vld [vmem:[%s273 + $0x94] sm:$0xc]
      %v3889 = vld [vmem:[%s273 + $0x98] sm:$0xf]
      %v3890 = vld [vmem:[%s273 + $0x9c] sm:$0xf]
      %v3891 = vld [vmem:[%s273 + $0xa0] sm:$0xf]
      %v3892 = vld [vmem:[%s273 + $0xa4] sm:$0xf]
      %v3893 = vld [vmem:[%s273 + $0xa8] sm:$0xf]
      %v3894 = vld [vmem:[%s273 + $0xac] sm:$0xf]
      %v3895 = vld [vmem:[%s273 + $0xb0] sm:$0xf]
      %v3896 = vld [vmem:[%s273 + $0xb4] sm:$0xf]
      %v3897 = vld [vmem:[%s273 + $0xb8] sm:$0xf]
      %v3898 = vld [vmem:[%s273 + $0xbc] sm:$0x3]
      %v3899 = vld [vmem:[%s3] sm:$0x3]
      %v3911 = vunpack.c.l.b16 %v3888
      %v3912 = vunpack.c.l.b16 %v3889
      %v3913 = vunpack.c.l.b16 %v3890
      %v3914 = vunpack.c.l.b16 %v3891
      %v3915 = vunpack.c.l.b16 %v3892
      %v3916 = vunpack.c.l.b16 %v3893
      %v3917 = vunpack.c.l.b16 %v3894
      %v3918 = vunpack.c.l.b16 %v3895
      %v3919 = vunpack.c.l.b16 %v3896
      %v3920 = vunpack.c.l.b16 %v3897
      %v3921 = vunpack.c.l.b16 %v3898
      %v3922 = vpack.c.b16 %v3912, %v3911
      %v3923 = vpack.c.b16 %v3914, %v3913
      %v3924 = vpack.c.b16 %v3916, %v3915
      %v3925 = vpack.c.b16 %v3918, %v3917
      %v3926 = vpack.c.b16 %v3920, %v3919
      %v3927 = vpack.c.b16 %v3921, %v3921
      %v3928 = vrot.slane %v3922, 2
      %v3929 = vrot.slane %v3923, 2
      %v3930 = vsel %vm501, %v3928, %v3929
      %v3931 = vrot.slane %v3924, 2
      %v3932 = vsel %vm501, %v3929, %v3931
      %v3933 = vrot.slane %v3925, 2
      %v3934 = vsel %vm501, %v3931, %v3933
      %v3935 = vrot.slane %v3926, 2
      %v3936 = vsel %vm501, %v3933, %v3935
      %v3937 = vrot.slane %v3927, 2
      %v3938 = vsel %vm501, %v3935, %v3937
      %v3940 = vsel %vm337, %v3930, 0
      %v3943 = vsel %vm337, %v3932, 0
      %v3946 = vsel %vm337, %v3934, 0
      %v3949 = vsel %vm337, %v3936, 0
      %v3952 = vsel %vm337, %v3938, 0
      %v3955 = vsel %vm353, %v3899, 0
      %3957 = vmatprep.subr.bf16.mxu0 0
      %3958 = vmatpush1.bf16.msra.mxu0 %v3955
      %3959 = vmatprep.subr.bf16.mxu0 0
      %3960 = vmatpush1.bf16.msra.mxu0 0
      %3961 = vmatprep.subr.bf16.mxu0 0
      %3962 = vmatpush1.bf16.msra.mxu0 0
      %3963 = vmatprep.subr.bf16.mxu0 0
      %3964 = vmatpush1.bf16.msra.mxu0 0
      %3965 = vmatprep.subr.bf16.mxu0 0
      %3966 = vmatpush1.bf16.msra.mxu0 0
      %3967 = vmatprep.subr.bf16.mxu0 0
      %3968 = vmatpush1.bf16.msra.mxu0 0
      %3969 = vmatprep.subr.bf16.mxu0 0
      %3970 = vmatpush1.bf16.msra.mxu0 0
      %3971 = vmatprep.subr.bf16.mxu0 0
      %3972 = vmatpush1.bf16.msra.mxu0 0
      %3973 = vmatprep.subr.bf16.mxu0 0
      %3974 = vmatpush1.bf16.msra.mxu0 0
      %3975 = vmatprep.subr.bf16.mxu0 0
      %3976 = vmatpush1.bf16.msra.mxu0 0
      %3977 = vmatprep.subr.bf16.mxu0 0
      %3978 = vmatpush1.bf16.msra.mxu0 0
      %3979 = vmatprep.subr.bf16.mxu0 0
      %3980 = vmatpush1.bf16.msra.mxu0 0
      %3981 = vmatprep.subr.bf16.mxu0 0
      %3982 = vmatpush1.bf16.msra.mxu0 0
      %3983 = vmatprep.subr.bf16.mxu0 0
      %3984 = vmatpush1.bf16.msra.mxu0 0
      %3985 = vmatprep.subr.bf16.mxu0 0
      %3986 = vmatpush1.bf16.msra.mxu0 0
      %3987 = vmatprep.subr.bf16.mxu0 0
      %3988 = vmatpush1.bf16.msra.mxu0 0
      %3989 = vmatprep.mubr.bf16.mxu0 0
      %3990 = vmatmul.mubr.bf16.gmra.mrb[0].mxu0 %v3940
      %v3991 = vpop.f32.mrb[0].mxu0
      %v3992 = vadd.f32 0.0, %v3991
      %v3993 = vpop.f32.mrb[0].mxu0
      %v3994 = vpop.f32.mrb[0].mxu0
      %v3995 = vadd.f32 0.0, %v3994
      %v3996 = vpop.f32.mrb[0].mxu0
      %3997 = vmatprep.mubr.bf16.mxu0 0
      %3998 = vmatmul.mubr.bf16.gmra.mrb[0].mxu0 %v3943
      %v3999 = vpop.f32.mrb[0].mxu0
      %v4000 = vadd.f32 0.0, %v3999
      %v4001 = vpop.f32.mrb[0].mxu0
      %v4002 = vpop.f32.mrb[0].mxu0
      %v4003 = vadd.f32 0.0, %v4002
      %v4004 = vpop.f32.mrb[0].mxu0
      %4005 = vmatprep.mubr.bf16.mxu0 0
      %4006 = vmatmul.mubr.bf16.gmra.mrb[0].mxu0 %v3946
      %v4007 = vpop.f32.mrb[0].mxu0
      %v4008 = vadd.f32 0.0, %v4007
      %v4009 = vpop.f32.mrb[0].mxu0
      %v4010 = vpop.f32.mrb[0].mxu0
      %v4011 = vadd.f32 0.0, %v4010
      %v4012 = vpop.f32.mrb[0].mxu0
      %4013 = vmatprep.mubr.bf16.mxu0 0
      %4014 = vmatmul.mubr.bf16.gmra.mrb[0].mxu0 %v3949
      %v4015 = vpop.f32.mrb[0].mxu0
      %v4016 = vadd.f32 0.0, %v4015
      %v4017 = vpop.f32.mrb[0].mxu0
      %v4018 = vpop.f32.mrb[0].mxu0
      %v4019 = vadd.f32 0.0, %v4018
      %v4020 = vpop.f32.mrb[0].mxu0
      %4021 = vmatprep.mubr.bf16.mxu0 0
      %4022 = vmatmul.mubr.bf16.gmra.mrb[0].mxu0 %v3952
      %v4023 = vpop.f32.mrb[0].mxu0
      %v4024 = vadd.f32 0.0, %v4023
      %v4025 = vpop.f32.mrb[0].mxu0
      %v4026 = vpop.f32.mrb[0].mxu0
      %v4027 = vadd.f32 0.0, %v4026
      %v4028 = vpop.f32.mrb[0].mxu0
      %4029 = vdwg.mxu0
      %v4030 = vld [vmem:[#allocation3] sm:$0xff]
      %v4031 = vld [vmem:[#allocation3 + $0x8] sm:$0xff]
      %v4032 = vld [vmem:[#allocation3 + $0x10] sm:$0xff]
      %v4033 = vld [vmem:[#allocation3 + $0x18] sm:$0xff]
      %v4034 = vld [vmem:[#allocation3 + $0x20] sm:$0xff]
      %v4035 = vld [vmem:[#allocation3 + $0x28] sm:$0xff]
      %v4036 = vld [vmem:[#allocation3 + $0x30] sm:$0xff]
      %v4037 = vld [vmem:[#allocation3 + $0x38] sm:$0xff]
      %v4038 = vld [vmem:[#allocation3 + $0x40] sm:$0xff]
      %v4039 = vld [vmem:[#allocation3 + $0x48] sm:$0xff]
      %v4040 = vld [vmem:[%s5] sm:$0x1]
      %v4042 = vlaneseq
      %v4043 = vshrl.u32 %v4042, 7
      %v4044 = vsub.s32 0, %v4043
      %v4045 = vrot.slane %v4040, %v4044
      %v4047 = vadd.f32 %v4030, %v4045
      %v4048 = vadd.f32 %v4031, %v4045
      %v4049 = vadd.f32 %v4032, %v4045
      %v4050 = vadd.f32 %v4033, %v4045
      %v4051 = vadd.f32 %v4034, %v4045
      %v4052 = vadd.f32 %v4035, %v4045
      %v4053 = vadd.f32 %v4036, %v4045
      %v4054 = vadd.f32 %v4037, %v4045
      %v4055 = vadd.f32 %v4038, %v4045
      %v4056 = vadd.f32 %v4039, %v4045
      %v4057 = vadd.f32 %v4047, %v3992
      %v4058 = vadd.f32 %v4048, %v3995
      %v4059 = vadd.f32 %v4049, %v4000
      %v4060 = vadd.f32 %v4050, %v4003
      %v4061 = vadd.f32 %v4051, %v4008
      %v4062 = vadd.f32 %v4052, %v4011
      %v4063 = vadd.f32 %v4053, %v4016
      %v4064 = vadd.f32 %v4054, %v4019
      %v4065 = vadd.f32 %v4055, %v4024
      %v4066 = vadd.f32 %v4056, %v4027
      %v4067 = vmax.f32 %v4057, 0.0
      %v4068 = vmax.f32 %v4058, 0.0
      %v4069 = vmax.f32 %v4059, 0.0
      %v4070 = vmax.f32 %v4060, 0.0
      %v4071 = vmax.f32 %v4061, 0.0
      %v4072 = vmax.f32 %v4062, 0.0
      %v4073 = vmax.f32 %v4063, 0.0
      %v4074 = vmax.f32 %v4064, 0.0
      %v4075 = vmax.f32 %v4065, 0.0
      %v4076 = vmax.f32 %v4066, 0.0
      %4077 = vst.msk [vmem:[%s278] sm:$0xff] %vm280, %v4067
      %4078 = vst.msk [vmem:[%s278 + $0x8] sm:$0xff] %vm280, %v4068
      %4079 = vst.msk [vmem:[%s278 + $0x10] sm:$0xff] %vm280, %v4069
      %4080 = vst.msk [vmem:[%s278 + $0x18] sm:$0xff] %vm280, %v4070
      %4081 = vst.msk [vmem:[%s278 + $0x20] sm:$0xff] %vm280, %v4071
      %4082 = vst.msk [vmem:[%s278 + $0x28] sm:$0xff] %vm280, %v4072
      %4083 = vst.msk [vmem:[%s278 + $0x30] sm:$0xff] %vm280, %v4073
      %4084 = vst.msk [vmem:[%s278 + $0x38] sm:$0xff] %vm280, %v4074
      %4085 = vst.msk [vmem:[%s278 + $0x40] sm:$0xff] %vm280, %v4075
      %4086 = vst.msk [vmem:[%s278 + $0x48] sm:$0xff] %vm280, %v4076
      %p4087 = scmp.lt.s32.totalorder %s18, 1
      %s4088 = scalar_select %p4087, %s18, 1
      %s4089 = smul.addr %s4088, 10
      %s4090 = smul.addr %s4089, 8
      %s4091 = scalar_lea.vmem %s7, %s4090
      // Predicated region
      $region49: #{residual_block_forward.1} parent=47 // pred_check
        %p4092 = pneg %p188
      $region50: #{residual_block_forward.1} parent=47 // pred_check_branch
        %4094 = sbr.rel (%p4092) target = $region52
      $region51: #{residual_block_forward.1} parent=47 // pred_region
        _
      $region52: #{residual_block_forward.1} parent=47 // pred_fallthru
        _
    $region48: #{residual_block_forward.1} parent=5 // pred_fallthru
      _
    %p4095 = scmp.le.s32.totalorder 2, %s13
    // Predicated region
    $region53: #{residual_block_forward.1} parent=5 // pred_check
      %p4096 = pneg %p4095
    $region54: #{residual_block_forward.1} parent=5 // pred_check_branch
      %4098 = sbr.rel (%p4096) target = $region56
    $region55: #{residual_block_forward.1} parent=5 // pred_region
      %s4099 = ssub.s32 %s13, 2
      // Predicated region
      $region57: #{residual_block_forward.1} parent=55 // pred_check
        %p4100 = pneg %p194
      $region58: #{residual_block_forward.1} parent=55 // pred_check_branch
        %4102 = sbr.rel (%p4100) target = $region60
      $region59: #{residual_block_forward.1} parent=55 // pred_region
        %p4103 = scmp.lt.s32.totalorder %s19, 1
        %s4104 = scalar_select %p4103, %s19, 1
        %s4105 = smul.addr %s4104, 10
        %s4106 = smul.addr %s4105, 8
        %s4107 = scalar_lea.vmem %s7, %s4106
      $region60: #{residual_block_forward.1} parent=55 // pred_fallthru
        _
    $region56: #{residual_block_forward.1} parent=5 // pred_fallthru
      _
  $region6: #{residual_block_forward.1} parent=0 // loop_footer
    %s17 = sadd.s32 1, %s13
  $region7: #{residual_block_forward.1} parent=0 // loop_footer_branch
    %12 = sbr.rel target = $region3
  $region8: #{residual_block_forward.1} parent=0 // loop_exit
    _

</llo_original>
